<compile_context>
chip_gen: v7x
topology: tpu7x:2x2x1
jax: 0.10.0
libtpu: 0.0.40
codegen_flags: <defaults>
</compile_context>

<pallas_src>
import functools
import math

import jax
import jax.numpy as jnp
import numpy as np
from jax import lax
from jax.experimental import pallas as pl
from jax.experimental.pallas import tpu as pltpu

NEGATIVE_SLOPE = 1.0   # nn.LeakyReLU(True) -> negative_slope = 1.0 (TranAD quirk)

_VMEM = functools.partial(pl.BlockSpec, memory_space=pltpu.MemorySpace.VMEM)


# ---------------------------------------------------------------------------
# Fused Pallas kernel: whole TranAD self-conditioning forward in one call.
# ---------------------------------------------------------------------------

def tranad_fused_kernel(s0_ref, tgt_ref, enc_qb_ref, enc_kb_ref, dec_qb_ref,
                        enc_wqkv_ref, enc_bqkv_ref, enc_wo_ref, enc_bo_ref,
                        enc_w1_ref, enc_b1_ref, enc_w2_ref, enc_b2_ref,
                        dself_w_ref, dself_b_ref,
                        ckv_w_ref, ckv_b_ref, cq_w_ref, cq_b_ref,
                        cwo_ref, cbo_ref,
                        dw1_ref, db1_ref, dw2_ref, db2_ref,
                        fc_w_ref, fc_b_ref,
                        out_ref, *, num_heads):
    f32 = jnp.float32
    D = s0_ref.shape[-1]                       # d_model
    head_dim = D // num_heads
    scale = 1.0 / math.sqrt(head_dim)

    # (1, D) per-head lane-selection masks (built once from a 2-D lane iota, no division)
    lane = lax.broadcasted_iota(jnp.int32, (1, D), 1)
    head_sel = [((lane >= h * head_dim) & (lane < (h + 1) * head_dim)).astype(f32)
                for h in range(num_heads)]

    def mm(a, b):
        return jnp.dot(a, b, preferred_element_type=f32)

    def mha_core(qp, kp, vp, qb_col, kb_row):
        """Head-batched attention core.  qp (Nq,D) is pre-scaled (bias included),
        kp/vp are (Nk,D).  Returns the (Nq,D) context (heads re-concatenated on the
        feature axis).  Per-batch separation comes from the additive mask built from
        the linear-size batch-id vectors qb_col (Nq,1) / kb_row (1,Nk)."""
        H = num_heads
        q3 = jnp.stack([qp * head_sel[h] for h in range(H)], axis=0)     # (H,Nq,D)
        k3 = jnp.broadcast_to(kp[None], (H,) + kp.shape)                 # (H,Nk,D)
        v3 = jnp.broadcast_to(vp[None], (H,) + vp.shape)                 # (H,Nk,D)
        s = jnp.einsum('hqd,hkd->hqk', q3, k3, preferred_element_type=f32)
        s = s + jnp.where(qb_col == kb_row, 0.0, -1e9)[None]             # exact masking
        s = s - jnp.max(s, axis=-1, keepdims=True)
        p = jnp.exp(s)
        p = p * pl.reciprocal(jnp.sum(p, axis=-1, keepdims=True), approx=True)
        ctx3 = jnp.einsum('hqk,hkd->hqd', p, v3, preferred_element_type=f32)
        ctx = ctx3[0] * head_sel[0]
        for h in range(1, H):
            ctx = ctx + ctx3[h] * head_sel[h]
        return ctx                                                       # (Nq,D)

    s0 = s0_ref[...]            # (W*B, D)  encoder input (scaled, concat'd, +PE)
    tgt = tgt_ref[...]          # (B, D)    target repeated to d_model
    enc_qb = enc_qb_ref[...]    # (W*B, 1)  batch id per flattened row
    enc_kb = enc_kb_ref[...]    # (1, W*B)  batch id per flattened key
    dec_qb = dec_qb_ref[...]    # (B, 1)

    # ---------------- encoder: self-attention + FFN  ->  memory ----------------
    qkv = mm(s0, enc_wqkv_ref[...]) + enc_bqkv_ref[...]                  # (W*B, 3D) fused QKV
    ctx = mha_core(qkv[:, :D] * scale, qkv[:, D:2 * D], qkv[:, 2 * D:], enc_qb, enc_kb)
    enc = s0 + mm(ctx, enc_wo_ref[...]) + enc_bo_ref[...]
    # FFN: LeakyReLU(True) => slope 1.0 => exact identity, so no activation op.
    memory = enc + mm(mm(enc, enc_w1_ref[...]) + enc_b1_ref[...], enc_w2_ref[...]) \
        + enc_b2_ref[...]

    # Cross-attention K/V for BOTH decoders from one fused projection of `memory`.
    kv = mm(memory, ckv_w_ref[...]) + ckv_b_ref[...]                     # (W*B, 4D)

    # Decoder self-attention is degenerate (1 query, 1 key per batch => softmax == 1):
    # pre-fused host-side into one (B,D)@(D,2D) matmul serving both decoders.
    dself = mm(tgt, dself_w_ref[...]) + dself_b_ref[...]                 # (B, 2D)

    for d in range(2):                         # static loop over decoder 1 / decoder 2
        t = tgt + dself[:, d * D:(d + 1) * D]
        # cross-attention: Q from t, K/V from memory
        qp = (mm(t, cq_w_ref[d]) + cq_b_ref[d]) * scale
        kp = kv[:, (2 * d) * D:(2 * d + 1) * D]
        vp = kv[:, (2 * d + 1) * D:(2 * d + 2) * D]
        ctx = mha_core(qp, kp, vp, dec_qb, enc_kb)
        t = t + mm(ctx, cwo_ref[d]) + cbo_ref[d]
        # FFN (activation is identity, see above)
        t = t + mm(mm(t, dw1_ref[d]) + db1_ref[d], dw2_ref[d]) + db2_ref[d]
        # fc head: exact sigmoid on the module outputs (approx recip kept only for softmax)
        z = mm(t, fc_w_ref[...]) + fc_b_ref[...]
        out_ref[d] = (1.0 / (1.0 + jnp.exp(-z))).astype(out_ref.dtype)


# ---------------------------------------------------------------------------
# Wrapper: thin layout prep (concat/scale/PE/flatten + linear-size batch ids) in
# plain JAX, then one pallas_call for the whole model.
# ---------------------------------------------------------------------------

def tranad_self_conditioning_forward(src, target, kp, *, n_features):
    win, batch, _ = src.shape
    d_model = 2 * n_features

    c = jnp.zeros_like(src)                                 # self-conditioning ctx (phase 1)
    s0 = (jnp.concatenate([src, c], axis=2) * math.sqrt(float(n_features))
          + kp['pe'][:win])                                 # pos_encoder (dropout = eval id)
    s0 = s0.reshape(win * batch, d_model)                   # (W*B, D) flat rows
    tgt = jnp.tile(target, (1, 1, 2)).reshape(batch, d_model)   # target.repeat(1, 1, 2)

    # Linear-size batch-id vectors; the quadratic additive masks are rebuilt in-kernel.
    enc_ids = (jnp.arange(win * batch, dtype=jnp.int32) % batch).astype(jnp.float32)
    enc_qb = enc_ids[:, None]                               # (W*B, 1)
    enc_kb = enc_ids[None, :]                               # (1, W*B)
    dec_qb = jnp.arange(batch, dtype=jnp.float32)[:, None]  # (B, 1)

    args = (s0, tgt, enc_qb, enc_kb, dec_qb,
            kp['enc_wqkv_t'], kp['enc_bqkv'], kp['enc_wo_t'], kp['enc_bo'],
            kp['enc_w1_t'], kp['enc_b1'], kp['enc_w2_t'], kp['enc_b2'],
            kp['dself_wt'], kp['dself_b'],
            kp['ckv_wt'], kp['ckv_b'], kp['cq_wt'], kp['cq_b'],
            kp['cwo_t'], kp['cbo'],
            kp['dw1_t'], kp['db1'], kp['dw2_t'], kp['db2'],
            kp['fc_wt'], kp['fc_b'])

    out = pl.pallas_call(
        functools.partial(tranad_fused_kernel, num_heads=n_features),
        out_shape=jax.ShapeDtypeStruct((2, batch, n_features), src.dtype),
        in_specs=[_VMEM() for _ in args],
        out_specs=_VMEM(),
    )(*args)
    return out[0][None], out[1][None]                        # (1, B, F) each


# ---------------------------------------------------------------------------
# Parameter init (raw PyTorch layout) + host-side fusion/pre-transposition.
# ---------------------------------------------------------------------------

def positional_encoding(max_len, d_model):
    # TranAD's PositionalEncoding: pe = sin(pos*div) + cos(pos*div) over the full arange.
    position = jnp.arange(max_len, dtype=jnp.float32)[:, None]
    div_term = jnp.exp(jnp.arange(d_model, dtype=jnp.float32)
                       * (-math.log(10000.0) / d_model))
    pe = jnp.sin(position * div_term) + jnp.cos(position * div_term)
    return pe[:, None, :]                                    # (max_len, 1, d_model)


def init_params(key, n_features, n_windows=10, d_ff=16):
    """Raw PyTorch-layout parameters.
    attn order: [enc.self, dec1.self, dec1.cross, dec2.self, dec2.cross]
    ffn  order: [enc, dec1, dec2]."""
    d_model = 2 * n_features
    keys = iter(jax.random.split(key, 64))

    def nrm(shape, scl=0.1):
        return scl * jax.random.normal(next(keys), shape, jnp.float32)

    def attn_layer():
        return dict(in_w=nrm((3 * d_model, d_model)), in_b=nrm((3 * d_model,)),
                    wo=nrm((d_model, d_model)), bo=nrm((d_model,)))

    def ffn_layer():
        return dict(w1=nrm((d_ff, d_model)), b1=nrm((d_ff,)),
                    w2=nrm((d_model, d_ff)), b2=nrm((d_model,)))

    return dict(
        pe=positional_encoding(n_windows, d_model),
        attn=[attn_layer() for _ in range(5)],
        ffn=[ffn_layer() for _ in range(3)],
        fc=dict(w=nrm((n_features, d_model)), b=nrm((n_features,))),
    )


def prepare_kernel_params(params, n_features):
    """Host-side weight fusion / transposition for the fused kernel (done once)."""
    D = 2 * n_features
    A, Fp, fc = params['attn'], params['ffn'], params['fc']

    def wq(i): return A[i]['in_w'][:D]
    def wk(i): return A[i]['in_w'][D:2 * D]
    def wv(i): return A[i]['in_w'][2 * D:]
    def bq(i): return A[i]['in_b'][:D]
    def bk(i): return A[i]['in_b'][D:2 * D]
    def bv(i): return A[i]['in_b'][2 * D:]

    # decoder self-attention is softmax-free (seq_len == 1): pre-fuse V- and out-projections.
    def self_fused(i):
        w = wv(i).T @ A[i]['wo'].T                 # (D, D):  x @ Wv.T @ Wo.T
        b = bv(i) @ A[i]['wo'].T + A[i]['bo']      # (D,)
        return w, b
    w_s1, b_s1 = self_fused(1)
    w_s2, b_s2 = self_fused(3)

    return dict(
        pe=params['pe'],
        enc_wqkv_t=A[0]['in_w'].T,                              # (D, 3D) = [Wq.T|Wk.T|Wv.T]
        enc_bqkv=A[0]['in_b'][None, :],
        enc_wo_t=A[0]['wo'].T, enc_bo=A[0]['bo'][None, :],
        enc_w1_t=Fp[0]['w1'].T, enc_b1=Fp[0]['b1'][None, :],
        enc_w2_t=Fp[0]['w2'].T, enc_b2=Fp[0]['b2'][None, :],
        dself_wt=jnp.concatenate([w_s1, w_s2], axis=1),         # (D, 2D)
        dself_b=jnp.concatenate([b_s1, b_s2])[None, :],         # (1, 2D)
        ckv_wt=jnp.concatenate([wk(2).T, wv(2).T, wk(4).T, wv(4).T], axis=1),   # (D, 4D)
        ckv_b=jnp.concatenate([bk(2), bv(2), bk(4), bv(4)])[None, :],
        cq_wt=jnp.stack([wq(2).T, wq(4).T]),                    # (2, D, D)
        cq_b=jnp.stack([bq(2)[None, :], bq(4)[None, :]]),       # (2, 1, D)
        cwo_t=jnp.stack([A[2]['wo'].T, A[4]['wo'].T]),          # (2, D, D)
        cbo=jnp.stack([A[2]['bo'][None, :], A[4]['bo'][None, :]]),
        dw1_t=jnp.stack([Fp[1]['w1'].T, Fp[2]['w1'].T]),        # (2, D, d_ff)
        db1=jnp.stack([Fp[1]['b1'][None, :], Fp[2]['b1'][None, :]]),
        dw2_t=jnp.stack([Fp[1]['w2'].T, Fp[2]['w2'].T]),        # (2, d_ff, D)
        db2=jnp.stack([Fp[1]['b2'][None, :], Fp[2]['b2'][None, :]]),
        fc_wt=fc['w'].T, fc_b=fc['b'][None, :],
    )


# ---------------------------------------------------------------------------
# Pure-JAX reference (mirrors the PyTorch forward 1:1, encode called twice).
# ---------------------------------------------------------------------------

def _ref_mha_residual(q, k, v, layer, num_heads):
    lq, batch, d = q.shape
    hd = d // num_heads
    hi = lax.Precision.HIGHEST
    wq_, wk_, wv_ = layer['in_w'][:d], layer['in_w'][d:2 * d], layer['in_w'][2 * d:]
    bq_, bk_, bv_ = layer['in_b'][:d], layer['in_b'][d:2 * d], layer['in_b'][2 * d:]
    qp = jnp.einsum('lbd,ed->lbe', q, wq_, precision=hi) + bq_
    kp = jnp.einsum('lbd,ed->lbe', k, wk_, precision=hi) + bk_
    vp = jnp.einsum('lbd,ed->lbe', v, wv_, precision=hi) + bv_
    qp = qp.reshape(lq, batch, num_heads, hd)
    kp = kp.reshape(k.shape[0], batch, num_heads, hd)
    vp = vp.reshape(v.shape[0], batch, num_heads, hd)
    s = jnp.einsum('qbhd,kbhd->bhqk', qp, kp, precision=hi) / math.sqrt(hd)
    a = jax.nn.softmax(s, axis=-1)
    ctx = jnp.einsum('bhqk,kbhd->qbhd', a, vp, precision=hi).reshape(lq, batch, d)
    return q + jnp.einsum('lbd,ed->lbe', ctx, layer['wo'], precision=hi) + layer['bo']


def _ref_ffn_residual(x, layer):
    hi = lax.Precision.HIGHEST
    h = jnp.einsum('lbd,ed->lbe', x, layer['w1'], precision=hi) + layer['b1']
    h = jnp.where(h >= 0, h, NEGATIVE_SLOPE * h)
    return x + jnp.einsum('lbd,ed->lbe', h, layer['w2'], precision=hi) + layer['b2']


def _ref_fc_sigmoid(x, fc):
    hi = lax.Precision.HIGHEST
    return jax.nn.sigmoid(jnp.einsum('lbd,ed->lbe', x, fc['w'], precision=hi) + fc['b'])


def ref_forward(src, target, params, n_features):
    win = src.shape[0]
    c = jnp.zeros_like(src)

    def encode():
        s = jnp.concatenate([src, c], axis=2) * math.sqrt(float(n_features))
        s = s + params['pe'][:win]
        s = _ref_mha_residual(s, s, s, params['attn'][0], n_features)
        memory = _ref_ffn_residual(s, params['ffn'][0])
        return jnp.tile(target, (1, 1, 2)), memory

    def decode(i_self, i_cross, i_ffn, tgt, memory):
        t = _ref_mha_residual(tgt, tgt, tgt, params['attn'][i_self], n_features)
        t = _ref_mha_residual(t, memory, memory, params['attn'][i_cross], n_features)
        return _ref_ffn_residual(t, params['ffn'][i_ffn])

    tgt, memory = encode()
    x1 = _ref_fc_sigmoid(decode(1, 2, 1, tgt, memory), params['fc'])
    tgt, memory = encode()                 # identical to the first (c == 0, eval mode)
    x2 = _ref_fc_sigmoid(decode(3, 4, 2, tgt, memory), params['fc'])
    return x1, x2


# ---------------------------------------------------------------------------

if __name__ == "__main__":
    n_features = 4          # -> d_model = 8, heads = 4, head_dim = 2
    n_windows = 10          # fixed by the module
    batch = 2

    key = jax.random.PRNGKey(0)
    k_params, k_src, k_tgt = jax.random.split(key, 3)
    params = init_params(k_params, n_features, n_windows)
    kparams = prepare_kernel_params(params, n_features)     # one-time host-side fusion

    # src: full window (W, B, F);  target: last element of the window (1, B, F).
    src = jax.random.normal(k_src, (n_windows, batch, n_features), jnp.float32)
    target = jax.random.normal(k_tgt, (1, batch, n_features), jnp.float32)

    fwd = jax.jit(functools.partial(tranad_self_conditioning_forward,
                                    n_features=n_features))
    x1, x2 = fwd(src, target, kparams)
    jax.block_until_ready((x1, x2))

    r1, r2 = ref_forward(src, target, params, n_features)
    np.testing.assert_allclose(np.asarray(x1), np.asarray(r1), rtol=1e-2, atol=1e-2)
    np.testing.assert_allclose(np.asarray(x2), np.asarray(r2), rtol=1e-2, atol=1e-2)
    assert x1.shape == (1, batch, n_features) and x2.shape == (1, batch, n_features)
    print("KERNEL_OK")
</pallas_src>

<mosaic_0001>
module attributes {stable_mosaic.version = 11 : i64} {
  func.func @tranad_fused_kernel(%arg0: memref<20x8xf32, #tpu.memory_space<vmem>>, %arg1: memref<2x8xf32, #tpu.memory_space<vmem>>, %arg2: memref<20x1xf32, #tpu.memory_space<vmem>>, %arg3: memref<1x20xf32, #tpu.memory_space<vmem>>, %arg4: memref<2x1xf32, #tpu.memory_space<vmem>>, %arg5: memref<8x24xf32, #tpu.memory_space<vmem>>, %arg6: memref<1x24xf32, #tpu.memory_space<vmem>>, %arg7: memref<8x8xf32, #tpu.memory_space<vmem>>, %arg8: memref<1x8xf32, #tpu.memory_space<vmem>>, %arg9: memref<8x16xf32, #tpu.memory_space<vmem>>, %arg10: memref<1x16xf32, #tpu.memory_space<vmem>>, %arg11: memref<16x8xf32, #tpu.memory_space<vmem>>, %arg12: memref<1x8xf32, #tpu.memory_space<vmem>>, %arg13: memref<8x16xf32, #tpu.memory_space<vmem>>, %arg14: memref<1x16xf32, #tpu.memory_space<vmem>>, %arg15: memref<8x32xf32, #tpu.memory_space<vmem>>, %arg16: memref<1x32xf32, #tpu.memory_space<vmem>>, %arg17: memref<2x8x8xf32, #tpu.memory_space<vmem>>, %arg18: memref<2x1x8xf32, #tpu.memory_space<vmem>>, %arg19: memref<2x8x8xf32, #tpu.memory_space<vmem>>, %arg20: memref<2x1x8xf32, #tpu.memory_space<vmem>>, %arg21: memref<2x8x16xf32, #tpu.memory_space<vmem>>, %arg22: memref<2x1x16xf32, #tpu.memory_space<vmem>>, %arg23: memref<2x16x8xf32, #tpu.memory_space<vmem>>, %arg24: memref<2x1x8xf32, #tpu.memory_space<vmem>>, %arg25: memref<8x4xf32, #tpu.memory_space<vmem>>, %arg26: memref<1x4xf32, #tpu.memory_space<vmem>>, %arg27: memref<2x2x4xf32, #tpu.memory_space<vmem>>) attributes {dimension_semantics = [], scalar_prefetch = 0 : i64, scratch_operands = 0 : i64, tpu.core_type = #tpu.core_type<tc>} {
    %0 = tpu.iota {dimensions = array<i32: 1>} : vector<1x8xi32>
    %c0_i32 = arith.constant 0 : i32
    %1 = vector.broadcast %c0_i32 : i32 to vector<1x8xi32>
    %2 = arith.cmpi sge, %0, %1 : vector<1x8xi32>
    %c2_i32 = arith.constant 2 : i32
    %3 = vector.broadcast %c2_i32 : i32 to vector<1x8xi32>
    %4 = arith.cmpi slt, %0, %3 : vector<1x8xi32>
    %5 = arith.andi %2, %4 : vector<1x8xi1>
    %6 = arith.extui %5 : vector<1x8xi1> to vector<1x8xi32>
    %7 = arith.sitofp %6 : vector<1x8xi32> to vector<1x8xf32>
    %c2_i32_0 = arith.constant 2 : i32
    %8 = vector.broadcast %c2_i32_0 : i32 to vector<1x8xi32>
    %9 = arith.cmpi sge, %0, %8 : vector<1x8xi32>
    %c4_i32 = arith.constant 4 : i32
    %10 = vector.broadcast %c4_i32 : i32 to vector<1x8xi32>
    %11 = arith.cmpi slt, %0, %10 : vector<1x8xi32>
    %12 = arith.andi %9, %11 : vector<1x8xi1>
    %13 = arith.extui %12 : vector<1x8xi1> to vector<1x8xi32>
    %14 = arith.sitofp %13 : vector<1x8xi32> to vector<1x8xf32>
    %c4_i32_1 = arith.constant 4 : i32
    %15 = vector.broadcast %c4_i32_1 : i32 to vector<1x8xi32>
    %16 = arith.cmpi sge, %0, %15 : vector<1x8xi32>
    %c6_i32 = arith.constant 6 : i32
    %17 = vector.broadcast %c6_i32 : i32 to vector<1x8xi32>
    %18 = arith.cmpi slt, %0, %17 : vector<1x8xi32>
    %19 = arith.andi %16, %18 : vector<1x8xi1>
    %20 = arith.extui %19 : vector<1x8xi1> to vector<1x8xi32>
    %21 = arith.sitofp %20 : vector<1x8xi32> to vector<1x8xf32>
    %c6_i32_2 = arith.constant 6 : i32
    %22 = vector.broadcast %c6_i32_2 : i32 to vector<1x8xi32>
    %23 = arith.cmpi sge, %0, %22 : vector<1x8xi32>
    %c8_i32 = arith.constant 8 : i32
    %24 = vector.broadcast %c8_i32 : i32 to vector<1x8xi32>
    %25 = arith.cmpi slt, %0, %24 : vector<1x8xi32>
    %26 = arith.andi %23, %25 : vector<1x8xi1>
    %27 = arith.extui %26 : vector<1x8xi1> to vector<1x8xi32>
    %28 = arith.sitofp %27 : vector<1x8xi32> to vector<1x8xf32>
    %c0 = arith.constant 0 : index
    %c0_3 = arith.constant 0 : index
    %29 = vector.load %arg0[%c0, %c0_3] : memref<20x8xf32, #tpu.memory_space<vmem>>, vector<20x8xf32>
    %c0_4 = arith.constant 0 : index
    %c0_5 = arith.constant 0 : index
    %30 = vector.load %arg1[%c0_4, %c0_5] : memref<2x8xf32, #tpu.memory_space<vmem>>, vector<2x8xf32>
    %c0_6 = arith.constant 0 : index
    %c0_7 = arith.constant 0 : index
    %31 = vector.load %arg2[%c0_6, %c0_7] : memref<20x1xf32, #tpu.memory_space<vmem>>, vector<20x1xf32>
    %c0_8 = arith.constant 0 : index
    %c0_9 = arith.constant 0 : index
    %32 = vector.load %arg3[%c0_8, %c0_9] : memref<1x20xf32, #tpu.memory_space<vmem>>, vector<1x20xf32>
    %c0_10 = arith.constant 0 : index
    %c0_11 = arith.constant 0 : index
    %33 = vector.load %arg4[%c0_10, %c0_11] : memref<2x1xf32, #tpu.memory_space<vmem>>, vector<2x1xf32>
    %c0_12 = arith.constant 0 : index
    %c0_13 = arith.constant 0 : index
    %34 = vector.load %arg5[%c0_12, %c0_13] : memref<8x24xf32, #tpu.memory_space<vmem>>, vector<8x24xf32>
    %cst = arith.constant dense<0.000000e+00> : vector<20x24xf32>
    %35 = tpu.matmul %29, %34, %cst {dimension_numbers = #tpu.dot_dimension_numbers<[1], [0], [0], [1], [0, 0, 1, 1], [], []>} : vector<20x8xf32>, vector<8x24xf32>, vector<20x24xf32> -> vector<20x24xf32>
    %c0_14 = arith.constant 0 : index
    %c0_15 = arith.constant 0 : index
    %36 = vector.load %arg6[%c0_14, %c0_15] : memref<1x24xf32, #tpu.memory_space<vmem>>, vector<1x24xf32>
    %37 = vector.broadcast %36 : vector<1x24xf32> to vector<20x24xf32>
    %38 = arith.addf %35, %37 : vector<20x24xf32>
    %39 = vector.extract_strided_slice %38 {offsets = [0, 0], sizes = [20, 8], strides = [1, 1]} : vector<20x24xf32> to vector<20x8xf32>
    %cst_16 = arith.constant 0.707106769 : f32
    %40 = vector.broadcast %cst_16 : f32 to vector<20x8xf32>
    %41 = arith.mulf %39, %40 : vector<20x8xf32>
    %42 = vector.extract_strided_slice %38 {offsets = [0, 8], sizes = [20, 8], strides = [1, 1]} : vector<20x24xf32> to vector<20x8xf32>
    %43 = vector.extract_strided_slice %38 {offsets = [0, 16], sizes = [20, 8], strides = [1, 1]} : vector<20x24xf32> to vector<20x8xf32>
    %44 = vector.broadcast %7 : vector<1x8xf32> to vector<20x8xf32>
    %45 = arith.mulf %41, %44 : vector<20x8xf32>
    %46 = vector.broadcast %14 : vector<1x8xf32> to vector<20x8xf32>
    %47 = arith.mulf %41, %46 : vector<20x8xf32>
    %48 = vector.broadcast %21 : vector<1x8xf32> to vector<20x8xf32>
    %49 = arith.mulf %41, %48 : vector<20x8xf32>
    %50 = vector.broadcast %28 : vector<1x8xf32> to vector<20x8xf32>
    %51 = arith.mulf %41, %50 : vector<20x8xf32>
    %52 = vector.shape_cast %45 : vector<20x8xf32> to vector<1x20x8xf32>
    %53 = vector.shape_cast %47 : vector<20x8xf32> to vector<1x20x8xf32>
    %54 = vector.shape_cast %49 : vector<20x8xf32> to vector<1x20x8xf32>
    %55 = vector.shape_cast %51 : vector<20x8xf32> to vector<1x20x8xf32>
    %56 = tpu.concatenate %52, %53, %54, %55 in 0 : vector<1x20x8xf32>, vector<1x20x8xf32>, vector<1x20x8xf32>, vector<1x20x8xf32> -> vector<4x20x8xf32>
    %57 = vector.shape_cast %42 : vector<20x8xf32> to vector<1x20x8xf32>
    %58 = vector.shape_cast %57 : vector<1x20x8xf32> to vector<1x20x8xf32>
    %59 = vector.broadcast %58 : vector<1x20x8xf32> to vector<4x20x8xf32>
    %60 = vector.shape_cast %43 : vector<20x8xf32> to vector<1x20x8xf32>
    %61 = vector.shape_cast %60 : vector<1x20x8xf32> to vector<1x20x8xf32>
    %62 = vector.broadcast %61 : vector<1x20x8xf32> to vector<4x20x8xf32>
    "tpu.trace_start"() <{level = 10 : i32, message = "hqd,hkd->hqk"}> : () -> ()
    %cst_17 = arith.constant dense<0.000000e+00> : vector<4x20x20xf32>
    %63 = tpu.matmul %56, %59, %cst_17 {dimension_numbers = #tpu.dot_dimension_numbers<[2], [2], [1], [1], [0, 0, 0, 1, 1, 1], [0], [0]>} : vector<4x20x8xf32>, vector<4x20x8xf32>, vector<4x20x20xf32> -> vector<4x20x20xf32>
    "tpu.trace_stop"() : () -> ()
    %64 = vector.broadcast %31 : vector<20x1xf32> to vector<20x20xf32>
    %65 = vector.broadcast %32 : vector<1x20xf32> to vector<20x20xf32>
    %66 = arith.cmpf oeq, %64, %65 : vector<20x20xf32>
    %cst_18 = arith.constant 0.000000e+00 : f32
    %cst_19 = arith.constant -1.000000e+09 : f32
    %67 = vector.broadcast %cst_18 : f32 to vector<20x20xf32>
    %68 = vector.broadcast %cst_19 : f32 to vector<20x20xf32>
    %69 = arith.select %66, %67, %68 : vector<20x20xi1>, vector<20x20xf32>
    %70 = vector.shape_cast %69 : vector<20x20xf32> to vector<1x20x20xf32>
    %71 = vector.broadcast %70 : vector<1x20x20xf32> to vector<4x20x20xf32>
    %72 = arith.addf %63, %71 : vector<4x20x20xf32>
    %cst_20 = arith.constant dense<0xFF800000> : vector<4x20xf32>
    %73 = vector.multi_reduction <maximumf>, %72, %cst_20 [2] : vector<4x20x20xf32> to vector<4x20xf32>
    %74 = vector.shape_cast %73 : vector<4x20xf32> to vector<4x20x1xf32>
    %75 = vector.broadcast %74 : vector<4x20x1xf32> to vector<4x20x20xf32>
    %76 = arith.subf %72, %75 : vector<4x20x20xf32>
    %77 = math.exp %76 : vector<4x20x20xf32>
    %cst_21 = arith.constant dense<0.000000e+00> : vector<4x20xf32>
    %78 = vector.multi_reduction <add>, %77, %cst_21 [2] : vector<4x20x20xf32> to vector<4x20xf32>
    %79 = vector.shape_cast %78 : vector<4x20xf32> to vector<4x20x1xf32>
    %80 = tpu.reciprocal %79 {approx = true} : vector<4x20x1xf32> -> vector<4x20x1xf32>
    %81 = vector.broadcast %80 : vector<4x20x1xf32> to vector<4x20x20xf32>
    %82 = arith.mulf %77, %81 : vector<4x20x20xf32>
    "tpu.trace_start"() <{level = 10 : i32, message = "hqk,hkd->hqd"}> : () -> ()
    %cst_22 = arith.constant dense<0.000000e+00> : vector<4x20x8xf32>
    %83 = tpu.matmul %82, %62, %cst_22 {dimension_numbers = #tpu.dot_dimension_numbers<[2], [1], [1], [2], [0, 0, 0, 1, 1, 2], [0], [0]>} : vector<4x20x20xf32>, vector<4x20x8xf32>, vector<4x20x8xf32> -> vector<4x20x8xf32>
    "tpu.trace_stop"() : () -> ()
    %84 = vector.extract_strided_slice %83 {offsets = [0, 0, 0], sizes = [1, 20, 8], strides = [1, 1, 1]} : vector<4x20x8xf32> to vector<1x20x8xf32>
    %85 = vector.shape_cast %84 : vector<1x20x8xf32> to vector<20x8xf32>
    %86 = vector.broadcast %7 : vector<1x8xf32> to vector<20x8xf32>
    %87 = arith.mulf %85, %86 : vector<20x8xf32>
    %88 = vector.extract_strided_slice %83 {offsets = [1, 0, 0], sizes = [1, 20, 8], strides = [1, 1, 1]} : vector<4x20x8xf32> to vector<1x20x8xf32>
    %89 = vector.shape_cast %88 : vector<1x20x8xf32> to vector<20x8xf32>
    %90 = vector.broadcast %14 : vector<1x8xf32> to vector<20x8xf32>
    %91 = arith.mulf %89, %90 : vector<20x8xf32>
    %92 = arith.addf %87, %91 : vector<20x8xf32>
    %93 = vector.extract_strided_slice %83 {offsets = [2, 0, 0], sizes = [1, 20, 8], strides = [1, 1, 1]} : vector<4x20x8xf32> to vector<1x20x8xf32>
    %94 = vector.shape_cast %93 : vector<1x20x8xf32> to vector<20x8xf32>
    %95 = vector.broadcast %21 : vector<1x8xf32> to vector<20x8xf32>
    %96 = arith.mulf %94, %95 : vector<20x8xf32>
    %97 = arith.addf %92, %96 : vector<20x8xf32>
    %98 = vector.extract_strided_slice %83 {offsets = [3, 0, 0], sizes = [1, 20, 8], strides = [1, 1, 1]} : vector<4x20x8xf32> to vector<1x20x8xf32>
    %99 = vector.shape_cast %98 : vector<1x20x8xf32> to vector<20x8xf32>
    %100 = vector.broadcast %28 : vector<1x8xf32> to vector<20x8xf32>
    %101 = arith.mulf %99, %100 : vector<20x8xf32>
    %102 = arith.addf %97, %101 : vector<20x8xf32>
    %c0_23 = arith.constant 0 : index
    %c0_24 = arith.constant 0 : index
    %103 = vector.load %arg7[%c0_23, %c0_24] : memref<8x8xf32, #tpu.memory_space<vmem>>, vector<8x8xf32>
    %cst_25 = arith.constant dense<0.000000e+00> : vector<20x8xf32>
    %104 = tpu.matmul %102, %103, %cst_25 {dimension_numbers = #tpu.dot_dimension_numbers<[1], [0], [0], [1], [0, 0, 1, 1], [], []>} : vector<20x8xf32>, vector<8x8xf32>, vector<20x8xf32> -> vector<20x8xf32>
    %105 = arith.addf %29, %104 : vector<20x8xf32>
    %c0_26 = arith.constant 0 : index
    %c0_27 = arith.constant 0 : index
    %106 = vector.load %arg8[%c0_26, %c0_27] : memref<1x8xf32, #tpu.memory_space<vmem>>, vector<1x8xf32>
    %107 = vector.broadcast %106 : vector<1x8xf32> to vector<20x8xf32>
    %108 = arith.addf %105, %107 : vector<20x8xf32>
    %c0_28 = arith.constant 0 : index
    %c0_29 = arith.constant 0 : index
    %109 = vector.load %arg9[%c0_28, %c0_29] : memref<8x16xf32, #tpu.memory_space<vmem>>, vector<8x16xf32>
    %cst_30 = arith.constant dense<0.000000e+00> : vector<20x16xf32>
    %110 = tpu.matmul %108, %109, %cst_30 {dimension_numbers = #tpu.dot_dimension_numbers<[1], [0], [0], [1], [0, 0, 1, 1], [], []>} : vector<20x8xf32>, vector<8x16xf32>, vector<20x16xf32> -> vector<20x16xf32>
    %c0_31 = arith.constant 0 : index
    %c0_32 = arith.constant 0 : index
    %111 = vector.load %arg10[%c0_31, %c0_32] : memref<1x16xf32, #tpu.memory_space<vmem>>, vector<1x16xf32>
    %112 = vector.broadcast %111 : vector<1x16xf32> to vector<20x16xf32>
    %113 = arith.addf %110, %112 : vector<20x16xf32>
    %c0_33 = arith.constant 0 : index
    %c0_34 = arith.constant 0 : index
    %114 = vector.load %arg11[%c0_33, %c0_34] : memref<16x8xf32, #tpu.memory_space<vmem>>, vector<16x8xf32>
    %cst_35 = arith.constant dense<0.000000e+00> : vector<20x8xf32>
    %115 = tpu.matmul %113, %114, %cst_35 {dimension_numbers = #tpu.dot_dimension_numbers<[1], [0], [0], [1], [0, 0, 1, 1], [], []>} : vector<20x16xf32>, vector<16x8xf32>, vector<20x8xf32> -> vector<20x8xf32>
    %116 = arith.addf %108, %115 : vector<20x8xf32>
    %c0_36 = arith.constant 0 : index
    %c0_37 = arith.constant 0 : index
    %117 = vector.load %arg12[%c0_36, %c0_37] : memref<1x8xf32, #tpu.memory_space<vmem>>, vector<1x8xf32>
    %118 = vector.broadcast %117 : vector<1x8xf32> to vector<20x8xf32>
    %119 = arith.addf %116, %118 : vector<20x8xf32>
    %c0_38 = arith.constant 0 : index
    %c0_39 = arith.constant 0 : index
    %120 = vector.load %arg15[%c0_38, %c0_39] : memref<8x32xf32, #tpu.memory_space<vmem>>, vector<8x32xf32>
    %cst_40 = arith.constant dense<0.000000e+00> : vector<20x32xf32>
    %121 = tpu.matmul %119, %120, %cst_40 {dimension_numbers = #tpu.dot_dimension_numbers<[1], [0], [0], [1], [0, 0, 1, 1], [], []>} : vector<20x8xf32>, vector<8x32xf32>, vector<20x32xf32> -> vector<20x32xf32>
    %c0_41 = arith.constant 0 : index
    %c0_42 = arith.constant 0 : index
    %122 = vector.load %arg16[%c0_41, %c0_42] : memref<1x32xf32, #tpu.memory_space<vmem>>, vector<1x32xf32>
    %123 = vector.broadcast %122 : vector<1x32xf32> to vector<20x32xf32>
    %124 = arith.addf %121, %123 : vector<20x32xf32>
    %c0_43 = arith.constant 0 : index
    %c0_44 = arith.constant 0 : index
    %125 = vector.load %arg13[%c0_43, %c0_44] : memref<8x16xf32, #tpu.memory_space<vmem>>, vector<8x16xf32>
    %cst_45 = arith.constant dense<0.000000e+00> : vector<2x16xf32>
    %126 = tpu.matmul %30, %125, %cst_45 {dimension_numbers = #tpu.dot_dimension_numbers<[1], [0], [0], [1], [0, 0, 1, 1], [], []>} : vector<2x8xf32>, vector<8x16xf32>, vector<2x16xf32> -> vector<2x16xf32>
    %c0_46 = arith.constant 0 : index
    %c0_47 = arith.constant 0 : index
    %127 = vector.load %arg14[%c0_46, %c0_47] : memref<1x16xf32, #tpu.memory_space<vmem>>, vector<1x16xf32>
    %128 = vector.broadcast %127 : vector<1x16xf32> to vector<2x16xf32>
    %129 = arith.addf %126, %128 : vector<2x16xf32>
    %130 = vector.extract_strided_slice %129 {offsets = [0, 0], sizes = [2, 8], strides = [1, 1]} : vector<2x16xf32> to vector<2x8xf32>
    %131 = arith.addf %30, %130 : vector<2x8xf32>
    %c0_48 = arith.constant 0 : index
    %c0_49 = arith.constant 0 : index
    %c0_50 = arith.constant 0 : index
    %132 = vector.load %arg17[%c0_48, %c0_49, %c0_50] : memref<2x8x8xf32, #tpu.memory_space<vmem>>, vector<1x8x8xf32>
    %133 = vector.shape_cast %132 : vector<1x8x8xf32> to vector<8x8xf32>
    %cst_51 = arith.constant dense<0.000000e+00> : vector<2x8xf32>
    %134 = tpu.matmul %131, %133, %cst_51 {dimension_numbers = #tpu.dot_dimension_numbers<[1], [0], [0], [1], [0, 0, 1, 1], [], []>} : vector<2x8xf32>, vector<8x8xf32>, vector<2x8xf32> -> vector<2x8xf32>
    %c0_52 = arith.constant 0 : index
    %c0_53 = arith.constant 0 : index
    %c0_54 = arith.constant 0 : index
    %135 = vector.load %arg18[%c0_52, %c0_53, %c0_54] : memref<2x1x8xf32, #tpu.memory_space<vmem>>, vector<1x1x8xf32>
    %136 = vector.shape_cast %135 : vector<1x1x8xf32> to vector<1x8xf32>
    %137 = vector.broadcast %136 : vector<1x8xf32> to vector<2x8xf32>
    %138 = arith.addf %134, %137 : vector<2x8xf32>
    %cst_55 = arith.constant 0.707106769 : f32
    %139 = vector.broadcast %cst_55 : f32 to vector<2x8xf32>
    %140 = arith.mulf %138, %139 : vector<2x8xf32>
    %141 = vector.extract_strided_slice %124 {offsets = [0, 0], sizes = [20, 8], strides = [1, 1]} : vector<20x32xf32> to vector<20x8xf32>
    %142 = vector.extract_strided_slice %124 {offsets = [0, 8], sizes = [20, 8], strides = [1, 1]} : vector<20x32xf32> to vector<20x8xf32>
    %143 = vector.broadcast %7 : vector<1x8xf32> to vector<2x8xf32>
    %144 = arith.mulf %140, %143 : vector<2x8xf32>
    %145 = vector.broadcast %14 : vector<1x8xf32> to vector<2x8xf32>
    %146 = arith.mulf %140, %145 : vector<2x8xf32>
    %147 = vector.broadcast %21 : vector<1x8xf32> to vector<2x8xf32>
    %148 = arith.mulf %140, %147 : vector<2x8xf32>
    %149 = vector.broadcast %28 : vector<1x8xf32> to vector<2x8xf32>
    %150 = arith.mulf %140, %149 : vector<2x8xf32>
    %151 = vector.shape_cast %144 : vector<2x8xf32> to vector<1x2x8xf32>
    %152 = vector.shape_cast %146 : vector<2x8xf32> to vector<1x2x8xf32>
    %153 = vector.shape_cast %148 : vector<2x8xf32> to vector<1x2x8xf32>
    %154 = vector.shape_cast %150 : vector<2x8xf32> to vector<1x2x8xf32>
    %155 = tpu.concatenate %151, %152, %153, %154 in 0 : vector<1x2x8xf32>, vector<1x2x8xf32>, vector<1x2x8xf32>, vector<1x2x8xf32> -> vector<4x2x8xf32>
    %156 = vector.shape_cast %141 : vector<20x8xf32> to vector<1x20x8xf32>
    %157 = vector.shape_cast %156 : vector<1x20x8xf32> to vector<1x20x8xf32>
    %158 = vector.broadcast %157 : vector<1x20x8xf32> to vector<4x20x8xf32>
    %159 = vector.shape_cast %142 : vector<20x8xf32> to vector<1x20x8xf32>
    %160 = vector.shape_cast %159 : vector<1x20x8xf32> to vector<1x20x8xf32>
    %161 = vector.broadcast %160 : vector<1x20x8xf32> to vector<4x20x8xf32>
    "tpu.trace_start"() <{level = 10 : i32, message = "hqd,hkd->hqk"}> : () -> ()
    %cst_56 = arith.constant dense<0.000000e+00> : vector<4x2x20xf32>
    %162 = tpu.matmul %155, %158, %cst_56 {dimension_numbers = #tpu.dot_dimension_numbers<[2], [2], [1], [1], [0, 0, 0, 1, 1, 1], [0], [0]>} : vector<4x2x8xf32>, vector<4x20x8xf32>, vector<4x2x20xf32> -> vector<4x2x20xf32>
    "tpu.trace_stop"() : () -> ()
    %163 = vector.broadcast %33 : vector<2x1xf32> to vector<2x20xf32>
    %164 = vector.broadcast %32 : vector<1x20xf32> to vector<2x20xf32>
    %165 = arith.cmpf oeq, %163, %164 : vector<2x20xf32>
    %cst_57 = arith.constant 0.000000e+00 : f32
    %cst_58 = arith.constant -1.000000e+09 : f32
    %166 = vector.broadcast %cst_57 : f32 to vector<2x20xf32>
    %167 = vector.broadcast %cst_58 : f32 to vector<2x20xf32>
    %168 = arith.select %165, %166, %167 : vector<2x20xi1>, vector<2x20xf32>
    %169 = vector.shape_cast %168 : vector<2x20xf32> to vector<1x2x20xf32>
    %170 = vector.broadcast %169 : vector<1x2x20xf32> to vector<4x2x20xf32>
    %171 = arith.addf %162, %170 : vector<4x2x20xf32>
    %cst_59 = arith.constant dense<0xFF800000> : vector<4x2xf32>
    %172 = vector.multi_reduction <maximumf>, %171, %cst_59 [2] : vector<4x2x20xf32> to vector<4x2xf32>
    %173 = vector.shape_cast %172 : vector<4x2xf32> to vector<4x2x1xf32>
    %174 = vector.broadcast %173 : vector<4x2x1xf32> to vector<4x2x20xf32>
    %175 = arith.subf %171, %174 : vector<4x2x20xf32>
    %176 = math.exp %175 : vector<4x2x20xf32>
    %cst_60 = arith.constant dense<0.000000e+00> : vector<4x2xf32>
    %177 = vector.multi_reduction <add>, %176, %cst_60 [2] : vector<4x2x20xf32> to vector<4x2xf32>
    %178 = vector.shape_cast %177 : vector<4x2xf32> to vector<4x2x1xf32>
    %179 = tpu.reciprocal %178 {approx = true} : vector<4x2x1xf32> -> vector<4x2x1xf32>
    %180 = vector.broadcast %179 : vector<4x2x1xf32> to vector<4x2x20xf32>
    %181 = arith.mulf %176, %180 : vector<4x2x20xf32>
    "tpu.trace_start"() <{level = 10 : i32, message = "hqk,hkd->hqd"}> : () -> ()
    %cst_61 = arith.constant dense<0.000000e+00> : vector<4x2x8xf32>
    %182 = tpu.matmul %181, %161, %cst_61 {dimension_numbers = #tpu.dot_dimension_numbers<[2], [1], [1], [2], [0, 0, 0, 1, 1, 2], [0], [0]>} : vector<4x2x20xf32>, vector<4x20x8xf32>, vector<4x2x8xf32> -> vector<4x2x8xf32>
    "tpu.trace_stop"() : () -> ()
    %183 = vector.extract_strided_slice %182 {offsets = [0, 0, 0], sizes = [1, 2, 8], strides = [1, 1, 1]} : vector<4x2x8xf32> to vector<1x2x8xf32>
    %184 = vector.shape_cast %183 : vector<1x2x8xf32> to vector<2x8xf32>
    %185 = vector.broadcast %7 : vector<1x8xf32> to vector<2x8xf32>
    %186 = arith.mulf %184, %185 : vector<2x8xf32>
    %187 = vector.extract_strided_slice %182 {offsets = [1, 0, 0], sizes = [1, 2, 8], strides = [1, 1, 1]} : vector<4x2x8xf32> to vector<1x2x8xf32>
    %188 = vector.shape_cast %187 : vector<1x2x8xf32> to vector<2x8xf32>
    %189 = vector.broadcast %14 : vector<1x8xf32> to vector<2x8xf32>
    %190 = arith.mulf %188, %189 : vector<2x8xf32>
    %191 = arith.addf %186, %190 : vector<2x8xf32>
    %192 = vector.extract_strided_slice %182 {offsets = [2, 0, 0], sizes = [1, 2, 8], strides = [1, 1, 1]} : vector<4x2x8xf32> to vector<1x2x8xf32>
    %193 = vector.shape_cast %192 : vector<1x2x8xf32> to vector<2x8xf32>
    %194 = vector.broadcast %21 : vector<1x8xf32> to vector<2x8xf32>
    %195 = arith.mulf %193, %194 : vector<2x8xf32>
    %196 = arith.addf %191, %195 : vector<2x8xf32>
    %197 = vector.extract_strided_slice %182 {offsets = [3, 0, 0], sizes = [1, 2, 8], strides = [1, 1, 1]} : vector<4x2x8xf32> to vector<1x2x8xf32>
    %198 = vector.shape_cast %197 : vector<1x2x8xf32> to vector<2x8xf32>
    %199 = vector.broadcast %28 : vector<1x8xf32> to vector<2x8xf32>
    %200 = arith.mulf %198, %199 : vector<2x8xf32>
    %201 = arith.addf %196, %200 : vector<2x8xf32>
    %c0_62 = arith.constant 0 : index
    %c0_63 = arith.constant 0 : index
    %c0_64 = arith.constant 0 : index
    %202 = vector.load %arg19[%c0_62, %c0_63, %c0_64] : memref<2x8x8xf32, #tpu.memory_space<vmem>>, vector<1x8x8xf32>
    %203 = vector.shape_cast %202 : vector<1x8x8xf32> to vector<8x8xf32>
    %cst_65 = arith.constant dense<0.000000e+00> : vector<2x8xf32>
    %204 = tpu.matmul %201, %203, %cst_65 {dimension_numbers = #tpu.dot_dimension_numbers<[1], [0], [0], [1], [0, 0, 1, 1], [], []>} : vector<2x8xf32>, vector<8x8xf32>, vector<2x8xf32> -> vector<2x8xf32>
    %205 = arith.addf %131, %204 : vector<2x8xf32>
    %c0_66 = arith.constant 0 : index
    %c0_67 = arith.constant 0 : index
    %c0_68 = arith.constant 0 : index
    %206 = vector.load %arg20[%c0_66, %c0_67, %c0_68] : memref<2x1x8xf32, #tpu.memory_space<vmem>>, vector<1x1x8xf32>
    %207 = vector.shape_cast %206 : vector<1x1x8xf32> to vector<1x8xf32>
    %208 = vector.broadcast %207 : vector<1x8xf32> to vector<2x8xf32>
    %209 = arith.addf %205, %208 : vector<2x8xf32>
    %c0_69 = arith.constant 0 : index
    %c0_70 = arith.constant 0 : index
    %c0_71 = arith.constant 0 : index
    %210 = vector.load %arg21[%c0_69, %c0_70, %c0_71] : memref<2x8x16xf32, #tpu.memory_space<vmem>>, vector<1x8x16xf32>
    %211 = vector.shape_cast %210 : vector<1x8x16xf32> to vector<8x16xf32>
    %cst_72 = arith.constant dense<0.000000e+00> : vector<2x16xf32>
    %212 = tpu.matmul %209, %211, %cst_72 {dimension_numbers = #tpu.dot_dimension_numbers<[1], [0], [0], [1], [0, 0, 1, 1], [], []>} : vector<2x8xf32>, vector<8x16xf32>, vector<2x16xf32> -> vector<2x16xf32>
    %c0_73 = arith.constant 0 : index
    %c0_74 = arith.constant 0 : index
    %c0_75 = arith.constant 0 : index
    %213 = vector.load %arg22[%c0_73, %c0_74, %c0_75] : memref<2x1x16xf32, #tpu.memory_space<vmem>>, vector<1x1x16xf32>
    %214 = vector.shape_cast %213 : vector<1x1x16xf32> to vector<1x16xf32>
    %215 = vector.broadcast %214 : vector<1x16xf32> to vector<2x16xf32>
    %216 = arith.addf %212, %215 : vector<2x16xf32>
    %c0_76 = arith.constant 0 : index
    %c0_77 = arith.constant 0 : index
    %c0_78 = arith.constant 0 : index
    %217 = vector.load %arg23[%c0_76, %c0_77, %c0_78] : memref<2x16x8xf32, #tpu.memory_space<vmem>>, vector<1x16x8xf32>
    %218 = vector.shape_cast %217 : vector<1x16x8xf32> to vector<16x8xf32>
    %cst_79 = arith.constant dense<0.000000e+00> : vector<2x8xf32>
    %219 = tpu.matmul %216, %218, %cst_79 {dimension_numbers = #tpu.dot_dimension_numbers<[1], [0], [0], [1], [0, 0, 1, 1], [], []>} : vector<2x16xf32>, vector<16x8xf32>, vector<2x8xf32> -> vector<2x8xf32>
    %220 = arith.addf %209, %219 : vector<2x8xf32>
    %c0_80 = arith.constant 0 : index
    %c0_81 = arith.constant 0 : index
    %c0_82 = arith.constant 0 : index
    %221 = vector.load %arg24[%c0_80, %c0_81, %c0_82] : memref<2x1x8xf32, #tpu.memory_space<vmem>>, vector<1x1x8xf32>
    %222 = vector.shape_cast %221 : vector<1x1x8xf32> to vector<1x8xf32>
    %223 = vector.broadcast %222 : vector<1x8xf32> to vector<2x8xf32>
    %224 = arith.addf %220, %223 : vector<2x8xf32>
    %c0_83 = arith.constant 0 : index
    %c0_84 = arith.constant 0 : index
    %225 = vector.load %arg25[%c0_83, %c0_84] : memref<8x4xf32, #tpu.memory_space<vmem>>, vector<8x4xf32>
    %cst_85 = arith.constant dense<0.000000e+00> : vector<2x4xf32>
    %226 = tpu.matmul %224, %225, %cst_85 {dimension_numbers = #tpu.dot_dimension_numbers<[1], [0], [0], [1], [0, 0, 1, 1], [], []>} : vector<2x8xf32>, vector<8x4xf32>, vector<2x4xf32> -> vector<2x4xf32>
    %c0_86 = arith.constant 0 : index
    %c0_87 = arith.constant 0 : index
    %227 = vector.load %arg26[%c0_86, %c0_87] : memref<1x4xf32, #tpu.memory_space<vmem>>, vector<1x4xf32>
    %228 = vector.broadcast %227 : vector<1x4xf32> to vector<2x4xf32>
    %229 = arith.addf %226, %228 : vector<2x4xf32>
    %cst_88 = arith.constant 0.000000e+00 : f32
    %230 = vector.broadcast %cst_88 : f32 to vector<2x4xf32>
    %231 = arith.subf %230, %229 : vector<2x4xf32>
    %232 = math.exp %231 : vector<2x4xf32>
    %cst_89 = arith.constant 1.000000e+00 : f32
    %233 = vector.broadcast %cst_89 : f32 to vector<2x4xf32>
    %234 = arith.addf %233, %232 : vector<2x4xf32>
    %cst_90 = arith.constant 1.000000e+00 : f32
    %235 = vector.broadcast %cst_90 : f32 to vector<2x4xf32>
    %236 = arith.divf %235, %234 : vector<2x4xf32>
    %c0_91 = arith.constant 0 : index
    %c0_92 = arith.constant 0 : index
    %c0_93 = arith.constant 0 : index
    %237 = vector.load %arg27[%c0_91, %c0_92, %c0_93] : memref<2x2x4xf32, #tpu.memory_space<vmem>>, vector<1x2x4xf32>
    %238 = vector.shape_cast %237 : vector<1x2x4xf32> to vector<2x4xf32>
    %239 = vector.shape_cast %236 : vector<2x4xf32> to vector<1x2x4xf32>
    tpu.vector_store %arg27[%c0_91, %c0_92, %c0_93], %239 {strides = array<i32>} : memref<2x2x4xf32, #tpu.memory_space<vmem>>, vector<1x2x4xf32>,
    %240 = vector.extract_strided_slice %129 {offsets = [0, 8], sizes = [2, 8], strides = [1, 1]} : vector<2x16xf32> to vector<2x8xf32>
    %241 = arith.addf %30, %240 : vector<2x8xf32>
    %c1 = arith.constant 1 : index
    %c0_94 = arith.constant 0 : index
    %c0_95 = arith.constant 0 : index
    %242 = vector.load %arg17[%c1, %c0_94, %c0_95] : memref<2x8x8xf32, #tpu.memory_space<vmem>>, vector<1x8x8xf32>
    %243 = vector.shape_cast %242 : vector<1x8x8xf32> to vector<8x8xf32>
    %cst_96 = arith.constant dense<0.000000e+00> : vector<2x8xf32>
    %244 = tpu.matmul %241, %243, %cst_96 {dimension_numbers = #tpu.dot_dimension_numbers<[1], [0], [0], [1], [0, 0, 1, 1], [], []>} : vector<2x8xf32>, vector<8x8xf32>, vector<2x8xf32> -> vector<2x8xf32>
    %c1_97 = arith.constant 1 : index
    %c0_98 = arith.constant 0 : index
    %c0_99 = arith.constant 0 : index
    %245 = vector.load %arg18[%c1_97, %c0_98, %c0_99] : memref<2x1x8xf32, #tpu.memory_space<vmem>>, vector<1x1x8xf32>
    %246 = vector.shape_cast %245 : vector<1x1x8xf32> to vector<1x8xf32>
    %247 = vector.broadcast %246 : vector<1x8xf32> to vector<2x8xf32>
    %248 = arith.addf %244, %247 : vector<2x8xf32>
    %cst_100 = arith.constant 0.707106769 : f32
    %249 = vector.broadcast %cst_100 : f32 to vector<2x8xf32>
    %250 = arith.mulf %248, %249 : vector<2x8xf32>
    %251 = vector.extract_strided_slice %124 {offsets = [0, 16], sizes = [20, 8], strides = [1, 1]} : vector<20x32xf32> to vector<20x8xf32>
    %252 = vector.extract_strided_slice %124 {offsets = [0, 24], sizes = [20, 8], strides = [1, 1]} : vector<20x32xf32> to vector<20x8xf32>
    %253 = vector.broadcast %7 : vector<1x8xf32> to vector<2x8xf32>
    %254 = arith.mulf %250, %253 : vector<2x8xf32>
    %255 = vector.broadcast %14 : vector<1x8xf32> to vector<2x8xf32>
    %256 = arith.mulf %250, %255 : vector<2x8xf32>
    %257 = vector.broadcast %21 : vector<1x8xf32> to vector<2x8xf32>
    %258 = arith.mulf %250, %257 : vector<2x8xf32>
    %259 = vector.broadcast %28 : vector<1x8xf32> to vector<2x8xf32>
    %260 = arith.mulf %250, %259 : vector<2x8xf32>
    %261 = vector.shape_cast %254 : vector<2x8xf32> to vector<1x2x8xf32>
    %262 = vector.shape_cast %256 : vector<2x8xf32> to vector<1x2x8xf32>
    %263 = vector.shape_cast %258 : vector<2x8xf32> to vector<1x2x8xf32>
    %264 = vector.shape_cast %260 : vector<2x8xf32> to vector<1x2x8xf32>
    %265 = tpu.concatenate %261, %262, %263, %264 in 0 : vector<1x2x8xf32>, vector<1x2x8xf32>, vector<1x2x8xf32>, vector<1x2x8xf32> -> vector<4x2x8xf32>
    %266 = vector.shape_cast %251 : vector<20x8xf32> to vector<1x20x8xf32>
    %267 = vector.shape_cast %266 : vector<1x20x8xf32> to vector<1x20x8xf32>
    %268 = vector.broadcast %267 : vector<1x20x8xf32> to vector<4x20x8xf32>
    %269 = vector.shape_cast %252 : vector<20x8xf32> to vector<1x20x8xf32>
    %270 = vector.shape_cast %269 : vector<1x20x8xf32> to vector<1x20x8xf32>
    %271 = vector.broadcast %270 : vector<1x20x8xf32> to vector<4x20x8xf32>
    "tpu.trace_start"() <{level = 10 : i32, message = "hqd,hkd->hqk"}> : () -> ()
    %cst_101 = arith.constant dense<0.000000e+00> : vector<4x2x20xf32>
    %272 = tpu.matmul %265, %268, %cst_101 {dimension_numbers = #tpu.dot_dimension_numbers<[2], [2], [1], [1], [0, 0, 0, 1, 1, 1], [0], [0]>} : vector<4x2x8xf32>, vector<4x20x8xf32>, vector<4x2x20xf32> -> vector<4x2x20xf32>
    "tpu.trace_stop"() : () -> ()
    %273 = vector.broadcast %33 : vector<2x1xf32> to vector<2x20xf32>
    %274 = vector.broadcast %32 : vector<1x20xf32> to vector<2x20xf32>
    %275 = arith.cmpf oeq, %273, %274 : vector<2x20xf32>
    %cst_102 = arith.constant 0.000000e+00 : f32
    %cst_103 = arith.constant -1.000000e+09 : f32
    %276 = vector.broadcast %cst_102 : f32 to vector<2x20xf32>
    %277 = vector.broadcast %cst_103 : f32 to vector<2x20xf32>
    %278 = arith.select %275, %276, %277 : vector<2x20xi1>, vector<2x20xf32>
    %279 = vector.shape_cast %278 : vector<2x20xf32> to vector<1x2x20xf32>
    %280 = vector.broadcast %279 : vector<1x2x20xf32> to vector<4x2x20xf32>
    %281 = arith.addf %272, %280 : vector<4x2x20xf32>
    %cst_104 = arith.constant dense<0xFF800000> : vector<4x2xf32>
    %282 = vector.multi_reduction <maximumf>, %281, %cst_104 [2] : vector<4x2x20xf32> to vector<4x2xf32>
    %283 = vector.shape_cast %282 : vector<4x2xf32> to vector<4x2x1xf32>
    %284 = vector.broadcast %283 : vector<4x2x1xf32> to vector<4x2x20xf32>
    %285 = arith.subf %281, %284 : vector<4x2x20xf32>
    %286 = math.exp %285 : vector<4x2x20xf32>
    %cst_105 = arith.constant dense<0.000000e+00> : vector<4x2xf32>
    %287 = vector.multi_reduction <add>, %286, %cst_105 [2] : vector<4x2x20xf32> to vector<4x2xf32>
    %288 = vector.shape_cast %287 : vector<4x2xf32> to vector<4x2x1xf32>
    %289 = tpu.reciprocal %288 {approx = true} : vector<4x2x1xf32> -> vector<4x2x1xf32>
    %290 = vector.broadcast %289 : vector<4x2x1xf32> to vector<4x2x20xf32>
    %291 = arith.mulf %286, %290 : vector<4x2x20xf32>
    "tpu.trace_start"() <{level = 10 : i32, message = "hqk,hkd->hqd"}> : () -> ()
    %cst_106 = arith.constant dense<0.000000e+00> : vector<4x2x8xf32>
    %292 = tpu.matmul %291, %271, %cst_106 {dimension_numbers = #tpu.dot_dimension_numbers<[2], [1], [1], [2], [0, 0, 0, 1, 1, 2], [0], [0]>} : vector<4x2x20xf32>, vector<4x20x8xf32>, vector<4x2x8xf32> -> vector<4x2x8xf32>
    "tpu.trace_stop"() : () -> ()
    %293 = vector.extract_strided_slice %292 {offsets = [0, 0, 0], sizes = [1, 2, 8], strides = [1, 1, 1]} : vector<4x2x8xf32> to vector<1x2x8xf32>
    %294 = vector.shape_cast %293 : vector<1x2x8xf32> to vector<2x8xf32>
    %295 = vector.broadcast %7 : vector<1x8xf32> to vector<2x8xf32>
    %296 = arith.mulf %294, %295 : vector<2x8xf32>
    %297 = vector.extract_strided_slice %292 {offsets = [1, 0, 0], sizes = [1, 2, 8], strides = [1, 1, 1]} : vector<4x2x8xf32> to vector<1x2x8xf32>
    %298 = vector.shape_cast %297 : vector<1x2x8xf32> to vector<2x8xf32>
    %299 = vector.broadcast %14 : vector<1x8xf32> to vector<2x8xf32>
    %300 = arith.mulf %298, %299 : vector<2x8xf32>
    %301 = arith.addf %296, %300 : vector<2x8xf32>
    %302 = vector.extract_strided_slice %292 {offsets = [2, 0, 0], sizes = [1, 2, 8], strides = [1, 1, 1]} : vector<4x2x8xf32> to vector<1x2x8xf32>
    %303 = vector.shape_cast %302 : vector<1x2x8xf32> to vector<2x8xf32>
    %304 = vector.broadcast %21 : vector<1x8xf32> to vector<2x8xf32>
    %305 = arith.mulf %303, %304 : vector<2x8xf32>
    %306 = arith.addf %301, %305 : vector<2x8xf32>
    %307 = vector.extract_strided_slice %292 {offsets = [3, 0, 0], sizes = [1, 2, 8], strides = [1, 1, 1]} : vector<4x2x8xf32> to vector<1x2x8xf32>
    %308 = vector.shape_cast %307 : vector<1x2x8xf32> to vector<2x8xf32>
    %309 = vector.broadcast %28 : vector<1x8xf32> to vector<2x8xf32>
    %310 = arith.mulf %308, %309 : vector<2x8xf32>
    %311 = arith.addf %306, %310 : vector<2x8xf32>
    %c1_107 = arith.constant 1 : index
    %c0_108 = arith.constant 0 : index
    %c0_109 = arith.constant 0 : index
    %312 = vector.load %arg19[%c1_107, %c0_108, %c0_109] : memref<2x8x8xf32, #tpu.memory_space<vmem>>, vector<1x8x8xf32>
    %313 = vector.shape_cast %312 : vector<1x8x8xf32> to vector<8x8xf32>
    %cst_110 = arith.constant dense<0.000000e+00> : vector<2x8xf32>
    %314 = tpu.matmul %311, %313, %cst_110 {dimension_numbers = #tpu.dot_dimension_numbers<[1], [0], [0], [1], [0, 0, 1, 1], [], []>} : vector<2x8xf32>, vector<8x8xf32>, vector<2x8xf32> -> vector<2x8xf32>
    %315 = arith.addf %241, %314 : vector<2x8xf32>
    %c1_111 = arith.constant 1 : index
    %c0_112 = arith.constant 0 : index
    %c0_113 = arith.constant 0 : index
    %316 = vector.load %arg20[%c1_111, %c0_112, %c0_113] : memref<2x1x8xf32, #tpu.memory_space<vmem>>, vector<1x1x8xf32>
    %317 = vector.shape_cast %316 : vector<1x1x8xf32> to vector<1x8xf32>
    %318 = vector.broadcast %317 : vector<1x8xf32> to vector<2x8xf32>
    %319 = arith.addf %315, %318 : vector<2x8xf32>
    %c1_114 = arith.constant 1 : index
    %c0_115 = arith.constant 0 : index
    %c0_116 = arith.constant 0 : index
    %320 = vector.load %arg21[%c1_114, %c0_115, %c0_116] : memref<2x8x16xf32, #tpu.memory_space<vmem>>, vector<1x8x16xf32>
    %321 = vector.shape_cast %320 : vector<1x8x16xf32> to vector<8x16xf32>
    %cst_117 = arith.constant dense<0.000000e+00> : vector<2x16xf32>
    %322 = tpu.matmul %319, %321, %cst_117 {dimension_numbers = #tpu.dot_dimension_numbers<[1], [0], [0], [1], [0, 0, 1, 1], [], []>} : vector<2x8xf32>, vector<8x16xf32>, vector<2x16xf32> -> vector<2x16xf32>
    %c1_118 = arith.constant 1 : index
    %c0_119 = arith.constant 0 : index
    %c0_120 = arith.constant 0 : index
    %323 = vector.load %arg22[%c1_118, %c0_119, %c0_120] : memref<2x1x16xf32, #tpu.memory_space<vmem>>, vector<1x1x16xf32>
    %324 = vector.shape_cast %323 : vector<1x1x16xf32> to vector<1x16xf32>
    %325 = vector.broadcast %324 : vector<1x16xf32> to vector<2x16xf32>
    %326 = arith.addf %322, %325 : vector<2x16xf32>
    %c1_121 = arith.constant 1 : index
    %c0_122 = arith.constant 0 : index
    %c0_123 = arith.constant 0 : index
    %327 = vector.load %arg23[%c1_121, %c0_122, %c0_123] : memref<2x16x8xf32, #tpu.memory_space<vmem>>, vector<1x16x8xf32>
    %328 = vector.shape_cast %327 : vector<1x16x8xf32> to vector<16x8xf32>
    %cst_124 = arith.constant dense<0.000000e+00> : vector<2x8xf32>
    %329 = tpu.matmul %326, %328, %cst_124 {dimension_numbers = #tpu.dot_dimension_numbers<[1], [0], [0], [1], [0, 0, 1, 1], [], []>} : vector<2x16xf32>, vector<16x8xf32>, vector<2x8xf32> -> vector<2x8xf32>
    %330 = arith.addf %319, %329 : vector<2x8xf32>
    %c1_125 = arith.constant 1 : index
    %c0_126 = arith.constant 0 : index
    %c0_127 = arith.constant 0 : index
    %331 = vector.load %arg24[%c1_125, %c0_126, %c0_127] : memref<2x1x8xf32, #tpu.memory_space<vmem>>, vector<1x1x8xf32>
    %332 = vector.shape_cast %331 : vector<1x1x8xf32> to vector<1x8xf32>
    %333 = vector.broadcast %332 : vector<1x8xf32> to vector<2x8xf32>
    %334 = arith.addf %330, %333 : vector<2x8xf32>
    %c0_128 = arith.constant 0 : index
    %c0_129 = arith.constant 0 : index
    %335 = vector.load %arg25[%c0_128, %c0_129] : memref<8x4xf32, #tpu.memory_space<vmem>>, vector<8x4xf32>
    %cst_130 = arith.constant dense<0.000000e+00> : vector<2x4xf32>
    %336 = tpu.matmul %334, %335, %cst_130 {dimension_numbers = #tpu.dot_dimension_numbers<[1], [0], [0], [1], [0, 0, 1, 1], [], []>} : vector<2x8xf32>, vector<8x4xf32>, vector<2x4xf32> -> vector<2x4xf32>
    %c0_131 = arith.constant 0 : index
    %c0_132 = arith.constant 0 : index
    %337 = vector.load %arg26[%c0_131, %c0_132] : memref<1x4xf32, #tpu.memory_space<vmem>>, vector<1x4xf32>
    %338 = vector.broadcast %337 : vector<1x4xf32> to vector<2x4xf32>
    %339 = arith.addf %336, %338 : vector<2x4xf32>
    %cst_133 = arith.constant 0.000000e+00 : f32
    %340 = vector.broadcast %cst_133 : f32 to vector<2x4xf32>
    %341 = arith.subf %340, %339 : vector<2x4xf32>
    %342 = math.exp %341 : vector<2x4xf32>
    %cst_134 = arith.constant 1.000000e+00 : f32
    %343 = vector.broadcast %cst_134 : f32 to vector<2x4xf32>
    %344 = arith.addf %343, %342 : vector<2x4xf32>
    %cst_135 = arith.constant 1.000000e+00 : f32
    %345 = vector.broadcast %cst_135 : f32 to vector<2x4xf32>
    %346 = arith.divf %345, %344 : vector<2x4xf32>
    %c1_136 = arith.constant 1 : index
    %c0_137 = arith.constant 0 : index
    %c0_138 = arith.constant 0 : index
    %347 = vector.load %arg27[%c1_136, %c0_137, %c0_138] : memref<2x2x4xf32, #tpu.memory_space<vmem>>, vector<1x2x4xf32>
    %348 = vector.shape_cast %347 : vector<1x2x4xf32> to vector<2x4xf32>
    %349 = vector.shape_cast %346 : vector<2x4xf32> to vector<1x2x4xf32>
    tpu.vector_store %arg27[%c1_136, %c0_137, %c0_138], %349 {strides = array<i32>} : memref<2x2x4xf32, #tpu.memory_space<vmem>>, vector<1x2x4xf32>,
    return
  }
}

</mosaic_0001>

<llo_original>
// kernel: tile.9
$region0: #{tile.9}
  %s0 = inlined_call_operand.vmem [shape: f32[2,2,4], index: 0, kind: input, shape index: {}]
  %s1 = inlined_call_operand.vmem [shape: f32[2,8], index: 1, kind: output, shape index: {}]
  $region1: #{tile.9} parent=0
    #allocation0 [shape = 'u8[4096]{0}', space=vmem, size = 0x1000, scoped, tag = 'scoped mem for output reshape']
    #allocation1 [shape = 'u8[8192]{0}', space=vmem, size = 0x2000, scoped, tag = 'scoped mem for input reshape']
    %s3 = sshllo.u32 0, 2
    %s4 = scalar_lea.vmem %s0, 2
    %v5 = vld [vmem:[%s4] sm:%s3]
    %s6 = scalar_lea.vmem [#allocation1], 8
    %7 = vst [vmem:[%s6] sm:%s3] %v5
    %v8 = vld [vmem:[%s0] sm:%s3]
    %9 = vst [vmem:[#allocation1] sm:%s3] %v8
    %s10 = smov 3
    %v11 = vld [vmem:[#allocation1] ss:$8 sm:%s10]
    %vm12 = vcmask 31744
    %13 = vst.msk [vmem:[#allocation0] sm:$0x3] %vm12, %v11
    %s14 = scalar_lea.vmem [#allocation1], 1
    %s15 = smov 3
    %v16 = vld [vmem:[%s14] ss:$8 sm:%s15]
    %17 = vrot.lane.b32.xlu0 %v16, 4
    %v18 = vpop.permute.xlu0 %17
    %vm19 = vcmask 64544
    %20 = vst.msk [vmem:[#allocation0] sm:$0x3] %vm19, %v18
    %s22 = sshllo.u32 0, 2
    %v24 = vld [vmem:[#allocation0] sm:%s22]
    %s25 = sshllo.u32 0, 2
    %26 = vst [vmem:[%s1] sm:%s25] %v24

// kernel: tranad_self_conditioning_forward.1
$region0: #{tranad_self_conditioning_forward.1}
  #allocation0 [shape = 'u32[]', space=smem, size = 0x4, offset = 0x4, fixed_abs, tag = 'smem constant byte address 0x4 - core index']
  #allocation1 [shape = 'u32[144,128]{1,0:T(1,128)}', space=vmem, size = 0x12000, scoped, tag = 'internal scratch']
  %s0 = inlined_call_operand.vmem [shape: f32[20,8], index: 0, kind: input, shape index: {}]
  %s1 = inlined_call_operand.vmem [shape: f32[2,8], index: 1, kind: input, shape index: {}]
  %s2 = inlined_call_operand.vmem [shape: f32[20,1], index: 2, kind: input, shape index: {}]
  %s3 = inlined_call_operand.vmem [shape: f32[1,20], index: 3, kind: input, shape index: {}]
  %s4 = inlined_call_operand.vmem [shape: f32[2,1], index: 4, kind: input, shape index: {}]
  %s5 = inlined_call_operand.vmem [shape: f32[8,24], index: 5, kind: input, shape index: {}]
  %s6 = inlined_call_operand.vmem [shape: f32[1,24], index: 6, kind: input, shape index: {}]
  %s7 = inlined_call_operand.vmem [shape: f32[8,8], index: 7, kind: input, shape index: {}]
  %s8 = inlined_call_operand.vmem [shape: f32[1,8], index: 8, kind: input, shape index: {}]
  %s9 = inlined_call_operand.vmem [shape: f32[8,16], index: 9, kind: input, shape index: {}]
  %s10 = inlined_call_operand.vmem [shape: f32[1,16], index: 10, kind: input, shape index: {}]
  %s11 = inlined_call_operand.vmem [shape: f32[16,8], index: 11, kind: input, shape index: {}]
  %s12 = inlined_call_operand.vmem [shape: f32[1,8], index: 12, kind: input, shape index: {}]
  %s13 = inlined_call_operand.vmem [shape: f32[8,16], index: 13, kind: input, shape index: {}]
  %s14 = inlined_call_operand.vmem [shape: f32[1,16], index: 14, kind: input, shape index: {}]
  %s15 = inlined_call_operand.vmem [shape: f32[8,32], index: 15, kind: input, shape index: {}]
  %s16 = inlined_call_operand.vmem [shape: f32[1,32], index: 16, kind: input, shape index: {}]
  %s17 = inlined_call_operand.vmem [shape: f32[2,8,8], index: 17, kind: input, shape index: {}]
  %s18 = inlined_call_operand.vmem [shape: f32[2,1,8], index: 18, kind: input, shape index: {}]
  %s19 = inlined_call_operand.vmem [shape: f32[2,8,8], index: 19, kind: input, shape index: {}]
  %s20 = inlined_call_operand.vmem [shape: f32[2,1,8], index: 20, kind: input, shape index: {}]
  %s21 = inlined_call_operand.vmem [shape: f32[2,8,16], index: 21, kind: input, shape index: {}]
  %s22 = inlined_call_operand.vmem [shape: f32[2,1,16], index: 22, kind: input, shape index: {}]
  %s23 = inlined_call_operand.vmem [shape: f32[2,16,8], index: 23, kind: input, shape index: {}]
  %s24 = inlined_call_operand.vmem [shape: f32[2,1,8], index: 24, kind: input, shape index: {}]
  %s25 = inlined_call_operand.vmem [shape: f32[8,4], index: 25, kind: input, shape index: {}]
  %s26 = inlined_call_operand.vmem [shape: f32[1,4], index: 26, kind: input, shape index: {}]
  %s27 = inlined_call_operand.vmem [shape: f32[2,2,4], index: 27, kind: output, shape index: {}]
  %s28 = sld [smem:[#allocation0]]
  $region118: #{tranad_self_conditioning_forward.1} parent=0
    _
  %s30 = ssub.s32 1, %s28
  %s31 = scalar_select 0, %s30, %s28
  // Predicated region
  $region2: #{tranad_self_conditioning_forward.1} parent=0 // pred_check
    _
  $region3: #{tranad_self_conditioning_forward.1} parent=0 // pred_check_branch
    %33 = sbr.rel (0) target = $region5
  $region4: #{tranad_self_conditioning_forward.1} parent=0 // pred_region
    _
  $region5: #{tranad_self_conditioning_forward.1} parent=0 // pred_fallthru
    _
  // Predicated region
  $region6: #{tranad_self_conditioning_forward.1} parent=0 // pred_check
    _
  $region7: #{tranad_self_conditioning_forward.1} parent=0 // pred_check_branch
    %35 = sbr.rel (0) target = $region9
  $region8: #{tranad_self_conditioning_forward.1} parent=0 // pred_region
    _
  $region9: #{tranad_self_conditioning_forward.1} parent=0 // pred_fallthru
    _
  // Predicated region
  $region10: #{tranad_self_conditioning_forward.1} parent=0 // pred_check
    _
  $region11: #{tranad_self_conditioning_forward.1} parent=0 // pred_check_branch
    %37 = sbr.rel (0) target = $region13
  $region12: #{tranad_self_conditioning_forward.1} parent=0 // pred_region
    _
  $region13: #{tranad_self_conditioning_forward.1} parent=0 // pred_fallthru
    _
  // Predicated region
  $region14: #{tranad_self_conditioning_forward.1} parent=0 // pred_check
    _
  $region15: #{tranad_self_conditioning_forward.1} parent=0 // pred_check_branch
    %39 = sbr.rel (0) target = $region17
  $region16: #{tranad_self_conditioning_forward.1} parent=0 // pred_region
    _
  $region17: #{tranad_self_conditioning_forward.1} parent=0 // pred_fallthru
    _
  // Predicated region
  $region18: #{tranad_self_conditioning_forward.1} parent=0 // pred_check
    _
  $region19: #{tranad_self_conditioning_forward.1} parent=0 // pred_check_branch
    %41 = sbr.rel (0) target = $region21
  $region20: #{tranad_self_conditioning_forward.1} parent=0 // pred_region
    _
  $region21: #{tranad_self_conditioning_forward.1} parent=0 // pred_fallthru
    _
  // Predicated region
  $region22: #{tranad_self_conditioning_forward.1} parent=0 // pred_check
    _
  $region23: #{tranad_self_conditioning_forward.1} parent=0 // pred_check_branch
    %43 = sbr.rel (0) target = $region25
  $region24: #{tranad_self_conditioning_forward.1} parent=0 // pred_region
    _
  $region25: #{tranad_self_conditioning_forward.1} parent=0 // pred_fallthru
    _
  // Predicated region
  $region26: #{tranad_self_conditioning_forward.1} parent=0 // pred_check
    _
  $region27: #{tranad_self_conditioning_forward.1} parent=0 // pred_check_branch
    %45 = sbr.rel (0) target = $region29
  $region28: #{tranad_self_conditioning_forward.1} parent=0 // pred_region
    _
  $region29: #{tranad_self_conditioning_forward.1} parent=0 // pred_fallthru
    _
  // Predicated region
  $region30: #{tranad_self_conditioning_forward.1} parent=0 // pred_check
    _
  $region31: #{tranad_self_conditioning_forward.1} parent=0 // pred_check_branch
    %47 = sbr.rel (0) target = $region33
  $region32: #{tranad_self_conditioning_forward.1} parent=0 // pred_region
    _
  $region33: #{tranad_self_conditioning_forward.1} parent=0 // pred_fallthru
    _
  // Predicated region
  $region34: #{tranad_self_conditioning_forward.1} parent=0 // pred_check
    _
  $region35: #{tranad_self_conditioning_forward.1} parent=0 // pred_check_branch
    %49 = sbr.rel (0) target = $region37
  $region36: #{tranad_self_conditioning_forward.1} parent=0 // pred_region
    _
  $region37: #{tranad_self_conditioning_forward.1} parent=0 // pred_fallthru
    _
  // Predicated region
  $region38: #{tranad_self_conditioning_forward.1} parent=0 // pred_check
    _
  $region39: #{tranad_self_conditioning_forward.1} parent=0 // pred_check_branch
    %51 = sbr.rel (0) target = $region41
  $region40: #{tranad_self_conditioning_forward.1} parent=0 // pred_region
    _
  $region41: #{tranad_self_conditioning_forward.1} parent=0 // pred_fallthru
    _
  // Predicated region
  $region42: #{tranad_self_conditioning_forward.1} parent=0 // pred_check
    _
  $region43: #{tranad_self_conditioning_forward.1} parent=0 // pred_check_branch
    %53 = sbr.rel (0) target = $region45
  $region44: #{tranad_self_conditioning_forward.1} parent=0 // pred_region
    _
  $region45: #{tranad_self_conditioning_forward.1} parent=0 // pred_fallthru
    _
  // Predicated region
  $region46: #{tranad_self_conditioning_forward.1} parent=0 // pred_check
    _
  $region47: #{tranad_self_conditioning_forward.1} parent=0 // pred_check_branch
    %55 = sbr.rel (0) target = $region49
  $region48: #{tranad_self_conditioning_forward.1} parent=0 // pred_region
    _
  $region49: #{tranad_self_conditioning_forward.1} parent=0 // pred_fallthru
    _
  // Predicated region
  $region50: #{tranad_self_conditioning_forward.1} parent=0 // pred_check
    _
  $region51: #{tranad_self_conditioning_forward.1} parent=0 // pred_check_branch
    %57 = sbr.rel (0) target = $region53
  $region52: #{tranad_self_conditioning_forward.1} parent=0 // pred_region
    _
  $region53: #{tranad_self_conditioning_forward.1} parent=0 // pred_fallthru
    _
  // Predicated region
  $region54: #{tranad_self_conditioning_forward.1} parent=0 // pred_check
    _
  $region55: #{tranad_self_conditioning_forward.1} parent=0 // pred_check_branch
    %59 = sbr.rel (0) target = $region57
  $region56: #{tranad_self_conditioning_forward.1} parent=0 // pred_region
    _
  $region57: #{tranad_self_conditioning_forward.1} parent=0 // pred_fallthru
    _
  // Predicated region
  $region58: #{tranad_self_conditioning_forward.1} parent=0 // pred_check
    _
  $region59: #{tranad_self_conditioning_forward.1} parent=0 // pred_check_branch
    %61 = sbr.rel (0) target = $region61
  $region60: #{tranad_self_conditioning_forward.1} parent=0 // pred_region
    _
  $region61: #{tranad_self_conditioning_forward.1} parent=0 // pred_fallthru
    _
  // Predicated region
  $region62: #{tranad_self_conditioning_forward.1} parent=0 // pred_check
    _
  $region63: #{tranad_self_conditioning_forward.1} parent=0 // pred_check_branch
    %63 = sbr.rel (0) target = $region65
  $region64: #{tranad_self_conditioning_forward.1} parent=0 // pred_region
    _
  $region65: #{tranad_self_conditioning_forward.1} parent=0 // pred_fallthru
    _
  // Predicated region
  $region66: #{tranad_self_conditioning_forward.1} parent=0 // pred_check
    _
  $region67: #{tranad_self_conditioning_forward.1} parent=0 // pred_check_branch
    %65 = sbr.rel (0) target = $region69
  $region68: #{tranad_self_conditioning_forward.1} parent=0 // pred_region
    _
  $region69: #{tranad_self_conditioning_forward.1} parent=0 // pred_fallthru
    _
  // Predicated region
  $region70: #{tranad_self_conditioning_forward.1} parent=0 // pred_check
    _
  $region71: #{tranad_self_conditioning_forward.1} parent=0 // pred_check_branch
    %67 = sbr.rel (0) target = $region73
  $region72: #{tranad_self_conditioning_forward.1} parent=0 // pred_region
    _
  $region73: #{tranad_self_conditioning_forward.1} parent=0 // pred_fallthru
    _
  // Predicated region
  $region74: #{tranad_self_conditioning_forward.1} parent=0 // pred_check
    _
  $region75: #{tranad_self_conditioning_forward.1} parent=0 // pred_check_branch
    %69 = sbr.rel (0) target = $region77
  $region76: #{tranad_self_conditioning_forward.1} parent=0 // pred_region
    _
  $region77: #{tranad_self_conditioning_forward.1} parent=0 // pred_fallthru
    _
  // Predicated region
  $region78: #{tranad_self_conditioning_forward.1} parent=0 // pred_check
    _
  $region79: #{tranad_self_conditioning_forward.1} parent=0 // pred_check_branch
    %71 = sbr.rel (0) target = $region81
  $region80: #{tranad_self_conditioning_forward.1} parent=0 // pred_region
    _
  $region81: #{tranad_self_conditioning_forward.1} parent=0 // pred_fallthru
    _
  // Predicated region
  $region82: #{tranad_self_conditioning_forward.1} parent=0 // pred_check
    _
  $region83: #{tranad_self_conditioning_forward.1} parent=0 // pred_check_branch
    %73 = sbr.rel (0) target = $region85
  $region84: #{tranad_self_conditioning_forward.1} parent=0 // pred_region
    _
  $region85: #{tranad_self_conditioning_forward.1} parent=0 // pred_fallthru
    _
  // Predicated region
  $region86: #{tranad_self_conditioning_forward.1} parent=0 // pred_check
    _
  $region87: #{tranad_self_conditioning_forward.1} parent=0 // pred_check_branch
    %75 = sbr.rel (0) target = $region89
  $region88: #{tranad_self_conditioning_forward.1} parent=0 // pred_region
    _
  $region89: #{tranad_self_conditioning_forward.1} parent=0 // pred_fallthru
    _
  // Predicated region
  $region90: #{tranad_self_conditioning_forward.1} parent=0 // pred_check
    _
  $region91: #{tranad_self_conditioning_forward.1} parent=0 // pred_check_branch
    %77 = sbr.rel (0) target = $region93
  $region92: #{tranad_self_conditioning_forward.1} parent=0 // pred_region
    _
  $region93: #{tranad_self_conditioning_forward.1} parent=0 // pred_fallthru
    _
  // Predicated region
  $region94: #{tranad_self_conditioning_forward.1} parent=0 // pred_check
    _
  $region95: #{tranad_self_conditioning_forward.1} parent=0 // pred_check_branch
    %79 = sbr.rel (0) target = $region97
  $region96: #{tranad_self_conditioning_forward.1} parent=0 // pred_region
    _
  $region97: #{tranad_self_conditioning_forward.1} parent=0 // pred_fallthru
    _
  // Predicated region
  $region98: #{tranad_self_conditioning_forward.1} parent=0 // pred_check
    _
  $region99: #{tranad_self_conditioning_forward.1} parent=0 // pred_check_branch
    %81 = sbr.rel (0) target = $region101
  $region100: #{tranad_self_conditioning_forward.1} parent=0 // pred_region
    _
  $region101: #{tranad_self_conditioning_forward.1} parent=0 // pred_fallthru
    _
  // Predicated region
  $region102: #{tranad_self_conditioning_forward.1} parent=0 // pred_check
    _
  $region103: #{tranad_self_conditioning_forward.1} parent=0 // pred_check_branch
    %83 = sbr.rel (0) target = $region105
  $region104: #{tranad_self_conditioning_forward.1} parent=0 // pred_region
    _
  $region105: #{tranad_self_conditioning_forward.1} parent=0 // pred_fallthru
    _
  // Predicated region
  $region106: #{tranad_self_conditioning_forward.1} parent=0 // pred_check
    _
  $region107: #{tranad_self_conditioning_forward.1} parent=0 // pred_check_branch
    %85 = sbr.rel (0) target = $region109
  $region108: #{tranad_self_conditioning_forward.1} parent=0 // pred_region
    _
  $region109: #{tranad_self_conditioning_forward.1} parent=0 // pred_fallthru
    _
  %v86 = vlaneseq
  %v87 = vand.u32 %v86, 127
  %vm88 = vcmp.ge.s32.totalorder %v87, 0
  %vm89 = vcmp.lt.s32.totalorder %v87, 2
  %vm90 = vmand %vm88, %vm89
  %v91 = vsel %vm90, 1, 0
  %v92 = vcvt.s32.f32 %v91
  %vm93 = vcmp.ge.s32.totalorder %v87, 2
  %vm94 = vcmp.lt.s32.totalorder %v87, 4
  %vm95 = vmand %vm93, %vm94
  %v96 = vsel %vm95, 1, 0
  %v97 = vcvt.s32.f32 %v96
  %vm98 = vcmp.ge.s32.totalorder %v87, 4
  %vm99 = vcmp.lt.s32.totalorder %v87, 6
  %vm100 = vmand %vm98, %vm99
  %v101 = vsel %vm100, 1, 0
  %v102 = vcvt.s32.f32 %v101
  %vm103 = vcmp.ge.s32.totalorder %v87, 6
  %vm104 = vcmp.lt.s32.totalorder %v87, 8
  %vm105 = vmand %vm103, %vm104
  %v106 = vsel %vm105, 1, 0
  %v107 = vcvt.s32.f32 %v106
  %v108 = vld [vmem:[%s0] sm:$0xff]
  %v109 = vld [vmem:[%s0 + $0x8] sm:$0xff]
  %v110 = vld [vmem:[%s0 + $0x10] sm:$0xf]
  %v111 = vld [vmem:[%s1] sm:$0x3]
  %v112 = vld [vmem:[%s2] sm:$0xff]
  %v113 = vld [vmem:[%s2 + $0x8] sm:$0xff]
  %v114 = vld [vmem:[%s2 + $0x10] sm:$0xf]
  %v115 = vld [vmem:[%s3] sm:$0x1]
  %v116 = vld [vmem:[%s4] sm:$0x3]
  %v117 = vld [vmem:[%s5] sm:$0xff]
  %v118 = vld [vmem:[%s6] sm:$0x1]
  %v120 = vlaneseq
  %v121 = vshrl.u32 %v120, 7
  %v122 = vsub.s32 0, %v121
  %v123 = vrot.slane %v118, %v122
  %vm125 = vcmask 64512
  %v127 = vsel %vm125, %v108, 0
  %v130 = vsel %vm125, %v109, 0
  %v133 = vsel %vm125, %v110, 0
  %135 = vmatprep.subr.mxu0 0.0
  %136 = vmatpush1.msra.mxu0 %v117
  %137 = vmatprep.subr.mxu0 0.0
  %138 = vmatpush1.msra.mxu0 0.0
  %139 = vmatprep.subr.mxu0 0.0
  %140 = vmatpush1.msra.mxu0 0.0
  %141 = vmatprep.subr.mxu0 0.0
  %142 = vmatpush1.msra.mxu0 0.0
  %143 = vmatprep.subr.mxu0 0.0
  %144 = vmatpush1.msra.mxu0 0.0
  %145 = vmatprep.subr.mxu0 0.0
  %146 = vmatpush1.msra.mxu0 0.0
  %147 = vmatprep.subr.mxu0 0.0
  %148 = vmatpush1.msra.mxu0 0.0
  %149 = vmatprep.subr.mxu0 0.0
  %150 = vmatpush1.msra.mxu0 0.0
  %151 = vmatprep.subr.mxu0 0.0
  %152 = vmatpush1.msra.mxu0 0.0
  %153 = vmatprep.subr.mxu0 0.0
  %154 = vmatpush1.msra.mxu0 0.0
  %155 = vmatprep.subr.mxu0 0.0
  %156 = vmatpush1.msra.mxu0 0.0
  %157 = vmatprep.subr.mxu0 0.0
  %158 = vmatpush1.msra.mxu0 0.0
  %159 = vmatprep.subr.mxu0 0.0
  %160 = vmatpush1.msra.mxu0 0.0
  %161 = vmatprep.subr.mxu0 0.0
  %162 = vmatpush1.msra.mxu0 0.0
  %163 = vmatprep.subr.mxu0 0.0
  %164 = vmatpush1.msra.mxu0 0.0
  %165 = vmatprep.subr.mxu0 0.0
  %166 = vmatpush1.msra.mxu0 0.0
  %167 = vmatprep.subr.mxu0 0.0
  %168 = vmatpush1.msra.mxu0 0.0
  %169 = vmatprep.subr.mxu0 0.0
  %170 = vmatpush1.msra.mxu0 0.0
  %171 = vmatprep.subr.mxu0 0.0
  %172 = vmatpush1.msra.mxu0 0.0
  %173 = vmatprep.subr.mxu0 0.0
  %174 = vmatpush1.msra.mxu0 0.0
  %175 = vmatprep.subr.mxu0 0.0
  %176 = vmatpush1.msra.mxu0 0.0
  %177 = vmatprep.subr.mxu0 0.0
  %178 = vmatpush1.msra.mxu0 0.0
  %179 = vmatprep.subr.mxu0 0.0
  %180 = vmatpush1.msra.mxu0 0.0
  %181 = vmatprep.subr.mxu0 0.0
  %182 = vmatpush1.msra.mxu0 0.0
  %183 = vmatprep.subr.mxu0 0.0
  %184 = vmatpush1.msra.mxu0 0.0
  %185 = vmatprep.subr.mxu0 0.0
  %186 = vmatpush1.msra.mxu0 0.0
  %187 = vmatprep.subr.mxu0 0.0
  %188 = vmatpush1.msra.mxu0 0.0
  %189 = vmatprep.subr.mxu0 0.0
  %190 = vmatpush1.msra.mxu0 0.0
  %191 = vmatprep.subr.mxu0 0.0
  %192 = vmatpush1.msra.mxu0 0.0
  %193 = vmatprep.subr.mxu0 0.0
  %194 = vmatpush1.msra.mxu0 0.0
  %195 = vmatprep.subr.mxu0 0.0
  %196 = vmatpush1.msra.mxu0 0.0
  %197 = vmatprep.subr.mxu0 0.0
  %198 = vmatpush1.msra.mxu0 0.0
  %199 = vmatprep.mubr.f32.mxu0 0.0
  %200 = vmatmul.mubr.f32.gmra.mrb[0].mxu0 %v127
  %v201 = vpop.f32.mrb[0].mxu0
  %v202 = vadd.f32 %v123, %v201
  %v203 = vpop.f32.mrb[0].mxu0
  %204 = vmatprep.mubr.f32.mxu0 0.0
  %205 = vmatmul.mubr.f32.gmra.mrb[0].mxu0 %v130
  %v206 = vpop.f32.mrb[0].mxu0
  %v207 = vadd.f32 %v123, %v206
  %v208 = vpop.f32.mrb[0].mxu0
  %209 = vmatprep.mubr.f32.mxu0 0.0
  %210 = vmatmul.mubr.f32.gmra.mrb[0].mxu0 %v133
  %v211 = vpop.f32.mrb[0].mxu0
  %v212 = vadd.f32 %v123, %v211
  %v213 = vpop.f32.mrb[0].mxu0
  %214 = vdwg.mxu0
  %v215 = vmul.f32 %v202, 0.70710677
  %v216 = vmul.f32 %v207, 0.70710677
  %v217 = vmul.f32 %v212, 0.70710677
  %v218 = vmul.f32 %v215, %v92
  %v219 = vmul.f32 %v216, %v92
  %v220 = vmul.f32 %v217, %v92
  %v221 = vmul.f32 %v215, %v97
  %v222 = vmul.f32 %v216, %v97
  %v223 = vmul.f32 %v217, %v97
  %v224 = vmul.f32 %v215, %v102
  %v225 = vmul.f32 %v216, %v102
  %v226 = vmul.f32 %v217, %v102
  %v227 = vmul.f32 %v215, %v107
  %v228 = vmul.f32 %v216, %v107
  %v229 = vmul.f32 %v217, %v107
  %231 = vset.pattern.permute.xlu0 0
  %232 = vperm.xlu0 %231, %v112
  %v233 = vpop.permute.xlu0 %232
  %236 = vset.pattern.permute.xlu0 0
  %237 = vperm.xlu0 %236, %v113
  %v238 = vpop.permute.xlu0 %237
  %241 = vset.pattern.permute.xlu0 0
  %242 = vperm.xlu0 %241, %v114
  %v243 = vpop.permute.xlu0 %242
  %v246 = vlaneseq
  %v247 = vshrl.u32 %v246, 7
  %v248 = vsub.s32 0, %v247
  %v249 = vrot.slane %v115, %v248
  %vm251 = vcmp.eq.f32.partialorder %v233, %v249
  %vm252 = vcmp.eq.f32.partialorder %v238, %v249
  %vm253 = vcmp.eq.f32.partialorder %v243, %v249
  %v254 = vsel %vm251, 0.0, -1e+09
  %v255 = vsel %vm252, 0.0, -1e+09
  %v256 = vsel %vm253, 0.0, -1e+09
  %260 = vrot.lane.b32.xlu0 %v202, 120
  %v261 = vpop.permute.xlu0 %260
  %262 = vrot.lane.b32.xlu0 %v207, 120
  %v263 = vpop.permute.xlu0 %262
  %264 = vrot.lane.b32.xlu0 %v212, 120
  %v265 = vpop.permute.xlu0 %264
  %v267 = vsel %vm125, %v218, 0
  %v270 = vsel %vm125, %v219, 0
  %v273 = vsel %vm125, %v220, 0
  %v275 = vsel %vm125, %v261, 0
  %v277 = vsel %vm125, %v263, 0
  %v279 = vsel %vm125, %v265, 0
  %281 = vmatprep.subr.mxu0 0.0
  %282 = vmatpush1.xpose.msra.mxu0 %v275
  %283 = vmatprep.subr.mxu0 0.0
  %284 = vmatpush1.xpose.msra.mxu0 %v277
  %285 = vmatprep.subr.mxu0 0.0
  %286 = vmatpush1.xpose.msra.mxu0 %v279
  %287 = vmatprep.subr.mxu0 0.0
  %288 = vmatpush1.xpose.msra.mxu0 0.0
  %289 = vmatprep.subr.mxu0 0.0
  %290 = vmatpush1.xpose.msra.mxu0 0.0
  %291 = vmatprep.subr.mxu0 0.0
  %292 = vmatpush1.xpose.msra.mxu0 0.0
  %293 = vmatprep.subr.mxu0 0.0
  %294 = vmatpush1.xpose.msra.mxu0 0.0
  %295 = vmatprep.subr.mxu0 0.0
  %296 = vmatpush1.xpose.msra.mxu0 0.0
  %297 = vmatprep.subr.mxu0 0.0
  %298 = vmatpush1.xpose.msra.mxu0 0.0
  %299 = vmatprep.subr.mxu0 0.0
  %300 = vmatpush1.xpose.msra.mxu0 0.0
  %301 = vmatprep.subr.mxu0 0.0
  %302 = vmatpush1.xpose.msra.mxu0 0.0
  %303 = vmatprep.subr.mxu0 0.0
  %304 = vmatpush1.xpose.msra.mxu0 0.0
  %305 = vmatprep.subr.mxu0 0.0
  %306 = vmatpush1.xpose.msra.mxu0 0.0
  %307 = vmatprep.subr.mxu0 0.0
  %308 = vmatpush1.xpose.msra.mxu0 0.0
  %309 = vmatprep.subr.mxu0 0.0
  %310 = vmatpush1.xpose.msra.mxu0 0.0
  %311 = vmatprep.subr.mxu0 0.0
  %312 = vmatpush1.xpose.msra.mxu0 0.0
  %313 = vmatprep.subr.mxu0 0.0
  %314 = vmatpush1.xpose.msra.mxu0 0.0
  %315 = vmatprep.subr.mxu0 0.0
  %316 = vmatpush1.xpose.msra.mxu0 0.0
  %317 = vmatprep.subr.mxu0 0.0
  %318 = vmatpush1.xpose.msra.mxu0 0.0
  %319 = vmatprep.subr.mxu0 0.0
  %320 = vmatpush1.xpose.msra.mxu0 0.0
  %321 = vmatprep.subr.mxu0 0.0
  %322 = vmatpush1.xpose.msra.mxu0 0.0
  %323 = vmatprep.subr.mxu0 0.0
  %324 = vmatpush1.xpose.msra.mxu0 0.0
  %325 = vmatprep.subr.mxu0 0.0
  %326 = vmatpush1.xpose.msra.mxu0 0.0
  %327 = vmatprep.subr.mxu0 0.0
  %328 = vmatpush1.xpose.msra.mxu0 0.0
  %329 = vmatprep.subr.mxu0 0.0
  %330 = vmatpush1.xpose.msra.mxu0 0.0
  %331 = vmatprep.subr.mxu0 0.0
  %332 = vmatpush1.xpose.msra.mxu0 0.0
  %333 = vmatprep.subr.mxu0 0.0
  %334 = vmatpush1.xpose.msra.mxu0 0.0
  %335 = vmatprep.subr.mxu0 0.0
  %336 = vmatpush1.xpose.msra.mxu0 0.0
  %337 = vmatprep.subr.mxu0 0.0
  %338 = vmatpush1.xpose.msra.mxu0 0.0
  %339 = vmatprep.subr.mxu0 0.0
  %340 = vmatpush1.xpose.msra.mxu0 0.0
  %341 = vmatprep.subr.mxu0 0.0
  %342 = vmatpush1.xpose.msra.mxu0 0.0
  %343 = vmatprep.subr.mxu0 0.0
  %344 = vmatpush1.xpose.msra.mxu0 0.0
  %345 = vmatprep.mubr.f32.mxu0 0.0
  %346 = vmatmul.mubr.f32.gmra.mrb[0].mxu0 %v267
  %v347 = vpop.f32.mrb[0].mxu0
  %v348 = vadd.f32 %v254, %v347
  %v349 = vpop.f32.mrb[0].mxu0
  %350 = vmatprep.mubr.f32.mxu0 0.0
  %351 = vmatmul.mubr.f32.gmra.mrb[0].mxu0 %v270
  %v352 = vpop.f32.mrb[0].mxu0
  %v353 = vadd.f32 %v255, %v352
  %v354 = vpop.f32.mrb[0].mxu0
  %355 = vmatprep.mubr.f32.mxu0 0.0
  %356 = vmatmul.mubr.f32.gmra.mrb[0].mxu0 %v273
  %v357 = vpop.f32.mrb[0].mxu0
  %v358 = vadd.f32 %v256, %v357
  %v359 = vpop.f32.mrb[0].mxu0
  %360 = vdwg.mxu0
  %v362 = vsel %vm125, %v221, 0
  %v365 = vsel %vm125, %v222, 0
  %v368 = vsel %vm125, %v223, 0
  %370 = vmatprep.subr.mxu0 0.0
  %371 = vmatpush1.xpose.msra.mxu0 %v275
  %372 = vmatprep.subr.mxu0 0.0
  %373 = vmatpush1.xpose.msra.mxu0 %v277
  %374 = vmatprep.subr.mxu0 0.0
  %375 = vmatpush1.xpose.msra.mxu0 %v279
  %376 = vmatprep.subr.mxu0 0.0
  %377 = vmatpush1.xpose.msra.mxu0 0.0
  %378 = vmatprep.subr.mxu0 0.0
  %379 = vmatpush1.xpose.msra.mxu0 0.0
  %380 = vmatprep.subr.mxu0 0.0
  %381 = vmatpush1.xpose.msra.mxu0 0.0
  %382 = vmatprep.subr.mxu0 0.0
  %383 = vmatpush1.xpose.msra.mxu0 0.0
  %384 = vmatprep.subr.mxu0 0.0
  %385 = vmatpush1.xpose.msra.mxu0 0.0
  %386 = vmatprep.subr.mxu0 0.0
  %387 = vmatpush1.xpose.msra.mxu0 0.0
  %388 = vmatprep.subr.mxu0 0.0
  %389 = vmatpush1.xpose.msra.mxu0 0.0
  %390 = vmatprep.subr.mxu0 0.0
  %391 = vmatpush1.xpose.msra.mxu0 0.0
  %392 = vmatprep.subr.mxu0 0.0
  %393 = vmatpush1.xpose.msra.mxu0 0.0
  %394 = vmatprep.subr.mxu0 0.0
  %395 = vmatpush1.xpose.msra.mxu0 0.0
  %396 = vmatprep.subr.mxu0 0.0
  %397 = vmatpush1.xpose.msra.mxu0 0.0
  %398 = vmatprep.subr.mxu0 0.0
  %399 = vmatpush1.xpose.msra.mxu0 0.0
  %400 = vmatprep.subr.mxu0 0.0
  %401 = vmatpush1.xpose.msra.mxu0 0.0
  %402 = vmatprep.subr.mxu0 0.0
  %403 = vmatpush1.xpose.msra.mxu0 0.0
  %404 = vmatprep.subr.mxu0 0.0
  %405 = vmatpush1.xpose.msra.mxu0 0.0
  %406 = vmatprep.subr.mxu0 0.0
  %407 = vmatpush1.xpose.msra.mxu0 0.0
  %408 = vmatprep.subr.mxu0 0.0
  %409 = vmatpush1.xpose.msra.mxu0 0.0
  %410 = vmatprep.subr.mxu0 0.0
  %411 = vmatpush1.xpose.msra.mxu0 0.0
  %412 = vmatprep.subr.mxu0 0.0
  %413 = vmatpush1.xpose.msra.mxu0 0.0
  %414 = vmatprep.subr.mxu0 0.0
  %415 = vmatpush1.xpose.msra.mxu0 0.0
  %416 = vmatprep.subr.mxu0 0.0
  %417 = vmatpush1.xpose.msra.mxu0 0.0
  %418 = vmatprep.subr.mxu0 0.0
  %419 = vmatpush1.xpose.msra.mxu0 0.0
  %420 = vmatprep.subr.mxu0 0.0
  %421 = vmatpush1.xpose.msra.mxu0 0.0
  %422 = vmatprep.subr.mxu0 0.0
  %423 = vmatpush1.xpose.msra.mxu0 0.0
  %424 = vmatprep.subr.mxu0 0.0
  %425 = vmatpush1.xpose.msra.mxu0 0.0
  %426 = vmatprep.subr.mxu0 0.0
  %427 = vmatpush1.xpose.msra.mxu0 0.0
  %428 = vmatprep.subr.mxu0 0.0
  %429 = vmatpush1.xpose.msra.mxu0 0.0
  %430 = vmatprep.subr.mxu0 0.0
  %431 = vmatpush1.xpose.msra.mxu0 0.0
  %432 = vmatprep.subr.mxu0 0.0
  %433 = vmatpush1.xpose.msra.mxu0 0.0
  %434 = vmatprep.mubr.f32.mxu0 0.0
  %435 = vmatmul.mubr.f32.gmra.mrb[0].mxu0 %v362
  %v436 = vpop.f32.mrb[0].mxu0
  %v437 = vadd.f32 %v254, %v436
  %v438 = vpop.f32.mrb[0].mxu0
  %439 = vmatprep.mubr.f32.mxu0 0.0
  %440 = vmatmul.mubr.f32.gmra.mrb[0].mxu0 %v365
  %v441 = vpop.f32.mrb[0].mxu0
  %v442 = vadd.f32 %v255, %v441
  %v443 = vpop.f32.mrb[0].mxu0
  %444 = vmatprep.mubr.f32.mxu0 0.0
  %445 = vmatmul.mubr.f32.gmra.mrb[0].mxu0 %v368
  %v446 = vpop.f32.mrb[0].mxu0
  %v447 = vadd.f32 %v256, %v446
  %v448 = vpop.f32.mrb[0].mxu0
  %449 = vdwg.mxu0
  %v451 = vsel %vm125, %v224, 0
  %v454 = vsel %vm125, %v225, 0
  %v457 = vsel %vm125, %v226, 0
  %459 = vmatprep.subr.mxu0 0.0
  %460 = vmatpush1.xpose.msra.mxu0 %v275
  %461 = vmatprep.subr.mxu0 0.0
  %462 = vmatpush1.xpose.msra.mxu0 %v277
  %463 = vmatprep.subr.mxu0 0.0
  %464 = vmatpush1.xpose.msra.mxu0 %v279
  %465 = vmatprep.subr.mxu0 0.0
  %466 = vmatpush1.xpose.msra.mxu0 0.0
  %467 = vmatprep.subr.mxu0 0.0
  %468 = vmatpush1.xpose.msra.mxu0 0.0
  %469 = vmatprep.subr.mxu0 0.0
  %470 = vmatpush1.xpose.msra.mxu0 0.0
  %471 = vmatprep.subr.mxu0 0.0
  %472 = vmatpush1.xpose.msra.mxu0 0.0
  %473 = vmatprep.subr.mxu0 0.0
  %474 = vmatpush1.xpose.msra.mxu0 0.0
  %475 = vmatprep.subr.mxu0 0.0
  %476 = vmatpush1.xpose.msra.mxu0 0.0
  %477 = vmatprep.subr.mxu0 0.0
  %478 = vmatpush1.xpose.msra.mxu0 0.0
  %479 = vmatprep.subr.mxu0 0.0
  %480 = vmatpush1.xpose.msra.mxu0 0.0
  %481 = vmatprep.subr.mxu0 0.0
  %482 = vmatpush1.xpose.msra.mxu0 0.0
  %483 = vmatprep.subr.mxu0 0.0
  %484 = vmatpush1.xpose.msra.mxu0 0.0
  %485 = vmatprep.subr.mxu0 0.0
  %486 = vmatpush1.xpose.msra.mxu0 0.0
  %487 = vmatprep.subr.mxu0 0.0
  %488 = vmatpush1.xpose.msra.mxu0 0.0
  %489 = vmatprep.subr.mxu0 0.0
  %490 = vmatpush1.xpose.msra.mxu0 0.0
  %491 = vmatprep.subr.mxu0 0.0
  %492 = vmatpush1.xpose.msra.mxu0 0.0
  %493 = vmatprep.subr.mxu0 0.0
  %494 = vmatpush1.xpose.msra.mxu0 0.0
  %495 = vmatprep.subr.mxu0 0.0
  %496 = vmatpush1.xpose.msra.mxu0 0.0
  %497 = vmatprep.subr.mxu0 0.0
  %498 = vmatpush1.xpose.msra.mxu0 0.0
  %499 = vmatprep.subr.mxu0 0.0
  %500 = vmatpush1.xpose.msra.mxu0 0.0
  %501 = vmatprep.subr.mxu0 0.0
  %502 = vmatpush1.xpose.msra.mxu0 0.0
  %503 = vmatprep.subr.mxu0 0.0
  %504 = vmatpush1.xpose.msra.mxu0 0.0
  %505 = vmatprep.subr.mxu0 0.0
  %506 = vmatpush1.xpose.msra.mxu0 0.0
  %507 = vmatprep.subr.mxu0 0.0
  %508 = vmatpush1.xpose.msra.mxu0 0.0
  %509 = vmatprep.subr.mxu0 0.0
  %510 = vmatpush1.xpose.msra.mxu0 0.0
  %511 = vmatprep.subr.mxu0 0.0
  %512 = vmatpush1.xpose.msra.mxu0 0.0
  %513 = vmatprep.subr.mxu0 0.0
  %514 = vmatpush1.xpose.msra.mxu0 0.0
  %515 = vmatprep.subr.mxu0 0.0
  %516 = vmatpush1.xpose.msra.mxu0 0.0
  %517 = vmatprep.subr.mxu0 0.0
  %518 = vmatpush1.xpose.msra.mxu0 0.0
  %519 = vmatprep.subr.mxu0 0.0
  %520 = vmatpush1.xpose.msra.mxu0 0.0
  %521 = vmatprep.subr.mxu0 0.0
  %522 = vmatpush1.xpose.msra.mxu0 0.0
  %523 = vmatprep.mubr.f32.mxu0 0.0
  %524 = vmatmul.mubr.f32.gmra.mrb[0].mxu0 %v451
  %v525 = vpop.f32.mrb[0].mxu0
  %v526 = vadd.f32 %v254, %v525
  %v527 = vpop.f32.mrb[0].mxu0
  %528 = vmatprep.mubr.f32.mxu0 0.0
  %529 = vmatmul.mubr.f32.gmra.mrb[0].mxu0 %v454
  %v530 = vpop.f32.mrb[0].mxu0
  %v531 = vadd.f32 %v255, %v530
  %v532 = vpop.f32.mrb[0].mxu0
  %533 = vmatprep.mubr.f32.mxu0 0.0
  %534 = vmatmul.mubr.f32.gmra.mrb[0].mxu0 %v457
  %v535 = vpop.f32.mrb[0].mxu0
  %v536 = vadd.f32 %v256, %v535
  %v537 = vpop.f32.mrb[0].mxu0
  %538 = vdwg.mxu0
  %v540 = vsel %vm125, %v227, 0
  %v543 = vsel %vm125, %v228, 0
  %v546 = vsel %vm125, %v229, 0
  %548 = vmatprep.subr.mxu0 0.0
  %549 = vmatpush1.xpose.msra.mxu0 %v275
  %550 = vmatprep.subr.mxu0 0.0
  %551 = vmatpush1.xpose.msra.mxu0 %v277
  %552 = vmatprep.subr.mxu0 0.0
  %553 = vmatpush1.xpose.msra.mxu0 %v279
  %554 = vmatprep.subr.mxu0 0.0
  %555 = vmatpush1.xpose.msra.mxu0 0.0
  %556 = vmatprep.subr.mxu0 0.0
  %557 = vmatpush1.xpose.msra.mxu0 0.0
  %558 = vmatprep.subr.mxu0 0.0
  %559 = vmatpush1.xpose.msra.mxu0 0.0
  %560 = vmatprep.subr.mxu0 0.0
  %561 = vmatpush1.xpose.msra.mxu0 0.0
  %562 = vmatprep.subr.mxu0 0.0
  %563 = vmatpush1.xpose.msra.mxu0 0.0
  %564 = vmatprep.subr.mxu0 0.0
  %565 = vmatpush1.xpose.msra.mxu0 0.0
  %566 = vmatprep.subr.mxu0 0.0
  %567 = vmatpush1.xpose.msra.mxu0 0.0
  %568 = vmatprep.subr.mxu0 0.0
  %569 = vmatpush1.xpose.msra.mxu0 0.0
  %570 = vmatprep.subr.mxu0 0.0
  %571 = vmatpush1.xpose.msra.mxu0 0.0
  %572 = vmatprep.subr.mxu0 0.0
  %573 = vmatpush1.xpose.msra.mxu0 0.0
  %574 = vmatprep.subr.mxu0 0.0
  %575 = vmatpush1.xpose.msra.mxu0 0.0
  %576 = vmatprep.subr.mxu0 0.0
  %577 = vmatpush1.xpose.msra.mxu0 0.0
  %578 = vmatprep.subr.mxu0 0.0
  %579 = vmatpush1.xpose.msra.mxu0 0.0
  %580 = vmatprep.subr.mxu0 0.0
  %581 = vmatpush1.xpose.msra.mxu0 0.0
  %582 = vmatprep.subr.mxu0 0.0
  %583 = vmatpush1.xpose.msra.mxu0 0.0
  %584 = vmatprep.subr.mxu0 0.0
  %585 = vmatpush1.xpose.msra.mxu0 0.0
  %586 = vmatprep.subr.mxu0 0.0
  %587 = vmatpush1.xpose.msra.mxu0 0.0
  %588 = vmatprep.subr.mxu0 0.0
  %589 = vmatpush1.xpose.msra.mxu0 0.0
  %590 = vmatprep.subr.mxu0 0.0
  %591 = vmatpush1.xpose.msra.mxu0 0.0
  %592 = vmatprep.subr.mxu0 0.0
  %593 = vmatpush1.xpose.msra.mxu0 0.0
  %594 = vmatprep.subr.mxu0 0.0
  %595 = vmatpush1.xpose.msra.mxu0 0.0
  %596 = vmatprep.subr.mxu0 0.0
  %597 = vmatpush1.xpose.msra.mxu0 0.0
  %598 = vmatprep.subr.mxu0 0.0
  %599 = vmatpush1.xpose.msra.mxu0 0.0
  %600 = vmatprep.subr.mxu0 0.0
  %601 = vmatpush1.xpose.msra.mxu0 0.0
  %602 = vmatprep.subr.mxu0 0.0
  %603 = vmatpush1.xpose.msra.mxu0 0.0
  %604 = vmatprep.subr.mxu0 0.0
  %605 = vmatpush1.xpose.msra.mxu0 0.0
  %606 = vmatprep.subr.mxu0 0.0
  %607 = vmatpush1.xpose.msra.mxu0 0.0
  %608 = vmatprep.subr.mxu0 0.0
  %609 = vmatpush1.xpose.msra.mxu0 0.0
  %610 = vmatprep.subr.mxu0 0.0
  %611 = vmatpush1.xpose.msra.mxu0 0.0
  %612 = vmatprep.mubr.f32.mxu0 0.0
  %613 = vmatmul.mubr.f32.gmra.mrb[0].mxu0 %v540
  %v614 = vpop.f32.mrb[0].mxu0
  %v615 = vadd.f32 %v254, %v614
  %v616 = vpop.f32.mrb[0].mxu0
  %617 = vmatprep.mubr.f32.mxu0 0.0
  %618 = vmatmul.mubr.f32.gmra.mrb[0].mxu0 %v543
  %v619 = vpop.f32.mrb[0].mxu0
  %v620 = vadd.f32 %v255, %v619
  %v621 = vpop.f32.mrb[0].mxu0
  %622 = vmatprep.mubr.f32.mxu0 0.0
  %623 = vmatmul.mubr.f32.gmra.mrb[0].mxu0 %v546
  %v624 = vpop.f32.mrb[0].mxu0
  %v625 = vadd.f32 %v256, %v624
  %v626 = vpop.f32.mrb[0].mxu0
  %627 = vdwg.mxu0
  %vm628 = vcmask 162816
  %v629 = vsel %vm628, %v348, -inf
  %630 = vmax.xlane.f32.xlu0 %v629
  %v631 = vpop.xlane.xlu0 %630
  %v632 = vsel %vm628, %v353, -inf
  %633 = vmax.xlane.f32.xlu0 %v632
  %v634 = vpop.xlane.xlu0 %633
  %vm635 = vcmask 158720
  %v636 = vsel %vm635, %v358, -inf
  %637 = vmax.xlane.f32.xlu0 %v636
  %v638 = vpop.xlane.xlu0 %637
  %v639 = vsel %vm628, %v437, -inf
  %640 = vmax.xlane.f32.xlu0 %v639
  %v641 = vpop.xlane.xlu0 %640
  %v642 = vsel %vm628, %v442, -inf
  %643 = vmax.xlane.f32.xlu0 %v642
  %v644 = vpop.xlane.xlu0 %643
  %v645 = vsel %vm635, %v447, -inf
  %646 = vmax.xlane.f32.xlu0 %v645
  %v647 = vpop.xlane.xlu0 %646
  %v648 = vsel %vm628, %v526, -inf
  %649 = vmax.xlane.f32.xlu0 %v648
  %v650 = vpop.xlane.xlu0 %649
  %v651 = vsel %vm628, %v531, -inf
  %652 = vmax.xlane.f32.xlu0 %v651
  %v653 = vpop.xlane.xlu0 %652
  %v654 = vsel %vm635, %v536, -inf
  %655 = vmax.xlane.f32.xlu0 %v654
  %v656 = vpop.xlane.xlu0 %655
  %v657 = vsel %vm628, %v615, -inf
  %658 = vmax.xlane.f32.xlu0 %v657
  %v659 = vpop.xlane.xlu0 %658
  %v660 = vsel %vm628, %v620, -inf
  %661 = vmax.xlane.f32.xlu0 %v660
  %v662 = vpop.xlane.xlu0 %661
  %v663 = vsel %vm635, %v625, -inf
  %664 = vmax.xlane.f32.xlu0 %v663
  %v665 = vpop.xlane.xlu0 %664
  %v666 = vsub.f32 %v348, %v631
  %v667 = vsub.f32 %v353, %v634
  %v668 = vsub.f32 %v358, %v638
  %v669 = vsub.f32 %v437, %v641
  %v670 = vsub.f32 %v442, %v644
  %v671 = vsub.f32 %v447, %v647
  %v672 = vsub.f32 %v526, %v650
  %v673 = vsub.f32 %v531, %v653
  %v674 = vsub.f32 %v536, %v656
  %v675 = vsub.f32 %v615, %v659
  %v676 = vsub.f32 %v620, %v662
  %v677 = vsub.f32 %v625, %v665
  %v678 = vmul.f32 %v666, 1.442695
  %v679 = vpow.pop %v678
  %v680 = vmul.f32 %v667, 1.442695
  %v681 = vpow.pop %v680
  %v682 = vmul.f32 %v668, 1.442695
  %v683 = vpow.pop %v682
  %v684 = vmul.f32 %v669, 1.442695
  %v685 = vpow.pop %v684
  %v686 = vmul.f32 %v670, 1.442695
  %v687 = vpow.pop %v686
  %v688 = vmul.f32 %v671, 1.442695
  %v689 = vpow.pop %v688
  %v690 = vmul.f32 %v672, 1.442695
  %v691 = vpow.pop %v690
  %v692 = vmul.f32 %v673, 1.442695
  %v693 = vpow.pop %v692
  %v694 = vmul.f32 %v674, 1.442695
  %v695 = vpow.pop %v694
  %v696 = vmul.f32 %v675, 1.442695
  %v697 = vpow.pop %v696
  %v698 = vmul.f32 %v676, 1.442695
  %v699 = vpow.pop %v698
  %v700 = vmul.f32 %v677, 1.442695
  %v701 = vpow.pop %v700
  %v702 = vsel %vm628, %v679, 0.0
  %703 = vadd.xlane.f32.xlu0 %v702
  %v704 = vpop.xlane.xlu0 %703
  %v705 = vsel %vm628, %v681, 0.0
  %706 = vadd.xlane.f32.xlu0 %v705
  %v707 = vpop.xlane.xlu0 %706
  %v708 = vsel %vm635, %v683, 0.0
  %709 = vadd.xlane.f32.xlu0 %v708
  %v710 = vpop.xlane.xlu0 %709
  %v711 = vsel %vm628, %v685, 0.0
  %712 = vadd.xlane.f32.xlu0 %v711
  %v713 = vpop.xlane.xlu0 %712
  %v714 = vsel %vm628, %v687, 0.0
  %715 = vadd.xlane.f32.xlu0 %v714
  %v716 = vpop.xlane.xlu0 %715
  %v717 = vsel %vm635, %v689, 0.0
  %718 = vadd.xlane.f32.xlu0 %v717
  %v719 = vpop.xlane.xlu0 %718
  %v720 = vsel %vm628, %v691, 0.0
  %721 = vadd.xlane.f32.xlu0 %v720
  %v722 = vpop.xlane.xlu0 %721
  %v723 = vsel %vm628, %v693, 0.0
  %724 = vadd.xlane.f32.xlu0 %v723
  %v725 = vpop.xlane.xlu0 %724
  %v726 = vsel %vm635, %v695, 0.0
  %727 = vadd.xlane.f32.xlu0 %v726
  %v728 = vpop.xlane.xlu0 %727
  %v729 = vsel %vm628, %v697, 0.0
  %730 = vadd.xlane.f32.xlu0 %v729
  %v731 = vpop.xlane.xlu0 %730
  %v732 = vsel %vm628, %v699, 0.0
  %733 = vadd.xlane.f32.xlu0 %v732
  %v734 = vpop.xlane.xlu0 %733
  %v735 = vsel %vm635, %v701, 0.0
  %736 = vadd.xlane.f32.xlu0 %v735
  %v737 = vpop.xlane.xlu0 %736
  %v738 = vrcp.pop %v704
  %v739 = vrcp.pop %v707
  %v740 = vrcp.pop %v710
  %v741 = vrcp.pop %v713
  %v742 = vrcp.pop %v716
  %v743 = vrcp.pop %v719
  %v744 = vrcp.pop %v722
  %v745 = vrcp.pop %v725
  %v746 = vrcp.pop %v728
  %v747 = vrcp.pop %v731
  %v748 = vrcp.pop %v734
  %v749 = vrcp.pop %v737
  %v750 = vmul.f32 %v679, %v738
  %v751 = vmul.f32 %v681, %v739
  %v752 = vmul.f32 %v683, %v740
  %v753 = vmul.f32 %v685, %v741
  %v754 = vmul.f32 %v687, %v742
  %v755 = vmul.f32 %v689, %v743
  %v756 = vmul.f32 %v691, %v744
  %v757 = vmul.f32 %v693, %v745
  %v758 = vmul.f32 %v695, %v746
  %v759 = vmul.f32 %v697, %v747
  %v760 = vmul.f32 %v699, %v748
  %v761 = vmul.f32 %v701, %v749
  %762 = vrot.lane.b32.xlu0 %v202, 112
  %v763 = vpop.permute.xlu0 %762
  %764 = vrot.lane.b32.xlu0 %v207, 112
  %v765 = vpop.permute.xlu0 %764
  %766 = vrot.lane.b32.xlu0 %v212, 112
  %v767 = vpop.permute.xlu0 %766
  %v771 = vsel %vm628, %v750, 0
  %v774 = vsel %vm628, %v751, 0
  %v777 = vsel %vm628, %v752, 0
  %vm779 = vcmask 1043456
  %v780 = vsel %vm779, %v767, 0
  %782 = vmatprep.subr.mxu0 0.0
  %783 = vmatpush1.msra.mxu0 %v763
  %784 = vmatprep.subr.mxu0 0.0
  %785 = vmatpush1.msra.mxu0 %v765
  %786 = vmatprep.subr.mxu0 0.0
  %787 = vmatpush1.msra.mxu0 %v780
  %788 = vmatprep.subr.mxu0 0.0
  %789 = vmatpush1.msra.mxu0 0.0
  %790 = vmatprep.subr.mxu0 0.0
  %791 = vmatpush1.msra.mxu0 0.0
  %792 = vmatprep.subr.mxu0 0.0
  %793 = vmatpush1.msra.mxu0 0.0
  %794 = vmatprep.subr.mxu0 0.0
  %795 = vmatpush1.msra.mxu0 0.0
  %796 = vmatprep.subr.mxu0 0.0
  %797 = vmatpush1.msra.mxu0 0.0
  %798 = vmatprep.subr.mxu0 0.0
  %799 = vmatpush1.msra.mxu0 0.0
  %800 = vmatprep.subr.mxu0 0.0
  %801 = vmatpush1.msra.mxu0 0.0
  %802 = vmatprep.subr.mxu0 0.0
  %803 = vmatpush1.msra.mxu0 0.0
  %804 = vmatprep.subr.mxu0 0.0
  %805 = vmatpush1.msra.mxu0 0.0
  %806 = vmatprep.subr.mxu0 0.0
  %807 = vmatpush1.msra.mxu0 0.0
  %808 = vmatprep.subr.mxu0 0.0
  %809 = vmatpush1.msra.mxu0 0.0
  %810 = vmatprep.subr.mxu0 0.0
  %811 = vmatpush1.msra.mxu0 0.0
  %812 = vmatprep.subr.mxu0 0.0
  %813 = vmatpush1.msra.mxu0 0.0
  %814 = vmatprep.subr.mxu0 0.0
  %815 = vmatpush1.msra.mxu0 0.0
  %816 = vmatprep.subr.mxu0 0.0
  %817 = vmatpush1.msra.mxu0 0.0
  %818 = vmatprep.subr.mxu0 0.0
  %819 = vmatpush1.msra.mxu0 0.0
  %820 = vmatprep.subr.mxu0 0.0
  %821 = vmatpush1.msra.mxu0 0.0
  %822 = vmatprep.subr.mxu0 0.0
  %823 = vmatpush1.msra.mxu0 0.0
  %824 = vmatprep.subr.mxu0 0.0
  %825 = vmatpush1.msra.mxu0 0.0
  %826 = vmatprep.subr.mxu0 0.0
  %827 = vmatpush1.msra.mxu0 0.0
  %828 = vmatprep.subr.mxu0 0.0
  %829 = vmatpush1.msra.mxu0 0.0
  %830 = vmatprep.subr.mxu0 0.0
  %831 = vmatpush1.msra.mxu0 0.0
  %832 = vmatprep.subr.mxu0 0.0
  %833 = vmatpush1.msra.mxu0 0.0
  %834 = vmatprep.subr.mxu0 0.0
  %835 = vmatpush1.msra.mxu0 0.0
  %836 = vmatprep.subr.mxu0 0.0
  %837 = vmatpush1.msra.mxu0 0.0
  %838 = vmatprep.subr.mxu0 0.0
  %839 = vmatpush1.msra.mxu0 0.0
  %840 = vmatprep.subr.mxu0 0.0
  %841 = vmatpush1.msra.mxu0 0.0
  %842 = vmatprep.subr.mxu0 0.0
  %843 = vmatpush1.msra.mxu0 0.0
  %844 = vmatprep.subr.mxu0 0.0
  %845 = vmatpush1.msra.mxu0 0.0
  %846 = vmatprep.mubr.f32.mxu0 0.0
  %847 = vmatmul.mubr.f32.gmra.mrb[0].mxu0 %v771
  %v848 = vpop.f32.mrb[0].mxu0
  %v849 = vadd.f32 0.0, %v848
  %v850 = vpop.f32.mrb[0].mxu0
  %851 = vmatprep.mubr.f32.mxu0 0.0
  %852 = vmatmul.mubr.f32.gmra.mrb[0].mxu0 %v774
  %v853 = vpop.f32.mrb[0].mxu0
  %v854 = vadd.f32 0.0, %v853
  %v855 = vpop.f32.mrb[0].mxu0
  %856 = vmatprep.mubr.f32.mxu0 0.0
  %857 = vmatmul.mubr.f32.gmra.mrb[0].mxu0 %v777
  %v858 = vpop.f32.mrb[0].mxu0
  %v859 = vadd.f32 0.0, %v858
  %v860 = vpop.f32.mrb[0].mxu0
  %861 = vdwg.mxu0
  %v863 = vsel %vm628, %v753, 0
  %v866 = vsel %vm628, %v754, 0
  %v869 = vsel %vm628, %v755, 0
  %871 = vmatprep.subr.mxu0 0.0
  %872 = vmatpush1.msra.mxu0 %v763
  %873 = vmatprep.subr.mxu0 0.0
  %874 = vmatpush1.msra.mxu0 %v765
  %875 = vmatprep.subr.mxu0 0.0
  %876 = vmatpush1.msra.mxu0 %v780
  %877 = vmatprep.subr.mxu0 0.0
  %878 = vmatpush1.msra.mxu0 0.0
  %879 = vmatprep.subr.mxu0 0.0
  %880 = vmatpush1.msra.mxu0 0.0
  %881 = vmatprep.subr.mxu0 0.0
  %882 = vmatpush1.msra.mxu0 0.0
  %883 = vmatprep.subr.mxu0 0.0
  %884 = vmatpush1.msra.mxu0 0.0
  %885 = vmatprep.subr.mxu0 0.0
  %886 = vmatpush1.msra.mxu0 0.0
  %887 = vmatprep.subr.mxu0 0.0
  %888 = vmatpush1.msra.mxu0 0.0
  %889 = vmatprep.subr.mxu0 0.0
  %890 = vmatpush1.msra.mxu0 0.0
  %891 = vmatprep.subr.mxu0 0.0
  %892 = vmatpush1.msra.mxu0 0.0
  %893 = vmatprep.subr.mxu0 0.0
  %894 = vmatpush1.msra.mxu0 0.0
  %895 = vmatprep.subr.mxu0 0.0
  %896 = vmatpush1.msra.mxu0 0.0
  %897 = vmatprep.subr.mxu0 0.0
  %898 = vmatpush1.msra.mxu0 0.0
  %899 = vmatprep.subr.mxu0 0.0
  %900 = vmatpush1.msra.mxu0 0.0
  %901 = vmatprep.subr.mxu0 0.0
  %902 = vmatpush1.msra.mxu0 0.0
  %903 = vmatprep.subr.mxu0 0.0
  %904 = vmatpush1.msra.mxu0 0.0
  %905 = vmatprep.subr.mxu0 0.0
  %906 = vmatpush1.msra.mxu0 0.0
  %907 = vmatprep.subr.mxu0 0.0
  %908 = vmatpush1.msra.mxu0 0.0
  %909 = vmatprep.subr.mxu0 0.0
  %910 = vmatpush1.msra.mxu0 0.0
  %911 = vmatprep.subr.mxu0 0.0
  %912 = vmatpush1.msra.mxu0 0.0
  %913 = vmatprep.subr.mxu0 0.0
  %914 = vmatpush1.msra.mxu0 0.0
  %915 = vmatprep.subr.mxu0 0.0
  %916 = vmatpush1.msra.mxu0 0.0
  %917 = vmatprep.subr.mxu0 0.0
  %918 = vmatpush1.msra.mxu0 0.0
  %919 = vmatprep.subr.mxu0 0.0
  %920 = vmatpush1.msra.mxu0 0.0
  %921 = vmatprep.subr.mxu0 0.0
  %922 = vmatpush1.msra.mxu0 0.0
  %923 = vmatprep.subr.mxu0 0.0
  %924 = vmatpush1.msra.mxu0 0.0
  %925 = vmatprep.subr.mxu0 0.0
  %926 = vmatpush1.msra.mxu0 0.0
  %927 = vmatprep.subr.mxu0 0.0
  %928 = vmatpush1.msra.mxu0 0.0
  %929 = vmatprep.subr.mxu0 0.0
  %930 = vmatpush1.msra.mxu0 0.0
  %931 = vmatprep.subr.mxu0 0.0
  %932 = vmatpush1.msra.mxu0 0.0
  %933 = vmatprep.subr.mxu0 0.0
  %934 = vmatpush1.msra.mxu0 0.0
  %935 = vmatprep.mubr.f32.mxu0 0.0
  %936 = vmatmul.mubr.f32.gmra.mrb[0].mxu0 %v863
  %v937 = vpop.f32.mrb[0].mxu0
  %v938 = vadd.f32 0.0, %v937
  %v939 = vpop.f32.mrb[0].mxu0
  %940 = vmatprep.mubr.f32.mxu0 0.0
  %941 = vmatmul.mubr.f32.gmra.mrb[0].mxu0 %v866
  %v942 = vpop.f32.mrb[0].mxu0
  %v943 = vadd.f32 0.0, %v942
  %v944 = vpop.f32.mrb[0].mxu0
  %945 = vmatprep.mubr.f32.mxu0 0.0
  %946 = vmatmul.mubr.f32.gmra.mrb[0].mxu0 %v869
  %v947 = vpop.f32.mrb[0].mxu0
  %v948 = vadd.f32 0.0, %v947
  %v949 = vpop.f32.mrb[0].mxu0
  %950 = vdwg.mxu0
  %v952 = vsel %vm628, %v756, 0
  %v955 = vsel %vm628, %v757, 0
  %v958 = vsel %vm628, %v758, 0
  %960 = vmatprep.subr.mxu0 0.0
  %961 = vmatpush1.msra.mxu0 %v763
  %962 = vmatprep.subr.mxu0 0.0
  %963 = vmatpush1.msra.mxu0 %v765
  %964 = vmatprep.subr.mxu0 0.0
  %965 = vmatpush1.msra.mxu0 %v780
  %966 = vmatprep.subr.mxu0 0.0
  %967 = vmatpush1.msra.mxu0 0.0
  %968 = vmatprep.subr.mxu0 0.0
  %969 = vmatpush1.msra.mxu0 0.0
  %970 = vmatprep.subr.mxu0 0.0
  %971 = vmatpush1.msra.mxu0 0.0
  %972 = vmatprep.subr.mxu0 0.0
  %973 = vmatpush1.msra.mxu0 0.0
  %974 = vmatprep.subr.mxu0 0.0
  %975 = vmatpush1.msra.mxu0 0.0
  %976 = vmatprep.subr.mxu0 0.0
  %977 = vmatpush1.msra.mxu0 0.0
  %978 = vmatprep.subr.mxu0 0.0
  %979 = vmatpush1.msra.mxu0 0.0
  %980 = vmatprep.subr.mxu0 0.0
  %981 = vmatpush1.msra.mxu0 0.0
  %982 = vmatprep.subr.mxu0 0.0
  %983 = vmatpush1.msra.mxu0 0.0
  %984 = vmatprep.subr.mxu0 0.0
  %985 = vmatpush1.msra.mxu0 0.0
  %986 = vmatprep.subr.mxu0 0.0
  %987 = vmatpush1.msra.mxu0 0.0
  %988 = vmatprep.subr.mxu0 0.0
  %989 = vmatpush1.msra.mxu0 0.0
  %990 = vmatprep.subr.mxu0 0.0
  %991 = vmatpush1.msra.mxu0 0.0
  %992 = vmatprep.subr.mxu0 0.0
  %993 = vmatpush1.msra.mxu0 0.0
  %994 = vmatprep.subr.mxu0 0.0
  %995 = vmatpush1.msra.mxu0 0.0
  %996 = vmatprep.subr.mxu0 0.0
  %997 = vmatpush1.msra.mxu0 0.0
  %998 = vmatprep.subr.mxu0 0.0
  %999 = vmatpush1.msra.mxu0 0.0
  %1000 = vmatprep.subr.mxu0 0.0
  %1001 = vmatpush1.msra.mxu0 0.0
  %1002 = vmatprep.subr.mxu0 0.0
  %1003 = vmatpush1.msra.mxu0 0.0
  %1004 = vmatprep.subr.mxu0 0.0
  %1005 = vmatpush1.msra.mxu0 0.0
  %1006 = vmatprep.subr.mxu0 0.0
  %1007 = vmatpush1.msra.mxu0 0.0
  %1008 = vmatprep.subr.mxu0 0.0
  %1009 = vmatpush1.msra.mxu0 0.0
  %1010 = vmatprep.subr.mxu0 0.0
  %1011 = vmatpush1.msra.mxu0 0.0
  %1012 = vmatprep.subr.mxu0 0.0
  %1013 = vmatpush1.msra.mxu0 0.0
  %1014 = vmatprep.subr.mxu0 0.0
  %1015 = vmatpush1.msra.mxu0 0.0
  %1016 = vmatprep.subr.mxu0 0.0
  %1017 = vmatpush1.msra.mxu0 0.0
  %1018 = vmatprep.subr.mxu0 0.0
  %1019 = vmatpush1.msra.mxu0 0.0
  %1020 = vmatprep.subr.mxu0 0.0
  %1021 = vmatpush1.msra.mxu0 0.0
  %1022 = vmatprep.subr.mxu0 0.0
  %1023 = vmatpush1.msra.mxu0 0.0
  %1024 = vmatprep.mubr.f32.mxu0 0.0
  %1025 = vmatmul.mubr.f32.gmra.mrb[0].mxu0 %v952
  %v1026 = vpop.f32.mrb[0].mxu0
  %v1027 = vadd.f32 0.0, %v1026
  %v1028 = vpop.f32.mrb[0].mxu0
  %1029 = vmatprep.mubr.f32.mxu0 0.0
  %1030 = vmatmul.mubr.f32.gmra.mrb[0].mxu0 %v955
  %v1031 = vpop.f32.mrb[0].mxu0
  %v1032 = vadd.f32 0.0, %v1031
  %v1033 = vpop.f32.mrb[0].mxu0
  %1034 = vmatprep.mubr.f32.mxu0 0.0
  %1035 = vmatmul.mubr.f32.gmra.mrb[0].mxu0 %v958
  %v1036 = vpop.f32.mrb[0].mxu0
  %v1037 = vadd.f32 0.0, %v1036
  %v1038 = vpop.f32.mrb[0].mxu0
  %1039 = vdwg.mxu0
  %v1041 = vsel %vm628, %v759, 0
  %v1044 = vsel %vm628, %v760, 0
  %v1047 = vsel %vm628, %v761, 0
  %1049 = vmatprep.subr.mxu0 0.0
  %1050 = vmatpush1.msra.mxu0 %v763
  %1051 = vmatprep.subr.mxu0 0.0
  %1052 = vmatpush1.msra.mxu0 %v765
  %1053 = vmatprep.subr.mxu0 0.0
  %1054 = vmatpush1.msra.mxu0 %v780
  %1055 = vmatprep.subr.mxu0 0.0
  %1056 = vmatpush1.msra.mxu0 0.0
  %1057 = vmatprep.subr.mxu0 0.0
  %1058 = vmatpush1.msra.mxu0 0.0
  %1059 = vmatprep.subr.mxu0 0.0
  %1060 = vmatpush1.msra.mxu0 0.0
  %1061 = vmatprep.subr.mxu0 0.0
  %1062 = vmatpush1.msra.mxu0 0.0
  %1063 = vmatprep.subr.mxu0 0.0
  %1064 = vmatpush1.msra.mxu0 0.0
  %1065 = vmatprep.subr.mxu0 0.0
  %1066 = vmatpush1.msra.mxu0 0.0
  %1067 = vmatprep.subr.mxu0 0.0
  %1068 = vmatpush1.msra.mxu0 0.0
  %1069 = vmatprep.subr.mxu0 0.0
  %1070 = vmatpush1.msra.mxu0 0.0
  %1071 = vmatprep.subr.mxu0 0.0
  %1072 = vmatpush1.msra.mxu0 0.0
  %1073 = vmatprep.subr.mxu0 0.0
  %1074 = vmatpush1.msra.mxu0 0.0
  %1075 = vmatprep.subr.mxu0 0.0
  %1076 = vmatpush1.msra.mxu0 0.0
  %1077 = vmatprep.subr.mxu0 0.0
  %1078 = vmatpush1.msra.mxu0 0.0
  %1079 = vmatprep.subr.mxu0 0.0
  %1080 = vmatpush1.msra.mxu0 0.0
  %1081 = vmatprep.subr.mxu0 0.0
  %1082 = vmatpush1.msra.mxu0 0.0
  %1083 = vmatprep.subr.mxu0 0.0
  %1084 = vmatpush1.msra.mxu0 0.0
  %1085 = vmatprep.subr.mxu0 0.0
  %1086 = vmatpush1.msra.mxu0 0.0
  %1087 = vmatprep.subr.mxu0 0.0
  %1088 = vmatpush1.msra.mxu0 0.0
  %1089 = vmatprep.subr.mxu0 0.0
  %1090 = vmatpush1.msra.mxu0 0.0
  %1091 = vmatprep.subr.mxu0 0.0
  %1092 = vmatpush1.msra.mxu0 0.0
  %1093 = vmatprep.subr.mxu0 0.0
  %1094 = vmatpush1.msra.mxu0 0.0
  %1095 = vmatprep.subr.mxu0 0.0
  %1096 = vmatpush1.msra.mxu0 0.0
  %1097 = vmatprep.subr.mxu0 0.0
  %1098 = vmatpush1.msra.mxu0 0.0
  %1099 = vmatprep.subr.mxu0 0.0
  %1100 = vmatpush1.msra.mxu0 0.0
  %1101 = vmatprep.subr.mxu0 0.0
  %1102 = vmatpush1.msra.mxu0 0.0
  %1103 = vmatprep.subr.mxu0 0.0
  %1104 = vmatpush1.msra.mxu0 0.0
  %1105 = vmatprep.subr.mxu0 0.0
  %1106 = vmatpush1.msra.mxu0 0.0
  %1107 = vmatprep.subr.mxu0 0.0
  %1108 = vmatpush1.msra.mxu0 0.0
  %1109 = vmatprep.subr.mxu0 0.0
  %1110 = vmatpush1.msra.mxu0 0.0
  %1111 = vmatprep.subr.mxu0 0.0
  %1112 = vmatpush1.msra.mxu0 0.0
  %1113 = vmatprep.mubr.f32.mxu0 0.0
  %1114 = vmatmul.mubr.f32.gmra.mrb[0].mxu0 %v1041
  %v1115 = vpop.f32.mrb[0].mxu0
  %v1116 = vadd.f32 0.0, %v1115
  %v1117 = vpop.f32.mrb[0].mxu0
  %1118 = vmatprep.mubr.f32.mxu0 0.0
  %1119 = vmatmul.mubr.f32.gmra.mrb[0].mxu0 %v1044
  %v1120 = vpop.f32.mrb[0].mxu0
  %v1121 = vadd.f32 0.0, %v1120
  %v1122 = vpop.f32.mrb[0].mxu0
  %1123 = vmatprep.mubr.f32.mxu0 0.0
  %1124 = vmatmul.mubr.f32.gmra.mrb[0].mxu0 %v1047
  %v1125 = vpop.f32.mrb[0].mxu0
  %v1126 = vadd.f32 0.0, %v1125
  %v1127 = vpop.f32.mrb[0].mxu0
  %1128 = vdwg.mxu0
  %v1129 = vmul.f32 %v849, %v92
  %v1130 = vmul.f32 %v854, %v92
  %v1131 = vmul.f32 %v859, %v92
  %v1132 = vmul.f32 %v938, %v97
  %v1133 = vmul.f32 %v943, %v97
  %v1134 = vmul.f32 %v948, %v97
  %v1135 = vadd.f32 %v1129, %v1132
  %v1136 = vadd.f32 %v1130, %v1133
  %v1137 = vadd.f32 %v1131, %v1134
  %v1138 = vmul.f32 %v1027, %v102
  %v1139 = vmul.f32 %v1032, %v102
  %v1140 = vmul.f32 %v1037, %v102
  %v1141 = vadd.f32 %v1135, %v1138
  %v1142 = vadd.f32 %v1136, %v1139
  %v1143 = vadd.f32 %v1137, %v1140
  %v1144 = vmul.f32 %v1116, %v107
  %v1145 = vmul.f32 %v1121, %v107
  %v1146 = vmul.f32 %v1126, %v107
  %v1147 = vadd.f32 %v1141, %v1144
  %v1148 = vadd.f32 %v1142, %v1145
  %v1149 = vadd.f32 %v1143, %v1146
  %v1150 = vld [vmem:[%s7] sm:$0xff]
  %v1152 = vsel %vm125, %v1147, 0
  %v1155 = vsel %vm125, %v1148, 0
  %v1158 = vsel %vm125, %v1149, 0
  %1160 = vmatprep.subr.mxu0 0.0
  %1161 = vmatpush1.msra.mxu0 %v1150
  %1162 = vmatprep.subr.mxu0 0.0
  %1163 = vmatpush1.msra.mxu0 0.0
  %1164 = vmatprep.subr.mxu0 0.0
  %1165 = vmatpush1.msra.mxu0 0.0
  %1166 = vmatprep.subr.mxu0 0.0
  %1167 = vmatpush1.msra.mxu0 0.0
  %1168 = vmatprep.subr.mxu0 0.0
  %1169 = vmatpush1.msra.mxu0 0.0
  %1170 = vmatprep.subr.mxu0 0.0
  %1171 = vmatpush1.msra.mxu0 0.0
  %1172 = vmatprep.subr.mxu0 0.0
  %1173 = vmatpush1.msra.mxu0 0.0
  %1174 = vmatprep.subr.mxu0 0.0
  %1175 = vmatpush1.msra.mxu0 0.0
  %1176 = vmatprep.subr.mxu0 0.0
  %1177 = vmatpush1.msra.mxu0 0.0
  %1178 = vmatprep.subr.mxu0 0.0
  %1179 = vmatpush1.msra.mxu0 0.0
  %1180 = vmatprep.subr.mxu0 0.0
  %1181 = vmatpush1.msra.mxu0 0.0
  %1182 = vmatprep.subr.mxu0 0.0
  %1183 = vmatpush1.msra.mxu0 0.0
  %1184 = vmatprep.subr.mxu0 0.0
  %1185 = vmatpush1.msra.mxu0 0.0
  %1186 = vmatprep.subr.mxu0 0.0
  %1187 = vmatpush1.msra.mxu0 0.0
  %1188 = vmatprep.subr.mxu0 0.0
  %1189 = vmatpush1.msra.mxu0 0.0
  %1190 = vmatprep.subr.mxu0 0.0
  %1191 = vmatpush1.msra.mxu0 0.0
  %1192 = vmatprep.subr.mxu0 0.0
  %1193 = vmatpush1.msra.mxu0 0.0
  %1194 = vmatprep.subr.mxu0 0.0
  %1195 = vmatpush1.msra.mxu0 0.0
  %1196 = vmatprep.subr.mxu0 0.0
  %1197 = vmatpush1.msra.mxu0 0.0
  %1198 = vmatprep.subr.mxu0 0.0
  %1199 = vmatpush1.msra.mxu0 0.0
  %1200 = vmatprep.subr.mxu0 0.0
  %1201 = vmatpush1.msra.mxu0 0.0
  %1202 = vmatprep.subr.mxu0 0.0
  %1203 = vmatpush1.msra.mxu0 0.0
  %1204 = vmatprep.subr.mxu0 0.0
  %1205 = vmatpush1.msra.mxu0 0.0
  %1206 = vmatprep.subr.mxu0 0.0
  %1207 = vmatpush1.msra.mxu0 0.0
  %1208 = vmatprep.subr.mxu0 0.0
  %1209 = vmatpush1.msra.mxu0 0.0
  %1210 = vmatprep.subr.mxu0 0.0
  %1211 = vmatpush1.msra.mxu0 0.0
  %1212 = vmatprep.subr.mxu0 0.0
  %1213 = vmatpush1.msra.mxu0 0.0
  %1214 = vmatprep.subr.mxu0 0.0
  %1215 = vmatpush1.msra.mxu0 0.0
  %1216 = vmatprep.subr.mxu0 0.0
  %1217 = vmatpush1.msra.mxu0 0.0
  %1218 = vmatprep.subr.mxu0 0.0
  %1219 = vmatpush1.msra.mxu0 0.0
  %1220 = vmatprep.subr.mxu0 0.0
  %1221 = vmatpush1.msra.mxu0 0.0
  %1222 = vmatprep.subr.mxu0 0.0
  %1223 = vmatpush1.msra.mxu0 0.0
  %1224 = vmatprep.mubr.f32.mxu0 0.0
  %1225 = vmatmul.mubr.f32.gmra.mrb[0].mxu0 %v1152
  %v1226 = vpop.f32.mrb[0].mxu0
  %v1227 = vadd.f32 0.0, %v1226
  %v1228 = vpop.f32.mrb[0].mxu0
  %1229 = vmatprep.mubr.f32.mxu0 0.0
  %1230 = vmatmul.mubr.f32.gmra.mrb[0].mxu0 %v1155
  %v1231 = vpop.f32.mrb[0].mxu0
  %v1232 = vadd.f32 0.0, %v1231
  %v1233 = vpop.f32.mrb[0].mxu0
  %1234 = vmatprep.mubr.f32.mxu0 0.0
  %1235 = vmatmul.mubr.f32.gmra.mrb[0].mxu0 %v1158
  %v1236 = vpop.f32.mrb[0].mxu0
  %v1237 = vadd.f32 0.0, %v1236
  %v1238 = vpop.f32.mrb[0].mxu0
  %1239 = vdwg.mxu0
  %v1240 = vadd.f32 %v108, %v1227
  %v1241 = vadd.f32 %v109, %v1232
  %v1242 = vadd.f32 %v110, %v1237
  %v1243 = vld [vmem:[%s8] sm:$0x1]
  %v1245 = vlaneseq
  %v1246 = vshrl.u32 %v1245, 7
  %v1247 = vsub.s32 0, %v1246
  %v1248 = vrot.slane %v1243, %v1247
  %v1250 = vadd.f32 %v1240, %v1248
  %v1251 = vadd.f32 %v1241, %v1248
  %v1252 = vadd.f32 %v1242, %v1248
  %v1253 = vld [vmem:[%s9] sm:$0xff]
  %v1254 = vld [vmem:[%s10] sm:$0x1]
  %v1256 = vlaneseq
  %v1257 = vshrl.u32 %v1256, 7
  %v1258 = vsub.s32 0, %v1257
  %v1259 = vrot.slane %v1254, %v1258
  %v1262 = vsel %vm125, %v1250, 0
  %v1265 = vsel %vm125, %v1251, 0
  %v1268 = vsel %vm125, %v1252, 0
  %1270 = vmatprep.subr.mxu0 0.0
  %1271 = vmatpush1.msra.mxu0 %v1253
  %1272 = vmatprep.subr.mxu0 0.0
  %1273 = vmatpush1.msra.mxu0 0.0
  %1274 = vmatprep.subr.mxu0 0.0
  %1275 = vmatpush1.msra.mxu0 0.0
  %1276 = vmatprep.subr.mxu0 0.0
  %1277 = vmatpush1.msra.mxu0 0.0
  %1278 = vmatprep.subr.mxu0 0.0
  %1279 = vmatpush1.msra.mxu0 0.0
  %1280 = vmatprep.subr.mxu0 0.0
  %1281 = vmatpush1.msra.mxu0 0.0
  %1282 = vmatprep.subr.mxu0 0.0
  %1283 = vmatpush1.msra.mxu0 0.0
  %1284 = vmatprep.subr.mxu0 0.0
  %1285 = vmatpush1.msra.mxu0 0.0
  %1286 = vmatprep.subr.mxu0 0.0
  %1287 = vmatpush1.msra.mxu0 0.0
  %1288 = vmatprep.subr.mxu0 0.0
  %1289 = vmatpush1.msra.mxu0 0.0
  %1290 = vmatprep.subr.mxu0 0.0
  %1291 = vmatpush1.msra.mxu0 0.0
  %1292 = vmatprep.subr.mxu0 0.0
  %1293 = vmatpush1.msra.mxu0 0.0
  %1294 = vmatprep.subr.mxu0 0.0
  %1295 = vmatpush1.msra.mxu0 0.0
  %1296 = vmatprep.subr.mxu0 0.0
  %1297 = vmatpush1.msra.mxu0 0.0
  %1298 = vmatprep.subr.mxu0 0.0
  %1299 = vmatpush1.msra.mxu0 0.0
  %1300 = vmatprep.subr.mxu0 0.0
  %1301 = vmatpush1.msra.mxu0 0.0
  %1302 = vmatprep.subr.mxu0 0.0
  %1303 = vmatpush1.msra.mxu0 0.0
  %1304 = vmatprep.subr.mxu0 0.0
  %1305 = vmatpush1.msra.mxu0 0.0
  %1306 = vmatprep.subr.mxu0 0.0
  %1307 = vmatpush1.msra.mxu0 0.0
  %1308 = vmatprep.subr.mxu0 0.0
  %1309 = vmatpush1.msra.mxu0 0.0
  %1310 = vmatprep.subr.mxu0 0.0
  %1311 = vmatpush1.msra.mxu0 0.0
  %1312 = vmatprep.subr.mxu0 0.0
  %1313 = vmatpush1.msra.mxu0 0.0
  %1314 = vmatprep.subr.mxu0 0.0
  %1315 = vmatpush1.msra.mxu0 0.0
  %1316 = vmatprep.subr.mxu0 0.0
  %1317 = vmatpush1.msra.mxu0 0.0
  %1318 = vmatprep.subr.mxu0 0.0
  %1319 = vmatpush1.msra.mxu0 0.0
  %1320 = vmatprep.subr.mxu0 0.0
  %1321 = vmatpush1.msra.mxu0 0.0
  %1322 = vmatprep.subr.mxu0 0.0
  %1323 = vmatpush1.msra.mxu0 0.0
  %1324 = vmatprep.subr.mxu0 0.0
  %1325 = vmatpush1.msra.mxu0 0.0
  %1326 = vmatprep.subr.mxu0 0.0
  %1327 = vmatpush1.msra.mxu0 0.0
  %1328 = vmatprep.subr.mxu0 0.0
  %1329 = vmatpush1.msra.mxu0 0.0
  %1330 = vmatprep.subr.mxu0 0.0
  %1331 = vmatpush1.msra.mxu0 0.0
  %1332 = vmatprep.subr.mxu0 0.0
  %1333 = vmatpush1.msra.mxu0 0.0
  %1334 = vmatprep.mubr.f32.mxu0 0.0
  %1335 = vmatmul.mubr.f32.gmra.mrb[0].mxu0 %v1262
  %v1336 = vpop.f32.mrb[0].mxu0
  %v1337 = vadd.f32 %v1259, %v1336
  %v1338 = vpop.f32.mrb[0].mxu0
  %1339 = vmatprep.mubr.f32.mxu0 0.0
  %1340 = vmatmul.mubr.f32.gmra.mrb[0].mxu0 %v1265
  %v1341 = vpop.f32.mrb[0].mxu0
  %v1342 = vadd.f32 %v1259, %v1341
  %v1343 = vpop.f32.mrb[0].mxu0
  %1344 = vmatprep.mubr.f32.mxu0 0.0
  %1345 = vmatmul.mubr.f32.gmra.mrb[0].mxu0 %v1268
  %v1346 = vpop.f32.mrb[0].mxu0
  %v1347 = vadd.f32 %v1259, %v1346
  %v1348 = vpop.f32.mrb[0].mxu0
  %1349 = vdwg.mxu0
  %v1350 = vld [vmem:[%s11] sm:$0xff]
  %v1351 = vld [vmem:[%s11 + $0x8] sm:$0xff]
  %vm1352 = vcmask 130048
  %v1354 = vsel %vm1352, %v1337, 0
  %v1357 = vsel %vm1352, %v1342, 0
  %v1360 = vsel %vm1352, %v1347, 0
  %1362 = vmatprep.subr.mxu0 0.0
  %1363 = vmatpush1.msra.mxu0 %v1350
  %1364 = vmatprep.subr.mxu0 0.0
  %1365 = vmatpush1.msra.mxu0 %v1351
  %1366 = vmatprep.subr.mxu0 0.0
  %1367 = vmatpush1.msra.mxu0 0.0
  %1368 = vmatprep.subr.mxu0 0.0
  %1369 = vmatpush1.msra.mxu0 0.0
  %1370 = vmatprep.subr.mxu0 0.0
  %1371 = vmatpush1.msra.mxu0 0.0
  %1372 = vmatprep.subr.mxu0 0.0
  %1373 = vmatpush1.msra.mxu0 0.0
  %1374 = vmatprep.subr.mxu0 0.0
  %1375 = vmatpush1.msra.mxu0 0.0
  %1376 = vmatprep.subr.mxu0 0.0
  %1377 = vmatpush1.msra.mxu0 0.0
  %1378 = vmatprep.subr.mxu0 0.0
  %1379 = vmatpush1.msra.mxu0 0.0
  %1380 = vmatprep.subr.mxu0 0.0
  %1381 = vmatpush1.msra.mxu0 0.0
  %1382 = vmatprep.subr.mxu0 0.0
  %1383 = vmatpush1.msra.mxu0 0.0
  %1384 = vmatprep.subr.mxu0 0.0
  %1385 = vmatpush1.msra.mxu0 0.0
  %1386 = vmatprep.subr.mxu0 0.0
  %1387 = vmatpush1.msra.mxu0 0.0
  %1388 = vmatprep.subr.mxu0 0.0
  %1389 = vmatpush1.msra.mxu0 0.0
  %1390 = vmatprep.subr.mxu0 0.0
  %1391 = vmatpush1.msra.mxu0 0.0
  %1392 = vmatprep.subr.mxu0 0.0
  %1393 = vmatpush1.msra.mxu0 0.0
  %1394 = vmatprep.subr.mxu0 0.0
  %1395 = vmatpush1.msra.mxu0 0.0
  %1396 = vmatprep.subr.mxu0 0.0
  %1397 = vmatpush1.msra.mxu0 0.0
  %1398 = vmatprep.subr.mxu0 0.0
  %1399 = vmatpush1.msra.mxu0 0.0
  %1400 = vmatprep.subr.mxu0 0.0
  %1401 = vmatpush1.msra.mxu0 0.0
  %1402 = vmatprep.subr.mxu0 0.0
  %1403 = vmatpush1.msra.mxu0 0.0
  %1404 = vmatprep.subr.mxu0 0.0
  %1405 = vmatpush1.msra.mxu0 0.0
  %1406 = vmatprep.subr.mxu0 0.0
  %1407 = vmatpush1.msra.mxu0 0.0
  %1408 = vmatprep.subr.mxu0 0.0
  %1409 = vmatpush1.msra.mxu0 0.0
  %1410 = vmatprep.subr.mxu0 0.0
  %1411 = vmatpush1.msra.mxu0 0.0
  %1412 = vmatprep.subr.mxu0 0.0
  %1413 = vmatpush1.msra.mxu0 0.0
  %1414 = vmatprep.subr.mxu0 0.0
  %1415 = vmatpush1.msra.mxu0 0.0
  %1416 = vmatprep.subr.mxu0 0.0
  %1417 = vmatpush1.msra.mxu0 0.0
  %1418 = vmatprep.subr.mxu0 0.0
  %1419 = vmatpush1.msra.mxu0 0.0
  %1420 = vmatprep.subr.mxu0 0.0
  %1421 = vmatpush1.msra.mxu0 0.0
  %1422 = vmatprep.subr.mxu0 0.0
  %1423 = vmatpush1.msra.mxu0 0.0
  %1424 = vmatprep.subr.mxu0 0.0
  %1425 = vmatpush1.msra.mxu0 0.0
  %1426 = vmatprep.mubr.f32.mxu0 0.0
  %1427 = vmatmul.mubr.f32.gmra.mrb[0].mxu0 %v1354
  %v1428 = vpop.f32.mrb[0].mxu0
  %v1429 = vadd.f32 0.0, %v1428
  %v1430 = vpop.f32.mrb[0].mxu0
  %1431 = vmatprep.mubr.f32.mxu0 0.0
  %1432 = vmatmul.mubr.f32.gmra.mrb[0].mxu0 %v1357
  %v1433 = vpop.f32.mrb[0].mxu0
  %v1434 = vadd.f32 0.0, %v1433
  %v1435 = vpop.f32.mrb[0].mxu0
  %1436 = vmatprep.mubr.f32.mxu0 0.0
  %1437 = vmatmul.mubr.f32.gmra.mrb[0].mxu0 %v1360
  %v1438 = vpop.f32.mrb[0].mxu0
  %v1439 = vadd.f32 0.0, %v1438
  %v1440 = vpop.f32.mrb[0].mxu0
  %1441 = vdwg.mxu0
  %v1442 = vadd.f32 %v1250, %v1429
  %v1443 = vadd.f32 %v1251, %v1434
  %v1444 = vadd.f32 %v1252, %v1439
  %v1445 = vld [vmem:[%s12] sm:$0x1]
  %v1447 = vlaneseq
  %v1448 = vshrl.u32 %v1447, 7
  %v1449 = vsub.s32 0, %v1448
  %v1450 = vrot.slane %v1445, %v1449
  %v1452 = vadd.f32 %v1442, %v1450
  %v1453 = vadd.f32 %v1443, %v1450
  %v1454 = vadd.f32 %v1444, %v1450
  %v1455 = vld [vmem:[%s15] sm:$0xff]
  %v1456 = vld [vmem:[%s16] sm:$0x1]
  %v1458 = vlaneseq
  %v1459 = vshrl.u32 %v1458, 7
  %v1460 = vsub.s32 0, %v1459
  %v1461 = vrot.slane %v1456, %v1460
  %v1464 = vsel %vm125, %v1452, 0
  %v1467 = vsel %vm125, %v1453, 0
  %v1470 = vsel %vm125, %v1454, 0
  %1472 = vmatprep.subr.mxu0 0.0
  %1473 = vmatpush1.msra.mxu0 %v1455
  %1474 = vmatprep.subr.mxu0 0.0
  %1475 = vmatpush1.msra.mxu0 0.0
  %1476 = vmatprep.subr.mxu0 0.0
  %1477 = vmatpush1.msra.mxu0 0.0
  %1478 = vmatprep.subr.mxu0 0.0
  %1479 = vmatpush1.msra.mxu0 0.0
  %1480 = vmatprep.subr.mxu0 0.0
  %1481 = vmatpush1.msra.mxu0 0.0
  %1482 = vmatprep.subr.mxu0 0.0
  %1483 = vmatpush1.msra.mxu0 0.0
  %1484 = vmatprep.subr.mxu0 0.0
  %1485 = vmatpush1.msra.mxu0 0.0
  %1486 = vmatprep.subr.mxu0 0.0
  %1487 = vmatpush1.msra.mxu0 0.0
  %1488 = vmatprep.subr.mxu0 0.0
  %1489 = vmatpush1.msra.mxu0 0.0
  %1490 = vmatprep.subr.mxu0 0.0
  %1491 = vmatpush1.msra.mxu0 0.0
  %1492 = vmatprep.subr.mxu0 0.0
  %1493 = vmatpush1.msra.mxu0 0.0
  %1494 = vmatprep.subr.mxu0 0.0
  %1495 = vmatpush1.msra.mxu0 0.0
  %1496 = vmatprep.subr.mxu0 0.0
  %1497 = vmatpush1.msra.mxu0 0.0
  %1498 = vmatprep.subr.mxu0 0.0
  %1499 = vmatpush1.msra.mxu0 0.0
  %1500 = vmatprep.subr.mxu0 0.0
  %1501 = vmatpush1.msra.mxu0 0.0
  %1502 = vmatprep.subr.mxu0 0.0
  %1503 = vmatpush1.msra.mxu0 0.0
  %1504 = vmatprep.subr.mxu0 0.0
  %1505 = vmatpush1.msra.mxu0 0.0
  %1506 = vmatprep.subr.mxu0 0.0
  %1507 = vmatpush1.msra.mxu0 0.0
  %1508 = vmatprep.subr.mxu0 0.0
  %1509 = vmatpush1.msra.mxu0 0.0
  %1510 = vmatprep.subr.mxu0 0.0
  %1511 = vmatpush1.msra.mxu0 0.0
  %1512 = vmatprep.subr.mxu0 0.0
  %1513 = vmatpush1.msra.mxu0 0.0
  %1514 = vmatprep.subr.mxu0 0.0
  %1515 = vmatpush1.msra.mxu0 0.0
  %1516 = vmatprep.subr.mxu0 0.0
  %1517 = vmatpush1.msra.mxu0 0.0
  %1518 = vmatprep.subr.mxu0 0.0
  %1519 = vmatpush1.msra.mxu0 0.0
  %1520 = vmatprep.subr.mxu0 0.0
  %1521 = vmatpush1.msra.mxu0 0.0
  %1522 = vmatprep.subr.mxu0 0.0
  %1523 = vmatpush1.msra.mxu0 0.0
  %1524 = vmatprep.subr.mxu0 0.0
  %1525 = vmatpush1.msra.mxu0 0.0
  %1526 = vmatprep.subr.mxu0 0.0
  %1527 = vmatpush1.msra.mxu0 0.0
  %1528 = vmatprep.subr.mxu0 0.0
  %1529 = vmatpush1.msra.mxu0 0.0
  %1530 = vmatprep.subr.mxu0 0.0
  %1531 = vmatpush1.msra.mxu0 0.0
  %1532 = vmatprep.subr.mxu0 0.0
  %1533 = vmatpush1.msra.mxu0 0.0
  %1534 = vmatprep.subr.mxu0 0.0
  %1535 = vmatpush1.msra.mxu0 0.0
  %1536 = vmatprep.mubr.f32.mxu0 0.0
  %1537 = vmatmul.mubr.f32.gmra.mrb[0].mxu0 %v1464
  %v1538 = vpop.f32.mrb[0].mxu0
  %v1539 = vadd.f32 %v1461, %v1538
  %v1540 = vpop.f32.mrb[0].mxu0
  %1541 = vmatprep.mubr.f32.mxu0 0.0
  %1542 = vmatmul.mubr.f32.gmra.mrb[0].mxu0 %v1467
  %v1543 = vpop.f32.mrb[0].mxu0
  %v1544 = vadd.f32 %v1461, %v1543
  %v1545 = vpop.f32.mrb[0].mxu0
  %1546 = vmatprep.mubr.f32.mxu0 0.0
  %1547 = vmatmul.mubr.f32.gmra.mrb[0].mxu0 %v1470
  %v1548 = vpop.f32.mrb[0].mxu0
  %v1549 = vadd.f32 %v1461, %v1548
  %v1550 = vpop.f32.mrb[0].mxu0
  %1551 = vdwg.mxu0
  %v1552 = vld [vmem:[%s13] sm:$0xff]
  %v1553 = vld [vmem:[%s14] sm:$0x1]
  %v1555 = vlaneseq
  %v1556 = vshrl.u32 %v1555, 7
  %v1557 = vsub.s32 0, %v1556
  %v1558 = vrot.slane %v1553, %v1557
  %v1561 = vsel %vm125, %v111, 0
  %1563 = vmatprep.subr.mxu0 0.0
  %1564 = vmatpush1.msra.mxu0 %v1552
  %1565 = vmatprep.subr.mxu0 0.0
  %1566 = vmatpush1.msra.mxu0 0.0
  %1567 = vmatprep.subr.mxu0 0.0
  %1568 = vmatpush1.msra.mxu0 0.0
  %1569 = vmatprep.subr.mxu0 0.0
  %1570 = vmatpush1.msra.mxu0 0.0
  %1571 = vmatprep.subr.mxu0 0.0
  %1572 = vmatpush1.msra.mxu0 0.0
  %1573 = vmatprep.subr.mxu0 0.0
  %1574 = vmatpush1.msra.mxu0 0.0
  %1575 = vmatprep.subr.mxu0 0.0
  %1576 = vmatpush1.msra.mxu0 0.0
  %1577 = vmatprep.subr.mxu0 0.0
  %1578 = vmatpush1.msra.mxu0 0.0
  %1579 = vmatprep.subr.mxu0 0.0
  %1580 = vmatpush1.msra.mxu0 0.0
  %1581 = vmatprep.subr.mxu0 0.0
  %1582 = vmatpush1.msra.mxu0 0.0
  %1583 = vmatprep.subr.mxu0 0.0
  %1584 = vmatpush1.msra.mxu0 0.0
  %1585 = vmatprep.subr.mxu0 0.0
  %1586 = vmatpush1.msra.mxu0 0.0
  %1587 = vmatprep.subr.mxu0 0.0
  %1588 = vmatpush1.msra.mxu0 0.0
  %1589 = vmatprep.subr.mxu0 0.0
  %1590 = vmatpush1.msra.mxu0 0.0
  %1591 = vmatprep.subr.mxu0 0.0
  %1592 = vmatpush1.msra.mxu0 0.0
  %1593 = vmatprep.subr.mxu0 0.0
  %1594 = vmatpush1.msra.mxu0 0.0
  %1595 = vmatprep.subr.mxu0 0.0
  %1596 = vmatpush1.msra.mxu0 0.0
  %1597 = vmatprep.subr.mxu0 0.0
  %1598 = vmatpush1.msra.mxu0 0.0
  %1599 = vmatprep.subr.mxu0 0.0
  %1600 = vmatpush1.msra.mxu0 0.0
  %1601 = vmatprep.subr.mxu0 0.0
  %1602 = vmatpush1.msra.mxu0 0.0
  %1603 = vmatprep.subr.mxu0 0.0
  %1604 = vmatpush1.msra.mxu0 0.0
  %1605 = vmatprep.subr.mxu0 0.0
  %1606 = vmatpush1.msra.mxu0 0.0
  %1607 = vmatprep.subr.mxu0 0.0
  %1608 = vmatpush1.msra.mxu0 0.0
  %1609 = vmatprep.subr.mxu0 0.0
  %1610 = vmatpush1.msra.mxu0 0.0
  %1611 = vmatprep.subr.mxu0 0.0
  %1612 = vmatpush1.msra.mxu0 0.0
  %1613 = vmatprep.subr.mxu0 0.0
  %1614 = vmatpush1.msra.mxu0 0.0
  %1615 = vmatprep.subr.mxu0 0.0
  %1616 = vmatpush1.msra.mxu0 0.0
  %1617 = vmatprep.subr.mxu0 0.0
  %1618 = vmatpush1.msra.mxu0 0.0
  %1619 = vmatprep.subr.mxu0 0.0
  %1620 = vmatpush1.msra.mxu0 0.0
  %1621 = vmatprep.subr.mxu0 0.0
  %1622 = vmatpush1.msra.mxu0 0.0
  %1623 = vmatprep.subr.mxu0 0.0
  %1624 = vmatpush1.msra.mxu0 0.0
  %1625 = vmatprep.subr.mxu0 0.0
  %1626 = vmatpush1.msra.mxu0 0.0
  %1627 = vmatprep.mubr.f32.mxu0 0.0
  %1628 = vmatmul.mubr.f32.gmra.mrb[0].mxu0 %v1561
  %v1629 = vpop.f32.mrb[0].mxu0
  %v1630 = vadd.f32 %v1558, %v1629
  %v1631 = vpop.f32.mrb[0].mxu0
  %1632 = vdwg.mxu0
  %v1633 = vadd.f32 %v111, %v1630
  %v1634 = vld [vmem:[%s17] sm:$0xff]
  %v1635 = vld [vmem:[%s18] sm:$0x1]
  %v1637 = vlaneseq
  %v1638 = vshrl.u32 %v1637, 7
  %v1639 = vsub.s32 0, %v1638
  %v1640 = vrot.slane %v1635, %v1639
  %v1643 = vsel %vm125, %v1633, 0
  %1645 = vmatprep.subr.mxu0 0.0
  %1646 = vmatpush1.msra.mxu0 %v1634
  %1647 = vmatprep.subr.mxu0 0.0
  %1648 = vmatpush1.msra.mxu0 0.0
  %1649 = vmatprep.subr.mxu0 0.0
  %1650 = vmatpush1.msra.mxu0 0.0
  %1651 = vmatprep.subr.mxu0 0.0
  %1652 = vmatpush1.msra.mxu0 0.0
  %1653 = vmatprep.subr.mxu0 0.0
  %1654 = vmatpush1.msra.mxu0 0.0
  %1655 = vmatprep.subr.mxu0 0.0
  %1656 = vmatpush1.msra.mxu0 0.0
  %1657 = vmatprep.subr.mxu0 0.0
  %1658 = vmatpush1.msra.mxu0 0.0
  %1659 = vmatprep.subr.mxu0 0.0
  %1660 = vmatpush1.msra.mxu0 0.0
  %1661 = vmatprep.subr.mxu0 0.0
  %1662 = vmatpush1.msra.mxu0 0.0
  %1663 = vmatprep.subr.mxu0 0.0
  %1664 = vmatpush1.msra.mxu0 0.0
  %1665 = vmatprep.subr.mxu0 0.0
  %1666 = vmatpush1.msra.mxu0 0.0
  %1667 = vmatprep.subr.mxu0 0.0
  %1668 = vmatpush1.msra.mxu0 0.0
  %1669 = vmatprep.subr.mxu0 0.0
  %1670 = vmatpush1.msra.mxu0 0.0
  %1671 = vmatprep.subr.mxu0 0.0
  %1672 = vmatpush1.msra.mxu0 0.0
  %1673 = vmatprep.subr.mxu0 0.0
  %1674 = vmatpush1.msra.mxu0 0.0
  %1675 = vmatprep.subr.mxu0 0.0
  %1676 = vmatpush1.msra.mxu0 0.0
  %1677 = vmatprep.subr.mxu0 0.0
  %1678 = vmatpush1.msra.mxu0 0.0
  %1679 = vmatprep.subr.mxu0 0.0
  %1680 = vmatpush1.msra.mxu0 0.0
  %1681 = vmatprep.subr.mxu0 0.0
  %1682 = vmatpush1.msra.mxu0 0.0
  %1683 = vmatprep.subr.mxu0 0.0
  %1684 = vmatpush1.msra.mxu0 0.0
  %1685 = vmatprep.subr.mxu0 0.0
  %1686 = vmatpush1.msra.mxu0 0.0
  %1687 = vmatprep.subr.mxu0 0.0
  %1688 = vmatpush1.msra.mxu0 0.0
  %1689 = vmatprep.subr.mxu0 0.0
  %1690 = vmatpush1.msra.mxu0 0.0
  %1691 = vmatprep.subr.mxu0 0.0
  %1692 = vmatpush1.msra.mxu0 0.0
  %1693 = vmatprep.subr.mxu0 0.0
  %1694 = vmatpush1.msra.mxu0 0.0
  %1695 = vmatprep.subr.mxu0 0.0
  %1696 = vmatpush1.msra.mxu0 0.0
  %1697 = vmatprep.subr.mxu0 0.0
  %1698 = vmatpush1.msra.mxu0 0.0
  %1699 = vmatprep.subr.mxu0 0.0
  %1700 = vmatpush1.msra.mxu0 0.0
  %1701 = vmatprep.subr.mxu0 0.0
  %1702 = vmatpush1.msra.mxu0 0.0
  %1703 = vmatprep.subr.mxu0 0.0
  %1704 = vmatpush1.msra.mxu0 0.0
  %1705 = vmatprep.subr.mxu0 0.0
  %1706 = vmatpush1.msra.mxu0 0.0
  %1707 = vmatprep.subr.mxu0 0.0
  %1708 = vmatpush1.msra.mxu0 0.0
  %1709 = vmatprep.mubr.f32.mxu0 0.0
  %1710 = vmatmul.mubr.f32.gmra.mrb[0].mxu0 %v1643
  %v1711 = vpop.f32.mrb[0].mxu0
  %v1712 = vadd.f32 %v1640, %v1711
  %v1713 = vpop.f32.mrb[0].mxu0
  %1714 = vdwg.mxu0
  %v1715 = vmul.f32 %v1712, 0.70710677
  %v1716 = vmul.f32 %v1715, %v92
  %v1717 = vmul.f32 %v1715, %v97
  %v1718 = vmul.f32 %v1715, %v102
  %v1719 = vmul.f32 %v1715, %v107
  %1721 = vset.pattern.permute.xlu0 0
  %1722 = vperm.xlu0 %1721, %v116
  %v1723 = vpop.permute.xlu0 %1722
  %vm1725 = vcmp.eq.f32.partialorder %v1723, %v249
  %v1726 = vsel %vm1725, 0.0, -1e+09
  %v1728 = vsel %vm125, %v1716, 0
  %v1731 = vsel %vm125, %v1539, 0
  %v1734 = vsel %vm125, %v1544, 0
  %v1737 = vsel %vm125, %v1549, 0
  %1739 = vmatprep.subr.mxu0 0.0
  %1740 = vmatpush1.xpose.msra.mxu0 %v1731
  %1741 = vmatprep.subr.mxu0 0.0
  %1742 = vmatpush1.xpose.msra.mxu0 %v1734
  %1743 = vmatprep.subr.mxu0 0.0
  %1744 = vmatpush1.xpose.msra.mxu0 %v1737
  %1745 = vmatprep.subr.mxu0 0.0
  %1746 = vmatpush1.xpose.msra.mxu0 0.0
  %1747 = vmatprep.subr.mxu0 0.0
  %1748 = vmatpush1.xpose.msra.mxu0 0.0
  %1749 = vmatprep.subr.mxu0 0.0
  %1750 = vmatpush1.xpose.msra.mxu0 0.0
  %1751 = vmatprep.subr.mxu0 0.0
  %1752 = vmatpush1.xpose.msra.mxu0 0.0
  %1753 = vmatprep.subr.mxu0 0.0
  %1754 = vmatpush1.xpose.msra.mxu0 0.0
  %1755 = vmatprep.subr.mxu0 0.0
  %1756 = vmatpush1.xpose.msra.mxu0 0.0
  %1757 = vmatprep.subr.mxu0 0.0
  %1758 = vmatpush1.xpose.msra.mxu0 0.0
  %1759 = vmatprep.subr.mxu0 0.0
  %1760 = vmatpush1.xpose.msra.mxu0 0.0
  %1761 = vmatprep.subr.mxu0 0.0
  %1762 = vmatpush1.xpose.msra.mxu0 0.0
  %1763 = vmatprep.subr.mxu0 0.0
  %1764 = vmatpush1.xpose.msra.mxu0 0.0
  %1765 = vmatprep.subr.mxu0 0.0
  %1766 = vmatpush1.xpose.msra.mxu0 0.0
  %1767 = vmatprep.subr.mxu0 0.0
  %1768 = vmatpush1.xpose.msra.mxu0 0.0
  %1769 = vmatprep.subr.mxu0 0.0
  %1770 = vmatpush1.xpose.msra.mxu0 0.0
  %1771 = vmatprep.subr.mxu0 0.0
  %1772 = vmatpush1.xpose.msra.mxu0 0.0
  %1773 = vmatprep.subr.mxu0 0.0
  %1774 = vmatpush1.xpose.msra.mxu0 0.0
  %1775 = vmatprep.subr.mxu0 0.0
  %1776 = vmatpush1.xpose.msra.mxu0 0.0
  %1777 = vmatprep.subr.mxu0 0.0
  %1778 = vmatpush1.xpose.msra.mxu0 0.0
  %1779 = vmatprep.subr.mxu0 0.0
  %1780 = vmatpush1.xpose.msra.mxu0 0.0
  %1781 = vmatprep.subr.mxu0 0.0
  %1782 = vmatpush1.xpose.msra.mxu0 0.0
  %1783 = vmatprep.subr.mxu0 0.0
  %1784 = vmatpush1.xpose.msra.mxu0 0.0
  %1785 = vmatprep.subr.mxu0 0.0
  %1786 = vmatpush1.xpose.msra.mxu0 0.0
  %1787 = vmatprep.subr.mxu0 0.0
  %1788 = vmatpush1.xpose.msra.mxu0 0.0
  %1789 = vmatprep.subr.mxu0 0.0
  %1790 = vmatpush1.xpose.msra.mxu0 0.0
  %1791 = vmatprep.subr.mxu0 0.0
  %1792 = vmatpush1.xpose.msra.mxu0 0.0
  %1793 = vmatprep.subr.mxu0 0.0
  %1794 = vmatpush1.xpose.msra.mxu0 0.0
  %1795 = vmatprep.subr.mxu0 0.0
  %1796 = vmatpush1.xpose.msra.mxu0 0.0
  %1797 = vmatprep.subr.mxu0 0.0
  %1798 = vmatpush1.xpose.msra.mxu0 0.0
  %1799 = vmatprep.subr.mxu0 0.0
  %1800 = vmatpush1.xpose.msra.mxu0 0.0
  %1801 = vmatprep.subr.mxu0 0.0
  %1802 = vmatpush1.xpose.msra.mxu0 0.0
  %1803 = vmatprep.mubr.f32.mxu0 0.0
  %1804 = vmatmul.mubr.f32.gmra.mrb[0].mxu0 %v1728
  %v1805 = vpop.f32.mrb[0].mxu0
  %v1806 = vadd.f32 %v1726, %v1805
  %v1807 = vpop.f32.mrb[0].mxu0
  %1808 = vdwg.mxu0
  %v1810 = vsel %vm125, %v1717, 0
  %1812 = vmatprep.subr.mxu0 0.0
  %1813 = vmatpush1.xpose.msra.mxu0 %v1731
  %1814 = vmatprep.subr.mxu0 0.0
  %1815 = vmatpush1.xpose.msra.mxu0 %v1734
  %1816 = vmatprep.subr.mxu0 0.0
  %1817 = vmatpush1.xpose.msra.mxu0 %v1737
  %1818 = vmatprep.subr.mxu0 0.0
  %1819 = vmatpush1.xpose.msra.mxu0 0.0
  %1820 = vmatprep.subr.mxu0 0.0
  %1821 = vmatpush1.xpose.msra.mxu0 0.0
  %1822 = vmatprep.subr.mxu0 0.0
  %1823 = vmatpush1.xpose.msra.mxu0 0.0
  %1824 = vmatprep.subr.mxu0 0.0
  %1825 = vmatpush1.xpose.msra.mxu0 0.0
  %1826 = vmatprep.subr.mxu0 0.0
  %1827 = vmatpush1.xpose.msra.mxu0 0.0
  %1828 = vmatprep.subr.mxu0 0.0
  %1829 = vmatpush1.xpose.msra.mxu0 0.0
  %1830 = vmatprep.subr.mxu0 0.0
  %1831 = vmatpush1.xpose.msra.mxu0 0.0
  %1832 = vmatprep.subr.mxu0 0.0
  %1833 = vmatpush1.xpose.msra.mxu0 0.0
  %1834 = vmatprep.subr.mxu0 0.0
  %1835 = vmatpush1.xpose.msra.mxu0 0.0
  %1836 = vmatprep.subr.mxu0 0.0
  %1837 = vmatpush1.xpose.msra.mxu0 0.0
  %1838 = vmatprep.subr.mxu0 0.0
  %1839 = vmatpush1.xpose.msra.mxu0 0.0
  %1840 = vmatprep.subr.mxu0 0.0
  %1841 = vmatpush1.xpose.msra.mxu0 0.0
  %1842 = vmatprep.subr.mxu0 0.0
  %1843 = vmatpush1.xpose.msra.mxu0 0.0
  %1844 = vmatprep.subr.mxu0 0.0
  %1845 = vmatpush1.xpose.msra.mxu0 0.0
  %1846 = vmatprep.subr.mxu0 0.0
  %1847 = vmatpush1.xpose.msra.mxu0 0.0
  %1848 = vmatprep.subr.mxu0 0.0
  %1849 = vmatpush1.xpose.msra.mxu0 0.0
  %1850 = vmatprep.subr.mxu0 0.0
  %1851 = vmatpush1.xpose.msra.mxu0 0.0
  %1852 = vmatprep.subr.mxu0 0.0
  %1853 = vmatpush1.xpose.msra.mxu0 0.0
  %1854 = vmatprep.subr.mxu0 0.0
  %1855 = vmatpush1.xpose.msra.mxu0 0.0
  %1856 = vmatprep.subr.mxu0 0.0
  %1857 = vmatpush1.xpose.msra.mxu0 0.0
  %1858 = vmatprep.subr.mxu0 0.0
  %1859 = vmatpush1.xpose.msra.mxu0 0.0
  %1860 = vmatprep.subr.mxu0 0.0
  %1861 = vmatpush1.xpose.msra.mxu0 0.0
  %1862 = vmatprep.subr.mxu0 0.0
  %1863 = vmatpush1.xpose.msra.mxu0 0.0
  %1864 = vmatprep.subr.mxu0 0.0
  %1865 = vmatpush1.xpose.msra.mxu0 0.0
  %1866 = vmatprep.subr.mxu0 0.0
  %1867 = vmatpush1.xpose.msra.mxu0 0.0
  %1868 = vmatprep.subr.mxu0 0.0
  %1869 = vmatpush1.xpose.msra.mxu0 0.0
  %1870 = vmatprep.subr.mxu0 0.0
  %1871 = vmatpush1.xpose.msra.mxu0 0.0
  %1872 = vmatprep.subr.mxu0 0.0
  %1873 = vmatpush1.xpose.msra.mxu0 0.0
  %1874 = vmatprep.subr.mxu0 0.0
  %1875 = vmatpush1.xpose.msra.mxu0 0.0
  %1876 = vmatprep.mubr.f32.mxu0 0.0
  %1877 = vmatmul.mubr.f32.gmra.mrb[0].mxu0 %v1810
  %v1878 = vpop.f32.mrb[0].mxu0
  %v1879 = vadd.f32 %v1726, %v1878
  %v1880 = vpop.f32.mrb[0].mxu0
  %1881 = vdwg.mxu0
  %v1883 = vsel %vm125, %v1718, 0
  %1885 = vmatprep.subr.mxu0 0.0
  %1886 = vmatpush1.xpose.msra.mxu0 %v1731
  %1887 = vmatprep.subr.mxu0 0.0
  %1888 = vmatpush1.xpose.msra.mxu0 %v1734
  %1889 = vmatprep.subr.mxu0 0.0
  %1890 = vmatpush1.xpose.msra.mxu0 %v1737
  %1891 = vmatprep.subr.mxu0 0.0
  %1892 = vmatpush1.xpose.msra.mxu0 0.0
  %1893 = vmatprep.subr.mxu0 0.0
  %1894 = vmatpush1.xpose.msra.mxu0 0.0
  %1895 = vmatprep.subr.mxu0 0.0
  %1896 = vmatpush1.xpose.msra.mxu0 0.0
  %1897 = vmatprep.subr.mxu0 0.0
  %1898 = vmatpush1.xpose.msra.mxu0 0.0
  %1899 = vmatprep.subr.mxu0 0.0
  %1900 = vmatpush1.xpose.msra.mxu0 0.0
  %1901 = vmatprep.subr.mxu0 0.0
  %1902 = vmatpush1.xpose.msra.mxu0 0.0
  %1903 = vmatprep.subr.mxu0 0.0
  %1904 = vmatpush1.xpose.msra.mxu0 0.0
  %1905 = vmatprep.subr.mxu0 0.0
  %1906 = vmatpush1.xpose.msra.mxu0 0.0
  %1907 = vmatprep.subr.mxu0 0.0
  %1908 = vmatpush1.xpose.msra.mxu0 0.0
  %1909 = vmatprep.subr.mxu0 0.0
  %1910 = vmatpush1.xpose.msra.mxu0 0.0
  %1911 = vmatprep.subr.mxu0 0.0
  %1912 = vmatpush1.xpose.msra.mxu0 0.0
  %1913 = vmatprep.subr.mxu0 0.0
  %1914 = vmatpush1.xpose.msra.mxu0 0.0
  %1915 = vmatprep.subr.mxu0 0.0
  %1916 = vmatpush1.xpose.msra.mxu0 0.0
  %1917 = vmatprep.subr.mxu0 0.0
  %1918 = vmatpush1.xpose.msra.mxu0 0.0
  %1919 = vmatprep.subr.mxu0 0.0
  %1920 = vmatpush1.xpose.msra.mxu0 0.0
  %1921 = vmatprep.subr.mxu0 0.0
  %1922 = vmatpush1.xpose.msra.mxu0 0.0
  %1923 = vmatprep.subr.mxu0 0.0
  %1924 = vmatpush1.xpose.msra.mxu0 0.0
  %1925 = vmatprep.subr.mxu0 0.0
  %1926 = vmatpush1.xpose.msra.mxu0 0.0
  %1927 = vmatprep.subr.mxu0 0.0
  %1928 = vmatpush1.xpose.msra.mxu0 0.0
  %1929 = vmatprep.subr.mxu0 0.0
  %1930 = vmatpush1.xpose.msra.mxu0 0.0
  %1931 = vmatprep.subr.mxu0 0.0
  %1932 = vmatpush1.xpose.msra.mxu0 0.0
  %1933 = vmatprep.subr.mxu0 0.0
  %1934 = vmatpush1.xpose.msra.mxu0 0.0
  %1935 = vmatprep.subr.mxu0 0.0
  %1936 = vmatpush1.xpose.msra.mxu0 0.0
  %1937 = vmatprep.subr.mxu0 0.0
  %1938 = vmatpush1.xpose.msra.mxu0 0.0
  %1939 = vmatprep.subr.mxu0 0.0
  %1940 = vmatpush1.xpose.msra.mxu0 0.0
  %1941 = vmatprep.subr.mxu0 0.0
  %1942 = vmatpush1.xpose.msra.mxu0 0.0
  %1943 = vmatprep.subr.mxu0 0.0
  %1944 = vmatpush1.xpose.msra.mxu0 0.0
  %1945 = vmatprep.subr.mxu0 0.0
  %1946 = vmatpush1.xpose.msra.mxu0 0.0
  %1947 = vmatprep.subr.mxu0 0.0
  %1948 = vmatpush1.xpose.msra.mxu0 0.0
  %1949 = vmatprep.mubr.f32.mxu0 0.0
  %1950 = vmatmul.mubr.f32.gmra.mrb[0].mxu0 %v1883
  %v1951 = vpop.f32.mrb[0].mxu0
  %v1952 = vadd.f32 %v1726, %v1951
  %v1953 = vpop.f32.mrb[0].mxu0
  %1954 = vdwg.mxu0
  %v1956 = vsel %vm125, %v1719, 0
  %1958 = vmatprep.subr.mxu0 0.0
  %1959 = vmatpush1.xpose.msra.mxu0 %v1731
  %1960 = vmatprep.subr.mxu0 0.0
  %1961 = vmatpush1.xpose.msra.mxu0 %v1734
  %1962 = vmatprep.subr.mxu0 0.0
  %1963 = vmatpush1.xpose.msra.mxu0 %v1737
  %1964 = vmatprep.subr.mxu0 0.0
  %1965 = vmatpush1.xpose.msra.mxu0 0.0
  %1966 = vmatprep.subr.mxu0 0.0
  %1967 = vmatpush1.xpose.msra.mxu0 0.0
  %1968 = vmatprep.subr.mxu0 0.0
  %1969 = vmatpush1.xpose.msra.mxu0 0.0
  %1970 = vmatprep.subr.mxu0 0.0
  %1971 = vmatpush1.xpose.msra.mxu0 0.0
  %1972 = vmatprep.subr.mxu0 0.0
  %1973 = vmatpush1.xpose.msra.mxu0 0.0
  %1974 = vmatprep.subr.mxu0 0.0
  %1975 = vmatpush1.xpose.msra.mxu0 0.0
  %1976 = vmatprep.subr.mxu0 0.0
  %1977 = vmatpush1.xpose.msra.mxu0 0.0
  %1978 = vmatprep.subr.mxu0 0.0
  %1979 = vmatpush1.xpose.msra.mxu0 0.0
  %1980 = vmatprep.subr.mxu0 0.0
  %1981 = vmatpush1.xpose.msra.mxu0 0.0
  %1982 = vmatprep.subr.mxu0 0.0
  %1983 = vmatpush1.xpose.msra.mxu0 0.0
  %1984 = vmatprep.subr.mxu0 0.0
  %1985 = vmatpush1.xpose.msra.mxu0 0.0
  %1986 = vmatprep.subr.mxu0 0.0
  %1987 = vmatpush1.xpose.msra.mxu0 0.0
  %1988 = vmatprep.subr.mxu0 0.0
  %1989 = vmatpush1.xpose.msra.mxu0 0.0
  %1990 = vmatprep.subr.mxu0 0.0
  %1991 = vmatpush1.xpose.msra.mxu0 0.0
  %1992 = vmatprep.subr.mxu0 0.0
  %1993 = vmatpush1.xpose.msra.mxu0 0.0
  %1994 = vmatprep.subr.mxu0 0.0
  %1995 = vmatpush1.xpose.msra.mxu0 0.0
  %1996 = vmatprep.subr.mxu0 0.0
  %1997 = vmatpush1.xpose.msra.mxu0 0.0
  %1998 = vmatprep.subr.mxu0 0.0
  %1999 = vmatpush1.xpose.msra.mxu0 0.0
  %2000 = vmatprep.subr.mxu0 0.0
  %2001 = vmatpush1.xpose.msra.mxu0 0.0
  %2002 = vmatprep.subr.mxu0 0.0
  %2003 = vmatpush1.xpose.msra.mxu0 0.0
  %2004 = vmatprep.subr.mxu0 0.0
  %2005 = vmatpush1.xpose.msra.mxu0 0.0
  %2006 = vmatprep.subr.mxu0 0.0
  %2007 = vmatpush1.xpose.msra.mxu0 0.0
  %2008 = vmatprep.subr.mxu0 0.0
  %2009 = vmatpush1.xpose.msra.mxu0 0.0
  %2010 = vmatprep.subr.mxu0 0.0
  %2011 = vmatpush1.xpose.msra.mxu0 0.0
  %2012 = vmatprep.subr.mxu0 0.0
  %2013 = vmatpush1.xpose.msra.mxu0 0.0
  %2014 = vmatprep.subr.mxu0 0.0
  %2015 = vmatpush1.xpose.msra.mxu0 0.0
  %2016 = vmatprep.subr.mxu0 0.0
  %2017 = vmatpush1.xpose.msra.mxu0 0.0
  %2018 = vmatprep.subr.mxu0 0.0
  %2019 = vmatpush1.xpose.msra.mxu0 0.0
  %2020 = vmatprep.subr.mxu0 0.0
  %2021 = vmatpush1.xpose.msra.mxu0 0.0
  %2022 = vmatprep.mubr.f32.mxu0 0.0
  %2023 = vmatmul.mubr.f32.gmra.mrb[0].mxu0 %v1956
  %v2024 = vpop.f32.mrb[0].mxu0
  %v2025 = vadd.f32 %v1726, %v2024
  %v2026 = vpop.f32.mrb[0].mxu0
  %2027 = vdwg.mxu0
  %vm2028 = vcmask 156672
  %v2029 = vsel %vm2028, %v1806, -inf
  %2030 = vmax.xlane.f32.xlu0 %v2029
  %v2031 = vpop.xlane.xlu0 %2030
  %v2032 = vsel %vm2028, %v1879, -inf
  %2033 = vmax.xlane.f32.xlu0 %v2032
  %v2034 = vpop.xlane.xlu0 %2033
  %v2035 = vsel %vm2028, %v1952, -inf
  %2036 = vmax.xlane.f32.xlu0 %v2035
  %v2037 = vpop.xlane.xlu0 %2036
  %v2038 = vsel %vm2028, %v2025, -inf
  %2039 = vmax.xlane.f32.xlu0 %v2038
  %v2040 = vpop.xlane.xlu0 %2039
  %v2041 = vsub.f32 %v1806, %v2031
  %v2042 = vsub.f32 %v1879, %v2034
  %v2043 = vsub.f32 %v1952, %v2037
  %v2044 = vsub.f32 %v2025, %v2040
  %v2045 = vmul.f32 %v2041, 1.442695
  %v2046 = vpow.pop %v2045
  %v2047 = vmul.f32 %v2042, 1.442695
  %v2048 = vpow.pop %v2047
  %v2049 = vmul.f32 %v2043, 1.442695
  %v2050 = vpow.pop %v2049
  %v2051 = vmul.f32 %v2044, 1.442695
  %v2052 = vpow.pop %v2051
  %v2053 = vsel %vm2028, %v2046, 0.0
  %2054 = vadd.xlane.f32.xlu0 %v2053
  %v2055 = vpop.xlane.xlu0 %2054
  %v2056 = vsel %vm2028, %v2048, 0.0
  %2057 = vadd.xlane.f32.xlu0 %v2056
  %v2058 = vpop.xlane.xlu0 %2057
  %v2059 = vsel %vm2028, %v2050, 0.0
  %2060 = vadd.xlane.f32.xlu0 %v2059
  %v2061 = vpop.xlane.xlu0 %2060
  %v2062 = vsel %vm2028, %v2052, 0.0
  %2063 = vadd.xlane.f32.xlu0 %v2062
  %v2064 = vpop.xlane.xlu0 %2063
  %v2065 = vrcp.pop %v2055
  %v2066 = vrcp.pop %v2058
  %v2067 = vrcp.pop %v2061
  %v2068 = vrcp.pop %v2064
  %v2069 = vmul.f32 %v2046, %v2065
  %v2070 = vmul.f32 %v2048, %v2066
  %v2071 = vmul.f32 %v2050, %v2067
  %v2072 = vmul.f32 %v2052, %v2068
  %2073 = vrot.lane.b32.xlu0 %v1539, 120
  %v2074 = vpop.permute.xlu0 %2073
  %2075 = vrot.lane.b32.xlu0 %v1544, 120
  %v2076 = vpop.permute.xlu0 %2075
  %2077 = vrot.lane.b32.xlu0 %v1549, 120
  %v2078 = vpop.permute.xlu0 %2077
  %v2082 = vsel %vm628, %v2069, 0
  %v2084 = vsel %vm779, %v2078, 0
  %2086 = vmatprep.subr.mxu0 0.0
  %2087 = vmatpush1.msra.mxu0 %v2074
  %2088 = vmatprep.subr.mxu0 0.0
  %2089 = vmatpush1.msra.mxu0 %v2076
  %2090 = vmatprep.subr.mxu0 0.0
  %2091 = vmatpush1.msra.mxu0 %v2084
  %2092 = vmatprep.subr.mxu0 0.0
  %2093 = vmatpush1.msra.mxu0 0.0
  %2094 = vmatprep.subr.mxu0 0.0
  %2095 = vmatpush1.msra.mxu0 0.0
  %2096 = vmatprep.subr.mxu0 0.0
  %2097 = vmatpush1.msra.mxu0 0.0
  %2098 = vmatprep.subr.mxu0 0.0
  %2099 = vmatpush1.msra.mxu0 0.0
  %2100 = vmatprep.subr.mxu0 0.0
  %2101 = vmatpush1.msra.mxu0 0.0
  %2102 = vmatprep.subr.mxu0 0.0
  %2103 = vmatpush1.msra.mxu0 0.0
  %2104 = vmatprep.subr.mxu0 0.0
  %2105 = vmatpush1.msra.mxu0 0.0
  %2106 = vmatprep.subr.mxu0 0.0
  %2107 = vmatpush1.msra.mxu0 0.0
  %2108 = vmatprep.subr.mxu0 0.0
  %2109 = vmatpush1.msra.mxu0 0.0
  %2110 = vmatprep.subr.mxu0 0.0
  %2111 = vmatpush1.msra.mxu0 0.0
  %2112 = vmatprep.subr.mxu0 0.0
  %2113 = vmatpush1.msra.mxu0 0.0
  %2114 = vmatprep.subr.mxu0 0.0
  %2115 = vmatpush1.msra.mxu0 0.0
  %2116 = vmatprep.subr.mxu0 0.0
  %2117 = vmatpush1.msra.mxu0 0.0
  %2118 = vmatprep.subr.mxu0 0.0
  %2119 = vmatpush1.msra.mxu0 0.0
  %2120 = vmatprep.subr.mxu0 0.0
  %2121 = vmatpush1.msra.mxu0 0.0
  %2122 = vmatprep.subr.mxu0 0.0
  %2123 = vmatpush1.msra.mxu0 0.0
  %2124 = vmatprep.subr.mxu0 0.0
  %2125 = vmatpush1.msra.mxu0 0.0
  %2126 = vmatprep.subr.mxu0 0.0
  %2127 = vmatpush1.msra.mxu0 0.0
  %2128 = vmatprep.subr.mxu0 0.0
  %2129 = vmatpush1.msra.mxu0 0.0
  %2130 = vmatprep.subr.mxu0 0.0
  %2131 = vmatpush1.msra.mxu0 0.0
  %2132 = vmatprep.subr.mxu0 0.0
  %2133 = vmatpush1.msra.mxu0 0.0
  %2134 = vmatprep.subr.mxu0 0.0
  %2135 = vmatpush1.msra.mxu0 0.0
  %2136 = vmatprep.subr.mxu0 0.0
  %2137 = vmatpush1.msra.mxu0 0.0
  %2138 = vmatprep.subr.mxu0 0.0
  %2139 = vmatpush1.msra.mxu0 0.0
  %2140 = vmatprep.subr.mxu0 0.0
  %2141 = vmatpush1.msra.mxu0 0.0
  %2142 = vmatprep.subr.mxu0 0.0
  %2143 = vmatpush1.msra.mxu0 0.0
  %2144 = vmatprep.subr.mxu0 0.0
  %2145 = vmatpush1.msra.mxu0 0.0
  %2146 = vmatprep.subr.mxu0 0.0
  %2147 = vmatpush1.msra.mxu0 0.0
  %2148 = vmatprep.subr.mxu0 0.0
  %2149 = vmatpush1.msra.mxu0 0.0
  %2150 = vmatprep.mubr.f32.mxu0 0.0
  %2151 = vmatmul.mubr.f32.gmra.mrb[0].mxu0 %v2082
  %v2152 = vpop.f32.mrb[0].mxu0
  %v2153 = vadd.f32 0.0, %v2152
  %v2154 = vpop.f32.mrb[0].mxu0
  %2155 = vdwg.mxu0
  %v2157 = vsel %vm628, %v2070, 0
  %2159 = vmatprep.subr.mxu0 0.0
  %2160 = vmatpush1.msra.mxu0 %v2074
  %2161 = vmatprep.subr.mxu0 0.0
  %2162 = vmatpush1.msra.mxu0 %v2076
  %2163 = vmatprep.subr.mxu0 0.0
  %2164 = vmatpush1.msra.mxu0 %v2084
  %2165 = vmatprep.subr.mxu0 0.0
  %2166 = vmatpush1.msra.mxu0 0.0
  %2167 = vmatprep.subr.mxu0 0.0
  %2168 = vmatpush1.msra.mxu0 0.0
  %2169 = vmatprep.subr.mxu0 0.0
  %2170 = vmatpush1.msra.mxu0 0.0
  %2171 = vmatprep.subr.mxu0 0.0
  %2172 = vmatpush1.msra.mxu0 0.0
  %2173 = vmatprep.subr.mxu0 0.0
  %2174 = vmatpush1.msra.mxu0 0.0
  %2175 = vmatprep.subr.mxu0 0.0
  %2176 = vmatpush1.msra.mxu0 0.0
  %2177 = vmatprep.subr.mxu0 0.0
  %2178 = vmatpush1.msra.mxu0 0.0
  %2179 = vmatprep.subr.mxu0 0.0
  %2180 = vmatpush1.msra.mxu0 0.0
  %2181 = vmatprep.subr.mxu0 0.0
  %2182 = vmatpush1.msra.mxu0 0.0
  %2183 = vmatprep.subr.mxu0 0.0
  %2184 = vmatpush1.msra.mxu0 0.0
  %2185 = vmatprep.subr.mxu0 0.0
  %2186 = vmatpush1.msra.mxu0 0.0
  %2187 = vmatprep.subr.mxu0 0.0
  %2188 = vmatpush1.msra.mxu0 0.0
  %2189 = vmatprep.subr.mxu0 0.0
  %2190 = vmatpush1.msra.mxu0 0.0
  %2191 = vmatprep.subr.mxu0 0.0
  %2192 = vmatpush1.msra.mxu0 0.0
  %2193 = vmatprep.subr.mxu0 0.0
  %2194 = vmatpush1.msra.mxu0 0.0
  %2195 = vmatprep.subr.mxu0 0.0
  %2196 = vmatpush1.msra.mxu0 0.0
  %2197 = vmatprep.subr.mxu0 0.0
  %2198 = vmatpush1.msra.mxu0 0.0
  %2199 = vmatprep.subr.mxu0 0.0
  %2200 = vmatpush1.msra.mxu0 0.0
  %2201 = vmatprep.subr.mxu0 0.0
  %2202 = vmatpush1.msra.mxu0 0.0
  %2203 = vmatprep.subr.mxu0 0.0
  %2204 = vmatpush1.msra.mxu0 0.0
  %2205 = vmatprep.subr.mxu0 0.0
  %2206 = vmatpush1.msra.mxu0 0.0
  %2207 = vmatprep.subr.mxu0 0.0
  %2208 = vmatpush1.msra.mxu0 0.0
  %2209 = vmatprep.subr.mxu0 0.0
  %2210 = vmatpush1.msra.mxu0 0.0
  %2211 = vmatprep.subr.mxu0 0.0
  %2212 = vmatpush1.msra.mxu0 0.0
  %2213 = vmatprep.subr.mxu0 0.0
  %2214 = vmatpush1.msra.mxu0 0.0
  %2215 = vmatprep.subr.mxu0 0.0
  %2216 = vmatpush1.msra.mxu0 0.0
  %2217 = vmatprep.subr.mxu0 0.0
  %2218 = vmatpush1.msra.mxu0 0.0
  %2219 = vmatprep.subr.mxu0 0.0
  %2220 = vmatpush1.msra.mxu0 0.0
  %2221 = vmatprep.subr.mxu0 0.0
  %2222 = vmatpush1.msra.mxu0 0.0
  %2223 = vmatprep.mubr.f32.mxu0 0.0
  %2224 = vmatmul.mubr.f32.gmra.mrb[0].mxu0 %v2157
  %v2225 = vpop.f32.mrb[0].mxu0
  %v2226 = vadd.f32 0.0, %v2225
  %v2227 = vpop.f32.mrb[0].mxu0
  %2228 = vdwg.mxu0
  %v2230 = vsel %vm628, %v2071, 0
  %2232 = vmatprep.subr.mxu0 0.0
  %2233 = vmatpush1.msra.mxu0 %v2074
  %2234 = vmatprep.subr.mxu0 0.0
  %2235 = vmatpush1.msra.mxu0 %v2076
  %2236 = vmatprep.subr.mxu0 0.0
  %2237 = vmatpush1.msra.mxu0 %v2084
  %2238 = vmatprep.subr.mxu0 0.0
  %2239 = vmatpush1.msra.mxu0 0.0
  %2240 = vmatprep.subr.mxu0 0.0
  %2241 = vmatpush1.msra.mxu0 0.0
  %2242 = vmatprep.subr.mxu0 0.0
  %2243 = vmatpush1.msra.mxu0 0.0
  %2244 = vmatprep.subr.mxu0 0.0
  %2245 = vmatpush1.msra.mxu0 0.0
  %2246 = vmatprep.subr.mxu0 0.0
  %2247 = vmatpush1.msra.mxu0 0.0
  %2248 = vmatprep.subr.mxu0 0.0
  %2249 = vmatpush1.msra.mxu0 0.0
  %2250 = vmatprep.subr.mxu0 0.0
  %2251 = vmatpush1.msra.mxu0 0.0
  %2252 = vmatprep.subr.mxu0 0.0
  %2253 = vmatpush1.msra.mxu0 0.0
  %2254 = vmatprep.subr.mxu0 0.0
  %2255 = vmatpush1.msra.mxu0 0.0
  %2256 = vmatprep.subr.mxu0 0.0
  %2257 = vmatpush1.msra.mxu0 0.0
  %2258 = vmatprep.subr.mxu0 0.0
  %2259 = vmatpush1.msra.mxu0 0.0
  %2260 = vmatprep.subr.mxu0 0.0
  %2261 = vmatpush1.msra.mxu0 0.0
  %2262 = vmatprep.subr.mxu0 0.0
  %2263 = vmatpush1.msra.mxu0 0.0
  %2264 = vmatprep.subr.mxu0 0.0
  %2265 = vmatpush1.msra.mxu0 0.0
  %2266 = vmatprep.subr.mxu0 0.0
  %2267 = vmatpush1.msra.mxu0 0.0
  %2268 = vmatprep.subr.mxu0 0.0
  %2269 = vmatpush1.msra.mxu0 0.0
  %2270 = vmatprep.subr.mxu0 0.0
  %2271 = vmatpush1.msra.mxu0 0.0
  %2272 = vmatprep.subr.mxu0 0.0
  %2273 = vmatpush1.msra.mxu0 0.0
  %2274 = vmatprep.subr.mxu0 0.0
  %2275 = vmatpush1.msra.mxu0 0.0
  %2276 = vmatprep.subr.mxu0 0.0
  %2277 = vmatpush1.msra.mxu0 0.0
  %2278 = vmatprep.subr.mxu0 0.0
  %2279 = vmatpush1.msra.mxu0 0.0
  %2280 = vmatprep.subr.mxu0 0.0
  %2281 = vmatpush1.msra.mxu0 0.0
  %2282 = vmatprep.subr.mxu0 0.0
  %2283 = vmatpush1.msra.mxu0 0.0
  %2284 = vmatprep.subr.mxu0 0.0
  %2285 = vmatpush1.msra.mxu0 0.0
  %2286 = vmatprep.subr.mxu0 0.0
  %2287 = vmatpush1.msra.mxu0 0.0
  %2288 = vmatprep.subr.mxu0 0.0
  %2289 = vmatpush1.msra.mxu0 0.0
  %2290 = vmatprep.subr.mxu0 0.0
  %2291 = vmatpush1.msra.mxu0 0.0
  %2292 = vmatprep.subr.mxu0 0.0
  %2293 = vmatpush1.msra.mxu0 0.0
  %2294 = vmatprep.subr.mxu0 0.0
  %2295 = vmatpush1.msra.mxu0 0.0
  %2296 = vmatprep.mubr.f32.mxu0 0.0
  %2297 = vmatmul.mubr.f32.gmra.mrb[0].mxu0 %v2230
  %v2298 = vpop.f32.mrb[0].mxu0
  %v2299 = vadd.f32 0.0, %v2298
  %v2300 = vpop.f32.mrb[0].mxu0
  %2301 = vdwg.mxu0
  %v2303 = vsel %vm628, %v2072, 0
  %2305 = vmatprep.subr.mxu0 0.0
  %2306 = vmatpush1.msra.mxu0 %v2074
  %2307 = vmatprep.subr.mxu0 0.0
  %2308 = vmatpush1.msra.mxu0 %v2076
  %2309 = vmatprep.subr.mxu0 0.0
  %2310 = vmatpush1.msra.mxu0 %v2084
  %2311 = vmatprep.subr.mxu0 0.0
  %2312 = vmatpush1.msra.mxu0 0.0
  %2313 = vmatprep.subr.mxu0 0.0
  %2314 = vmatpush1.msra.mxu0 0.0
  %2315 = vmatprep.subr.mxu0 0.0
  %2316 = vmatpush1.msra.mxu0 0.0
  %2317 = vmatprep.subr.mxu0 0.0
  %2318 = vmatpush1.msra.mxu0 0.0
  %2319 = vmatprep.subr.mxu0 0.0
  %2320 = vmatpush1.msra.mxu0 0.0
  %2321 = vmatprep.subr.mxu0 0.0
  %2322 = vmatpush1.msra.mxu0 0.0
  %2323 = vmatprep.subr.mxu0 0.0
  %2324 = vmatpush1.msra.mxu0 0.0
  %2325 = vmatprep.subr.mxu0 0.0
  %2326 = vmatpush1.msra.mxu0 0.0
  %2327 = vmatprep.subr.mxu0 0.0
  %2328 = vmatpush1.msra.mxu0 0.0
  %2329 = vmatprep.subr.mxu0 0.0
  %2330 = vmatpush1.msra.mxu0 0.0
  %2331 = vmatprep.subr.mxu0 0.0
  %2332 = vmatpush1.msra.mxu0 0.0
  %2333 = vmatprep.subr.mxu0 0.0
  %2334 = vmatpush1.msra.mxu0 0.0
  %2335 = vmatprep.subr.mxu0 0.0
  %2336 = vmatpush1.msra.mxu0 0.0
  %2337 = vmatprep.subr.mxu0 0.0
  %2338 = vmatpush1.msra.mxu0 0.0
  %2339 = vmatprep.subr.mxu0 0.0
  %2340 = vmatpush1.msra.mxu0 0.0
  %2341 = vmatprep.subr.mxu0 0.0
  %2342 = vmatpush1.msra.mxu0 0.0
  %2343 = vmatprep.subr.mxu0 0.0
  %2344 = vmatpush1.msra.mxu0 0.0
  %2345 = vmatprep.subr.mxu0 0.0
  %2346 = vmatpush1.msra.mxu0 0.0
  %2347 = vmatprep.subr.mxu0 0.0
  %2348 = vmatpush1.msra.mxu0 0.0
  %2349 = vmatprep.subr.mxu0 0.0
  %2350 = vmatpush1.msra.mxu0 0.0
  %2351 = vmatprep.subr.mxu0 0.0
  %2352 = vmatpush1.msra.mxu0 0.0
  %2353 = vmatprep.subr.mxu0 0.0
  %2354 = vmatpush1.msra.mxu0 0.0
  %2355 = vmatprep.subr.mxu0 0.0
  %2356 = vmatpush1.msra.mxu0 0.0
  %2357 = vmatprep.subr.mxu0 0.0
  %2358 = vmatpush1.msra.mxu0 0.0
  %2359 = vmatprep.subr.mxu0 0.0
  %2360 = vmatpush1.msra.mxu0 0.0
  %2361 = vmatprep.subr.mxu0 0.0
  %2362 = vmatpush1.msra.mxu0 0.0
  %2363 = vmatprep.subr.mxu0 0.0
  %2364 = vmatpush1.msra.mxu0 0.0
  %2365 = vmatprep.subr.mxu0 0.0
  %2366 = vmatpush1.msra.mxu0 0.0
  %2367 = vmatprep.subr.mxu0 0.0
  %2368 = vmatpush1.msra.mxu0 0.0
  %2369 = vmatprep.mubr.f32.mxu0 0.0
  %2370 = vmatmul.mubr.f32.gmra.mrb[0].mxu0 %v2303
  %v2371 = vpop.f32.mrb[0].mxu0
  %v2372 = vadd.f32 0.0, %v2371
  %v2373 = vpop.f32.mrb[0].mxu0
  %2374 = vdwg.mxu0
  %v2375 = vmul.f32 %v2153, %v92
  %v2376 = vmul.f32 %v2226, %v97
  %v2377 = vadd.f32 %v2375, %v2376
  %v2378 = vmul.f32 %v2299, %v102
  %v2379 = vadd.f32 %v2377, %v2378
  %v2380 = vmul.f32 %v2372, %v107
  %v2381 = vadd.f32 %v2379, %v2380
  %v2382 = vld [vmem:[%s19] sm:$0xff]
  %v2384 = vsel %vm125, %v2381, 0
  %2386 = vmatprep.subr.mxu0 0.0
  %2387 = vmatpush1.msra.mxu0 %v2382
  %2388 = vmatprep.subr.mxu0 0.0
  %2389 = vmatpush1.msra.mxu0 0.0
  %2390 = vmatprep.subr.mxu0 0.0
  %2391 = vmatpush1.msra.mxu0 0.0
  %2392 = vmatprep.subr.mxu0 0.0
  %2393 = vmatpush1.msra.mxu0 0.0
  %2394 = vmatprep.subr.mxu0 0.0
  %2395 = vmatpush1.msra.mxu0 0.0
  %2396 = vmatprep.subr.mxu0 0.0
  %2397 = vmatpush1.msra.mxu0 0.0
  %2398 = vmatprep.subr.mxu0 0.0
  %2399 = vmatpush1.msra.mxu0 0.0
  %2400 = vmatprep.subr.mxu0 0.0
  %2401 = vmatpush1.msra.mxu0 0.0
  %2402 = vmatprep.subr.mxu0 0.0
  %2403 = vmatpush1.msra.mxu0 0.0
  %2404 = vmatprep.subr.mxu0 0.0
  %2405 = vmatpush1.msra.mxu0 0.0
  %2406 = vmatprep.subr.mxu0 0.0
  %2407 = vmatpush1.msra.mxu0 0.0
  %2408 = vmatprep.subr.mxu0 0.0
  %2409 = vmatpush1.msra.mxu0 0.0
  %2410 = vmatprep.subr.mxu0 0.0
  %2411 = vmatpush1.msra.mxu0 0.0
  %2412 = vmatprep.subr.mxu0 0.0
  %2413 = vmatpush1.msra.mxu0 0.0
  %2414 = vmatprep.subr.mxu0 0.0
  %2415 = vmatpush1.msra.mxu0 0.0
  %2416 = vmatprep.subr.mxu0 0.0
  %2417 = vmatpush1.msra.mxu0 0.0
  %2418 = vmatprep.subr.mxu0 0.0
  %2419 = vmatpush1.msra.mxu0 0.0
  %2420 = vmatprep.subr.mxu0 0.0
  %2421 = vmatpush1.msra.mxu0 0.0
  %2422 = vmatprep.subr.mxu0 0.0
  %2423 = vmatpush1.msra.mxu0 0.0
  %2424 = vmatprep.subr.mxu0 0.0
  %2425 = vmatpush1.msra.mxu0 0.0
  %2426 = vmatprep.subr.mxu0 0.0
  %2427 = vmatpush1.msra.mxu0 0.0
  %2428 = vmatprep.subr.mxu0 0.0
  %2429 = vmatpush1.msra.mxu0 0.0
  %2430 = vmatprep.subr.mxu0 0.0
  %2431 = vmatpush1.msra.mxu0 0.0
  %2432 = vmatprep.subr.mxu0 0.0
  %2433 = vmatpush1.msra.mxu0 0.0
  %2434 = vmatprep.subr.mxu0 0.0
  %2435 = vmatpush1.msra.mxu0 0.0
  %2436 = vmatprep.subr.mxu0 0.0
  %2437 = vmatpush1.msra.mxu0 0.0
  %2438 = vmatprep.subr.mxu0 0.0
  %2439 = vmatpush1.msra.mxu0 0.0
  %2440 = vmatprep.subr.mxu0 0.0
  %2441 = vmatpush1.msra.mxu0 0.0
  %2442 = vmatprep.subr.mxu0 0.0
  %2443 = vmatpush1.msra.mxu0 0.0
  %2444 = vmatprep.subr.mxu0 0.0
  %2445 = vmatpush1.msra.mxu0 0.0
  %2446 = vmatprep.subr.mxu0 0.0
  %2447 = vmatpush1.msra.mxu0 0.0
  %2448 = vmatprep.subr.mxu0 0.0
  %2449 = vmatpush1.msra.mxu0 0.0
  %2450 = vmatprep.mubr.f32.mxu0 0.0
  %2451 = vmatmul.mubr.f32.gmra.mrb[0].mxu0 %v2384
  %v2452 = vpop.f32.mrb[0].mxu0
  %v2453 = vadd.f32 0.0, %v2452
  %v2454 = vpop.f32.mrb[0].mxu0
  %2455 = vdwg.mxu0
  %v2456 = vadd.f32 %v1633, %v2453
  %v2457 = vld [vmem:[%s20] sm:$0x1]
  %v2459 = vlaneseq
  %v2460 = vshrl.u32 %v2459, 7
  %v2461 = vsub.s32 0, %v2460
  %v2462 = vrot.slane %v2457, %v2461
  %v2464 = vadd.f32 %v2456, %v2462
  %v2465 = vld [vmem:[%s21] sm:$0xff]
  %v2466 = vld [vmem:[%s22] sm:$0x1]
  %v2468 = vlaneseq
  %v2469 = vshrl.u32 %v2468, 7
  %v2470 = vsub.s32 0, %v2469
  %v2471 = vrot.slane %v2466, %v2470
  %v2474 = vsel %vm125, %v2464, 0
  %2476 = vmatprep.subr.mxu0 0.0
  %2477 = vmatpush1.msra.mxu0 %v2465
  %2478 = vmatprep.subr.mxu0 0.0
  %2479 = vmatpush1.msra.mxu0 0.0
  %2480 = vmatprep.subr.mxu0 0.0
  %2481 = vmatpush1.msra.mxu0 0.0
  %2482 = vmatprep.subr.mxu0 0.0
  %2483 = vmatpush1.msra.mxu0 0.0
  %2484 = vmatprep.subr.mxu0 0.0
  %2485 = vmatpush1.msra.mxu0 0.0
  %2486 = vmatprep.subr.mxu0 0.0
  %2487 = vmatpush1.msra.mxu0 0.0
  %2488 = vmatprep.subr.mxu0 0.0
  %2489 = vmatpush1.msra.mxu0 0.0
  %2490 = vmatprep.subr.mxu0 0.0
  %2491 = vmatpush1.msra.mxu0 0.0
  %2492 = vmatprep.subr.mxu0 0.0
  %2493 = vmatpush1.msra.mxu0 0.0
  %2494 = vmatprep.subr.mxu0 0.0
  %2495 = vmatpush1.msra.mxu0 0.0
  %2496 = vmatprep.subr.mxu0 0.0
  %2497 = vmatpush1.msra.mxu0 0.0
  %2498 = vmatprep.subr.mxu0 0.0
  %2499 = vmatpush1.msra.mxu0 0.0
  %2500 = vmatprep.subr.mxu0 0.0
  %2501 = vmatpush1.msra.mxu0 0.0
  %2502 = vmatprep.subr.mxu0 0.0
  %2503 = vmatpush1.msra.mxu0 0.0
  %2504 = vmatprep.subr.mxu0 0.0
  %2505 = vmatpush1.msra.mxu0 0.0
  %2506 = vmatprep.subr.mxu0 0.0
  %2507 = vmatpush1.msra.mxu0 0.0
  %2508 = vmatprep.subr.mxu0 0.0
  %2509 = vmatpush1.msra.mxu0 0.0
  %2510 = vmatprep.subr.mxu0 0.0
  %2511 = vmatpush1.msra.mxu0 0.0
  %2512 = vmatprep.subr.mxu0 0.0
  %2513 = vmatpush1.msra.mxu0 0.0
  %2514 = vmatprep.subr.mxu0 0.0
  %2515 = vmatpush1.msra.mxu0 0.0
  %2516 = vmatprep.subr.mxu0 0.0
  %2517 = vmatpush1.msra.mxu0 0.0
  %2518 = vmatprep.subr.mxu0 0.0
  %2519 = vmatpush1.msra.mxu0 0.0
  %2520 = vmatprep.subr.mxu0 0.0
  %2521 = vmatpush1.msra.mxu0 0.0
  %2522 = vmatprep.subr.mxu0 0.0
  %2523 = vmatpush1.msra.mxu0 0.0
  %2524 = vmatprep.subr.mxu0 0.0
  %2525 = vmatpush1.msra.mxu0 0.0
  %2526 = vmatprep.subr.mxu0 0.0
  %2527 = vmatpush1.msra.mxu0 0.0
  %2528 = vmatprep.subr.mxu0 0.0
  %2529 = vmatpush1.msra.mxu0 0.0
  %2530 = vmatprep.subr.mxu0 0.0
  %2531 = vmatpush1.msra.mxu0 0.0
  %2532 = vmatprep.subr.mxu0 0.0
  %2533 = vmatpush1.msra.mxu0 0.0
  %2534 = vmatprep.subr.mxu0 0.0
  %2535 = vmatpush1.msra.mxu0 0.0
  %2536 = vmatprep.subr.mxu0 0.0
  %2537 = vmatpush1.msra.mxu0 0.0
  %2538 = vmatprep.subr.mxu0 0.0
  %2539 = vmatpush1.msra.mxu0 0.0
  %2540 = vmatprep.mubr.f32.mxu0 0.0
  %2541 = vmatmul.mubr.f32.gmra.mrb[0].mxu0 %v2474
  %v2542 = vpop.f32.mrb[0].mxu0
  %v2543 = vadd.f32 %v2471, %v2542
  %v2544 = vpop.f32.mrb[0].mxu0
  %2545 = vdwg.mxu0
  %v2546 = vld [vmem:[%s23] sm:$0xff]
  %v2547 = vld [vmem:[%s23 + $0x8] sm:$0xff]
  %v2549 = vsel %vm1352, %v2543, 0
  %2551 = vmatprep.subr.mxu0 0.0
  %2552 = vmatpush1.msra.mxu0 %v2546
  %2553 = vmatprep.subr.mxu0 0.0
  %2554 = vmatpush1.msra.mxu0 %v2547
  %2555 = vmatprep.subr.mxu0 0.0
  %2556 = vmatpush1.msra.mxu0 0.0
  %2557 = vmatprep.subr.mxu0 0.0
  %2558 = vmatpush1.msra.mxu0 0.0
  %2559 = vmatprep.subr.mxu0 0.0
  %2560 = vmatpush1.msra.mxu0 0.0
  %2561 = vmatprep.subr.mxu0 0.0
  %2562 = vmatpush1.msra.mxu0 0.0
  %2563 = vmatprep.subr.mxu0 0.0
  %2564 = vmatpush1.msra.mxu0 0.0
  %2565 = vmatprep.subr.mxu0 0.0
  %2566 = vmatpush1.msra.mxu0 0.0
  %2567 = vmatprep.subr.mxu0 0.0
  %2568 = vmatpush1.msra.mxu0 0.0
  %2569 = vmatprep.subr.mxu0 0.0
  %2570 = vmatpush1.msra.mxu0 0.0
  %2571 = vmatprep.subr.mxu0 0.0
  %2572 = vmatpush1.msra.mxu0 0.0
  %2573 = vmatprep.subr.mxu0 0.0
  %2574 = vmatpush1.msra.mxu0 0.0
  %2575 = vmatprep.subr.mxu0 0.0
  %2576 = vmatpush1.msra.mxu0 0.0
  %2577 = vmatprep.subr.mxu0 0.0
  %2578 = vmatpush1.msra.mxu0 0.0
  %2579 = vmatprep.subr.mxu0 0.0
  %2580 = vmatpush1.msra.mxu0 0.0
  %2581 = vmatprep.subr.mxu0 0.0
  %2582 = vmatpush1.msra.mxu0 0.0
  %2583 = vmatprep.subr.mxu0 0.0
  %2584 = vmatpush1.msra.mxu0 0.0
  %2585 = vmatprep.subr.mxu0 0.0
  %2586 = vmatpush1.msra.mxu0 0.0
  %2587 = vmatprep.subr.mxu0 0.0
  %2588 = vmatpush1.msra.mxu0 0.0
  %2589 = vmatprep.subr.mxu0 0.0
  %2590 = vmatpush1.msra.mxu0 0.0
  %2591 = vmatprep.subr.mxu0 0.0
  %2592 = vmatpush1.msra.mxu0 0.0
  %2593 = vmatprep.subr.mxu0 0.0
  %2594 = vmatpush1.msra.mxu0 0.0
  %2595 = vmatprep.subr.mxu0 0.0
  %2596 = vmatpush1.msra.mxu0 0.0
  %2597 = vmatprep.subr.mxu0 0.0
  %2598 = vmatpush1.msra.mxu0 0.0
  %2599 = vmatprep.subr.mxu0 0.0
  %2600 = vmatpush1.msra.mxu0 0.0
  %2601 = vmatprep.subr.mxu0 0.0
  %2602 = vmatpush1.msra.mxu0 0.0
  %2603 = vmatprep.subr.mxu0 0.0
  %2604 = vmatpush1.msra.mxu0 0.0
  %2605 = vmatprep.subr.mxu0 0.0
  %2606 = vmatpush1.msra.mxu0 0.0
  %2607 = vmatprep.subr.mxu0 0.0
  %2608 = vmatpush1.msra.mxu0 0.0
  %2609 = vmatprep.subr.mxu0 0.0
  %2610 = vmatpush1.msra.mxu0 0.0
  %2611 = vmatprep.subr.mxu0 0.0
  %2612 = vmatpush1.msra.mxu0 0.0
  %2613 = vmatprep.subr.mxu0 0.0
  %2614 = vmatpush1.msra.mxu0 0.0
  %2615 = vmatprep.mubr.f32.mxu0 0.0
  %2616 = vmatmul.mubr.f32.gmra.mrb[0].mxu0 %v2549
  %v2617 = vpop.f32.mrb[0].mxu0
  %v2618 = vadd.f32 0.0, %v2617
  %v2619 = vpop.f32.mrb[0].mxu0
  %2620 = vdwg.mxu0
  %v2621 = vadd.f32 %v2464, %v2618
  %v2622 = vld [vmem:[%s24] sm:$0x1]
  %v2624 = vlaneseq
  %v2625 = vshrl.u32 %v2624, 7
  %v2626 = vsub.s32 0, %v2625
  %v2627 = vrot.slane %v2622, %v2626
  %v2629 = vadd.f32 %v2621, %v2627
  %v2630 = vld [vmem:[%s25] sm:$0xff]
  %v2631 = vld [vmem:[%s26] sm:$0x1]
  %v2633 = vlaneseq
  %v2634 = vshrl.u32 %v2633, 7
  %v2635 = vsub.s32 0, %v2634
  %v2636 = vrot.slane %v2631, %v2635
  %v2639 = vsel %vm125, %v2629, 0
  %2641 = vmatprep.subr.mxu0 0.0
  %2642 = vmatpush1.msra.mxu0 %v2630
  %2643 = vmatprep.subr.mxu0 0.0
  %2644 = vmatpush1.msra.mxu0 0.0
  %2645 = vmatprep.subr.mxu0 0.0
  %2646 = vmatpush1.msra.mxu0 0.0
  %2647 = vmatprep.subr.mxu0 0.0
  %2648 = vmatpush1.msra.mxu0 0.0
  %2649 = vmatprep.subr.mxu0 0.0
  %2650 = vmatpush1.msra.mxu0 0.0
  %2651 = vmatprep.subr.mxu0 0.0
  %2652 = vmatpush1.msra.mxu0 0.0
  %2653 = vmatprep.subr.mxu0 0.0
  %2654 = vmatpush1.msra.mxu0 0.0
  %2655 = vmatprep.subr.mxu0 0.0
  %2656 = vmatpush1.msra.mxu0 0.0
  %2657 = vmatprep.subr.mxu0 0.0
  %2658 = vmatpush1.msra.mxu0 0.0
  %2659 = vmatprep.subr.mxu0 0.0
  %2660 = vmatpush1.msra.mxu0 0.0
  %2661 = vmatprep.subr.mxu0 0.0
  %2662 = vmatpush1.msra.mxu0 0.0
  %2663 = vmatprep.subr.mxu0 0.0
  %2664 = vmatpush1.msra.mxu0 0.0
  %2665 = vmatprep.subr.mxu0 0.0
  %2666 = vmatpush1.msra.mxu0 0.0
  %2667 = vmatprep.subr.mxu0 0.0
  %2668 = vmatpush1.msra.mxu0 0.0
  %2669 = vmatprep.subr.mxu0 0.0
  %2670 = vmatpush1.msra.mxu0 0.0
  %2671 = vmatprep.subr.mxu0 0.0
  %2672 = vmatpush1.msra.mxu0 0.0
  %2673 = vmatprep.subr.mxu0 0.0
  %2674 = vmatpush1.msra.mxu0 0.0
  %2675 = vmatprep.subr.mxu0 0.0
  %2676 = vmatpush1.msra.mxu0 0.0
  %2677 = vmatprep.subr.mxu0 0.0
  %2678 = vmatpush1.msra.mxu0 0.0
  %2679 = vmatprep.subr.mxu0 0.0
  %2680 = vmatpush1.msra.mxu0 0.0
  %2681 = vmatprep.subr.mxu0 0.0
  %2682 = vmatpush1.msra.mxu0 0.0
  %2683 = vmatprep.subr.mxu0 0.0
  %2684 = vmatpush1.msra.mxu0 0.0
  %2685 = vmatprep.subr.mxu0 0.0
  %2686 = vmatpush1.msra.mxu0 0.0
  %2687 = vmatprep.subr.mxu0 0.0
  %2688 = vmatpush1.msra.mxu0 0.0
  %2689 = vmatprep.subr.mxu0 0.0
  %2690 = vmatpush1.msra.mxu0 0.0
  %2691 = vmatprep.subr.mxu0 0.0
  %2692 = vmatpush1.msra.mxu0 0.0
  %2693 = vmatprep.subr.mxu0 0.0
  %2694 = vmatpush1.msra.mxu0 0.0
  %2695 = vmatprep.subr.mxu0 0.0
  %2696 = vmatpush1.msra.mxu0 0.0
  %2697 = vmatprep.subr.mxu0 0.0
  %2698 = vmatpush1.msra.mxu0 0.0
  %2699 = vmatprep.subr.mxu0 0.0
  %2700 = vmatpush1.msra.mxu0 0.0
  %2701 = vmatprep.subr.mxu0 0.0
  %2702 = vmatpush1.msra.mxu0 0.0
  %2703 = vmatprep.subr.mxu0 0.0
  %2704 = vmatpush1.msra.mxu0 0.0
  %2705 = vmatprep.mubr.f32.mxu0 0.0
  %2706 = vmatmul.mubr.f32.gmra.mrb[0].mxu0 %v2639
  %v2707 = vpop.f32.mrb[0].mxu0
  %v2708 = vadd.f32 %v2636, %v2707
  %v2709 = vpop.f32.mrb[0].mxu0
  %2710 = vdwg.mxu0
  %v2711 = vsub.f32 0.0, %v2708
  %v2712 = vmul.f32 %v2711, 1.442695
  %v2713 = vpow.pop %v2712
  %v2714 = vadd.f32 %v2713, 1.0
  %v2715 = vrcp.pop %v2714
  %v2716 = vmul.f32 1.0, %v2715
  %vm2717 = vcmask 25600
  %2718 = vst.msk [vmem:[%s27] sm:$0x3] %vm2717, %v2716
  %2720 = vrot.lane.b32.xlu0 %v1630, 120
  %v2721 = vpop.permute.xlu0 %2720
  %v2723 = vadd.f32 %v111, %v2721
  %s2724 = scalar_lea.vmem %s17, 8
  %v2725 = vld [vmem:[%s2724] sm:$0xff]
  %s2726 = scalar_lea.vmem %s18, 1
  %v2727 = vld [vmem:[%s2726] sm:$0x1]
  %v2729 = vlaneseq
  %v2730 = vshrl.u32 %v2729, 7
  %v2731 = vsub.s32 0, %v2730
  %v2732 = vrot.slane %v2727, %v2731
  %v2735 = vsel %vm125, %v2723, 0
  %2737 = vmatprep.subr.mxu0 0.0
  %2738 = vmatpush1.msra.mxu0 %v2725
  %2739 = vmatprep.subr.mxu0 0.0
  %2740 = vmatpush1.msra.mxu0 0.0
  %2741 = vmatprep.subr.mxu0 0.0
  %2742 = vmatpush1.msra.mxu0 0.0
  %2743 = vmatprep.subr.mxu0 0.0
  %2744 = vmatpush1.msra.mxu0 0.0
  %2745 = vmatprep.subr.mxu0 0.0
  %2746 = vmatpush1.msra.mxu0 0.0
  %2747 = vmatprep.subr.mxu0 0.0
  %2748 = vmatpush1.msra.mxu0 0.0
  %2749 = vmatprep.subr.mxu0 0.0
  %2750 = vmatpush1.msra.mxu0 0.0
  %2751 = vmatprep.subr.mxu0 0.0
  %2752 = vmatpush1.msra.mxu0 0.0
  %2753 = vmatprep.subr.mxu0 0.0
  %2754 = vmatpush1.msra.mxu0 0.0
  %2755 = vmatprep.subr.mxu0 0.0
  %2756 = vmatpush1.msra.mxu0 0.0
  %2757 = vmatprep.subr.mxu0 0.0
  %2758 = vmatpush1.msra.mxu0 0.0
  %2759 = vmatprep.subr.mxu0 0.0
  %2760 = vmatpush1.msra.mxu0 0.0
  %2761 = vmatprep.subr.mxu0 0.0
  %2762 = vmatpush1.msra.mxu0 0.0
  %2763 = vmatprep.subr.mxu0 0.0
  %2764 = vmatpush1.msra.mxu0 0.0
  %2765 = vmatprep.subr.mxu0 0.0
  %2766 = vmatpush1.msra.mxu0 0.0
  %2767 = vmatprep.subr.mxu0 0.0
  %2768 = vmatpush1.msra.mxu0 0.0
  %2769 = vmatprep.subr.mxu0 0.0
  %2770 = vmatpush1.msra.mxu0 0.0
  %2771 = vmatprep.subr.mxu0 0.0
  %2772 = vmatpush1.msra.mxu0 0.0
  %2773 = vmatprep.subr.mxu0 0.0
  %2774 = vmatpush1.msra.mxu0 0.0
  %2775 = vmatprep.subr.mxu0 0.0
  %2776 = vmatpush1.msra.mxu0 0.0
  %2777 = vmatprep.subr.mxu0 0.0
  %2778 = vmatpush1.msra.mxu0 0.0
  %2779 = vmatprep.subr.mxu0 0.0
  %2780 = vmatpush1.msra.mxu0 0.0
  %2781 = vmatprep.subr.mxu0 0.0
  %2782 = vmatpush1.msra.mxu0 0.0
  %2783 = vmatprep.subr.mxu0 0.0
  %2784 = vmatpush1.msra.mxu0 0.0
  %2785 = vmatprep.subr.mxu0 0.0
  %2786 = vmatpush1.msra.mxu0 0.0
  %2787 = vmatprep.subr.mxu0 0.0
  %2788 = vmatpush1.msra.mxu0 0.0
  %2789 = vmatprep.subr.mxu0 0.0
  %2790 = vmatpush1.msra.mxu0 0.0
  %2791 = vmatprep.subr.mxu0 0.0
  %2792 = vmatpush1.msra.mxu0 0.0
  %2793 = vmatprep.subr.mxu0 0.0
  %2794 = vmatpush1.msra.mxu0 0.0
  %2795 = vmatprep.subr.mxu0 0.0
  %2796 = vmatpush1.msra.mxu0 0.0
  %2797 = vmatprep.subr.mxu0 0.0
  %2798 = vmatpush1.msra.mxu0 0.0
  %2799 = vmatprep.subr.mxu0 0.0
  %2800 = vmatpush1.msra.mxu0 0.0
  %2801 = vmatprep.mubr.f32.mxu0 0.0
  %2802 = vmatmul.mubr.f32.gmra.mrb[0].mxu0 %v2735
  %v2803 = vpop.f32.mrb[0].mxu0
  %v2804 = vadd.f32 %v2732, %v2803
  %v2805 = vpop.f32.mrb[0].mxu0
  %2806 = vdwg.mxu0
  %v2807 = vmul.f32 %v2804, 0.70710677
  %v2808 = vmul.f32 %v2807, %v92
  %v2809 = vmul.f32 %v2807, %v97
  %v2810 = vmul.f32 %v2807, %v102
  %v2811 = vmul.f32 %v2807, %v107
  %2812 = vrot.lane.b32.xlu0 %v1539, 112
  %v2813 = vpop.permute.xlu0 %2812
  %2814 = vrot.lane.b32.xlu0 %v1544, 112
  %v2815 = vpop.permute.xlu0 %2814
  %2816 = vrot.lane.b32.xlu0 %v1549, 112
  %v2817 = vpop.permute.xlu0 %2816
  %v2819 = vsel %vm125, %v2808, 0
  %v2821 = vsel %vm125, %v2813, 0
  %v2823 = vsel %vm125, %v2815, 0
  %v2825 = vsel %vm125, %v2817, 0
  %2827 = vmatprep.subr.mxu0 0.0
  %2828 = vmatpush1.xpose.msra.mxu0 %v2821
  %2829 = vmatprep.subr.mxu0 0.0
  %2830 = vmatpush1.xpose.msra.mxu0 %v2823
  %2831 = vmatprep.subr.mxu0 0.0
  %2832 = vmatpush1.xpose.msra.mxu0 %v2825
  %2833 = vmatprep.subr.mxu0 0.0
  %2834 = vmatpush1.xpose.msra.mxu0 0.0
  %2835 = vmatprep.subr.mxu0 0.0
  %2836 = vmatpush1.xpose.msra.mxu0 0.0
  %2837 = vmatprep.subr.mxu0 0.0
  %2838 = vmatpush1.xpose.msra.mxu0 0.0
  %2839 = vmatprep.subr.mxu0 0.0
  %2840 = vmatpush1.xpose.msra.mxu0 0.0
  %2841 = vmatprep.subr.mxu0 0.0
  %2842 = vmatpush1.xpose.msra.mxu0 0.0
  %2843 = vmatprep.subr.mxu0 0.0
  %2844 = vmatpush1.xpose.msra.mxu0 0.0
  %2845 = vmatprep.subr.mxu0 0.0
  %2846 = vmatpush1.xpose.msra.mxu0 0.0
  %2847 = vmatprep.subr.mxu0 0.0
  %2848 = vmatpush1.xpose.msra.mxu0 0.0
  %2849 = vmatprep.subr.mxu0 0.0
  %2850 = vmatpush1.xpose.msra.mxu0 0.0
  %2851 = vmatprep.subr.mxu0 0.0
  %2852 = vmatpush1.xpose.msra.mxu0 0.0
  %2853 = vmatprep.subr.mxu0 0.0
  %2854 = vmatpush1.xpose.msra.mxu0 0.0
  %2855 = vmatprep.subr.mxu0 0.0
  %2856 = vmatpush1.xpose.msra.mxu0 0.0
  %2857 = vmatprep.subr.mxu0 0.0
  %2858 = vmatpush1.xpose.msra.mxu0 0.0
  %2859 = vmatprep.subr.mxu0 0.0
  %2860 = vmatpush1.xpose.msra.mxu0 0.0
  %2861 = vmatprep.subr.mxu0 0.0
  %2862 = vmatpush1.xpose.msra.mxu0 0.0
  %2863 = vmatprep.subr.mxu0 0.0
  %2864 = vmatpush1.xpose.msra.mxu0 0.0
  %2865 = vmatprep.subr.mxu0 0.0
  %2866 = vmatpush1.xpose.msra.mxu0 0.0
  %2867 = vmatprep.subr.mxu0 0.0
  %2868 = vmatpush1.xpose.msra.mxu0 0.0
  %2869 = vmatprep.subr.mxu0 0.0
  %2870 = vmatpush1.xpose.msra.mxu0 0.0
  %2871 = vmatprep.subr.mxu0 0.0
  %2872 = vmatpush1.xpose.msra.mxu0 0.0
  %2873 = vmatprep.subr.mxu0 0.0
  %2874 = vmatpush1.xpose.msra.mxu0 0.0
  %2875 = vmatprep.subr.mxu0 0.0
  %2876 = vmatpush1.xpose.msra.mxu0 0.0
  %2877 = vmatprep.subr.mxu0 0.0
  %2878 = vmatpush1.xpose.msra.mxu0 0.0
  %2879 = vmatprep.subr.mxu0 0.0
  %2880 = vmatpush1.xpose.msra.mxu0 0.0
  %2881 = vmatprep.subr.mxu0 0.0
  %2882 = vmatpush1.xpose.msra.mxu0 0.0
  %2883 = vmatprep.subr.mxu0 0.0
  %2884 = vmatpush1.xpose.msra.mxu0 0.0
  %2885 = vmatprep.subr.mxu0 0.0
  %2886 = vmatpush1.xpose.msra.mxu0 0.0
  %2887 = vmatprep.subr.mxu0 0.0
  %2888 = vmatpush1.xpose.msra.mxu0 0.0
  %2889 = vmatprep.subr.mxu0 0.0
  %2890 = vmatpush1.xpose.msra.mxu0 0.0
  %2891 = vmatprep.mubr.f32.mxu0 0.0
  %2892 = vmatmul.mubr.f32.gmra.mrb[0].mxu0 %v2819
  %v2893 = vpop.f32.mrb[0].mxu0
  %v2894 = vadd.f32 %v1726, %v2893
  %v2895 = vpop.f32.mrb[0].mxu0
  %2896 = vdwg.mxu0
  %v2898 = vsel %vm125, %v2809, 0
  %2900 = vmatprep.subr.mxu0 0.0
  %2901 = vmatpush1.xpose.msra.mxu0 %v2821
  %2902 = vmatprep.subr.mxu0 0.0
  %2903 = vmatpush1.xpose.msra.mxu0 %v2823
  %2904 = vmatprep.subr.mxu0 0.0
  %2905 = vmatpush1.xpose.msra.mxu0 %v2825
  %2906 = vmatprep.subr.mxu0 0.0
  %2907 = vmatpush1.xpose.msra.mxu0 0.0
  %2908 = vmatprep.subr.mxu0 0.0
  %2909 = vmatpush1.xpose.msra.mxu0 0.0
  %2910 = vmatprep.subr.mxu0 0.0
  %2911 = vmatpush1.xpose.msra.mxu0 0.0
  %2912 = vmatprep.subr.mxu0 0.0
  %2913 = vmatpush1.xpose.msra.mxu0 0.0
  %2914 = vmatprep.subr.mxu0 0.0
  %2915 = vmatpush1.xpose.msra.mxu0 0.0
  %2916 = vmatprep.subr.mxu0 0.0
  %2917 = vmatpush1.xpose.msra.mxu0 0.0
  %2918 = vmatprep.subr.mxu0 0.0
  %2919 = vmatpush1.xpose.msra.mxu0 0.0
  %2920 = vmatprep.subr.mxu0 0.0
  %2921 = vmatpush1.xpose.msra.mxu0 0.0
  %2922 = vmatprep.subr.mxu0 0.0
  %2923 = vmatpush1.xpose.msra.mxu0 0.0
  %2924 = vmatprep.subr.mxu0 0.0
  %2925 = vmatpush1.xpose.msra.mxu0 0.0
  %2926 = vmatprep.subr.mxu0 0.0
  %2927 = vmatpush1.xpose.msra.mxu0 0.0
  %2928 = vmatprep.subr.mxu0 0.0
  %2929 = vmatpush1.xpose.msra.mxu0 0.0
  %2930 = vmatprep.subr.mxu0 0.0
  %2931 = vmatpush1.xpose.msra.mxu0 0.0
  %2932 = vmatprep.subr.mxu0 0.0
  %2933 = vmatpush1.xpose.msra.mxu0 0.0
  %2934 = vmatprep.subr.mxu0 0.0
  %2935 = vmatpush1.xpose.msra.mxu0 0.0
  %2936 = vmatprep.subr.mxu0 0.0
  %2937 = vmatpush1.xpose.msra.mxu0 0.0
  %2938 = vmatprep.subr.mxu0 0.0
  %2939 = vmatpush1.xpose.msra.mxu0 0.0
  %2940 = vmatprep.subr.mxu0 0.0
  %2941 = vmatpush1.xpose.msra.mxu0 0.0
  %2942 = vmatprep.subr.mxu0 0.0
  %2943 = vmatpush1.xpose.msra.mxu0 0.0
  %2944 = vmatprep.subr.mxu0 0.0
  %2945 = vmatpush1.xpose.msra.mxu0 0.0
  %2946 = vmatprep.subr.mxu0 0.0
  %2947 = vmatpush1.xpose.msra.mxu0 0.0
  %2948 = vmatprep.subr.mxu0 0.0
  %2949 = vmatpush1.xpose.msra.mxu0 0.0
  %2950 = vmatprep.subr.mxu0 0.0
  %2951 = vmatpush1.xpose.msra.mxu0 0.0
  %2952 = vmatprep.subr.mxu0 0.0
  %2953 = vmatpush1.xpose.msra.mxu0 0.0
  %2954 = vmatprep.subr.mxu0 0.0
  %2955 = vmatpush1.xpose.msra.mxu0 0.0
  %2956 = vmatprep.subr.mxu0 0.0
  %2957 = vmatpush1.xpose.msra.mxu0 0.0
  %2958 = vmatprep.subr.mxu0 0.0
  %2959 = vmatpush1.xpose.msra.mxu0 0.0
  %2960 = vmatprep.subr.mxu0 0.0
  %2961 = vmatpush1.xpose.msra.mxu0 0.0
  %2962 = vmatprep.subr.mxu0 0.0
  %2963 = vmatpush1.xpose.msra.mxu0 0.0
  %2964 = vmatprep.mubr.f32.mxu0 0.0
  %2965 = vmatmul.mubr.f32.gmra.mrb[0].mxu0 %v2898
  %v2966 = vpop.f32.mrb[0].mxu0
  %v2967 = vadd.f32 %v1726, %v2966
  %v2968 = vpop.f32.mrb[0].mxu0
  %2969 = vdwg.mxu0
  %v2971 = vsel %vm125, %v2810, 0
  %2973 = vmatprep.subr.mxu0 0.0
  %2974 = vmatpush1.xpose.msra.mxu0 %v2821
  %2975 = vmatprep.subr.mxu0 0.0
  %2976 = vmatpush1.xpose.msra.mxu0 %v2823
  %2977 = vmatprep.subr.mxu0 0.0
  %2978 = vmatpush1.xpose.msra.mxu0 %v2825
  %2979 = vmatprep.subr.mxu0 0.0
  %2980 = vmatpush1.xpose.msra.mxu0 0.0
  %2981 = vmatprep.subr.mxu0 0.0
  %2982 = vmatpush1.xpose.msra.mxu0 0.0
  %2983 = vmatprep.subr.mxu0 0.0
  %2984 = vmatpush1.xpose.msra.mxu0 0.0
  %2985 = vmatprep.subr.mxu0 0.0
  %2986 = vmatpush1.xpose.msra.mxu0 0.0
  %2987 = vmatprep.subr.mxu0 0.0
  %2988 = vmatpush1.xpose.msra.mxu0 0.0
  %2989 = vmatprep.subr.mxu0 0.0
  %2990 = vmatpush1.xpose.msra.mxu0 0.0
  %2991 = vmatprep.subr.mxu0 0.0
  %2992 = vmatpush1.xpose.msra.mxu0 0.0
  %2993 = vmatprep.subr.mxu0 0.0
  %2994 = vmatpush1.xpose.msra.mxu0 0.0
  %2995 = vmatprep.subr.mxu0 0.0
  %2996 = vmatpush1.xpose.msra.mxu0 0.0
  %2997 = vmatprep.subr.mxu0 0.0
  %2998 = vmatpush1.xpose.msra.mxu0 0.0
  %2999 = vmatprep.subr.mxu0 0.0
  %3000 = vmatpush1.xpose.msra.mxu0 0.0
  %3001 = vmatprep.subr.mxu0 0.0
  %3002 = vmatpush1.xpose.msra.mxu0 0.0
  %3003 = vmatprep.subr.mxu0 0.0
  %3004 = vmatpush1.xpose.msra.mxu0 0.0
  %3005 = vmatprep.subr.mxu0 0.0
  %3006 = vmatpush1.xpose.msra.mxu0 0.0
  %3007 = vmatprep.subr.mxu0 0.0
  %3008 = vmatpush1.xpose.msra.mxu0 0.0
  %3009 = vmatprep.subr.mxu0 0.0
  %3010 = vmatpush1.xpose.msra.mxu0 0.0
  %3011 = vmatprep.subr.mxu0 0.0
  %3012 = vmatpush1.xpose.msra.mxu0 0.0
  %3013 = vmatprep.subr.mxu0 0.0
  %3014 = vmatpush1.xpose.msra.mxu0 0.0
  %3015 = vmatprep.subr.mxu0 0.0
  %3016 = vmatpush1.xpose.msra.mxu0 0.0
  %3017 = vmatprep.subr.mxu0 0.0
  %3018 = vmatpush1.xpose.msra.mxu0 0.0
  %3019 = vmatprep.subr.mxu0 0.0
  %3020 = vmatpush1.xpose.msra.mxu0 0.0
  %3021 = vmatprep.subr.mxu0 0.0
  %3022 = vmatpush1.xpose.msra.mxu0 0.0
  %3023 = vmatprep.subr.mxu0 0.0
  %3024 = vmatpush1.xpose.msra.mxu0 0.0
  %3025 = vmatprep.subr.mxu0 0.0
  %3026 = vmatpush1.xpose.msra.mxu0 0.0
  %3027 = vmatprep.subr.mxu0 0.0
  %3028 = vmatpush1.xpose.msra.mxu0 0.0
  %3029 = vmatprep.subr.mxu0 0.0
  %3030 = vmatpush1.xpose.msra.mxu0 0.0
  %3031 = vmatprep.subr.mxu0 0.0
  %3032 = vmatpush1.xpose.msra.mxu0 0.0
  %3033 = vmatprep.subr.mxu0 0.0
  %3034 = vmatpush1.xpose.msra.mxu0 0.0
  %3035 = vmatprep.subr.mxu0 0.0
  %3036 = vmatpush1.xpose.msra.mxu0 0.0
  %3037 = vmatprep.mubr.f32.mxu0 0.0
  %3038 = vmatmul.mubr.f32.gmra.mrb[0].mxu0 %v2971
  %v3039 = vpop.f32.mrb[0].mxu0
  %v3040 = vadd.f32 %v1726, %v3039
  %v3041 = vpop.f32.mrb[0].mxu0
  %3042 = vdwg.mxu0
  %v3044 = vsel %vm125, %v2811, 0
  %3046 = vmatprep.subr.mxu0 0.0
  %3047 = vmatpush1.xpose.msra.mxu0 %v2821
  %3048 = vmatprep.subr.mxu0 0.0
  %3049 = vmatpush1.xpose.msra.mxu0 %v2823
  %3050 = vmatprep.subr.mxu0 0.0
  %3051 = vmatpush1.xpose.msra.mxu0 %v2825
  %3052 = vmatprep.subr.mxu0 0.0
  %3053 = vmatpush1.xpose.msra.mxu0 0.0
  %3054 = vmatprep.subr.mxu0 0.0
  %3055 = vmatpush1.xpose.msra.mxu0 0.0
  %3056 = vmatprep.subr.mxu0 0.0
  %3057 = vmatpush1.xpose.msra.mxu0 0.0
  %3058 = vmatprep.subr.mxu0 0.0
  %3059 = vmatpush1.xpose.msra.mxu0 0.0
  %3060 = vmatprep.subr.mxu0 0.0
  %3061 = vmatpush1.xpose.msra.mxu0 0.0
  %3062 = vmatprep.subr.mxu0 0.0
  %3063 = vmatpush1.xpose.msra.mxu0 0.0
  %3064 = vmatprep.subr.mxu0 0.0
  %3065 = vmatpush1.xpose.msra.mxu0 0.0
  %3066 = vmatprep.subr.mxu0 0.0
  %3067 = vmatpush1.xpose.msra.mxu0 0.0
  %3068 = vmatprep.subr.mxu0 0.0
  %3069 = vmatpush1.xpose.msra.mxu0 0.0
  %3070 = vmatprep.subr.mxu0 0.0
  %3071 = vmatpush1.xpose.msra.mxu0 0.0
  %3072 = vmatprep.subr.mxu0 0.0
  %3073 = vmatpush1.xpose.msra.mxu0 0.0
  %3074 = vmatprep.subr.mxu0 0.0
  %3075 = vmatpush1.xpose.msra.mxu0 0.0
  %3076 = vmatprep.subr.mxu0 0.0
  %3077 = vmatpush1.xpose.msra.mxu0 0.0
  %3078 = vmatprep.subr.mxu0 0.0
  %3079 = vmatpush1.xpose.msra.mxu0 0.0
  %3080 = vmatprep.subr.mxu0 0.0
  %3081 = vmatpush1.xpose.msra.mxu0 0.0
  %3082 = vmatprep.subr.mxu0 0.0
  %3083 = vmatpush1.xpose.msra.mxu0 0.0
  %3084 = vmatprep.subr.mxu0 0.0
  %3085 = vmatpush1.xpose.msra.mxu0 0.0
  %3086 = vmatprep.subr.mxu0 0.0
  %3087 = vmatpush1.xpose.msra.mxu0 0.0
  %3088 = vmatprep.subr.mxu0 0.0
  %3089 = vmatpush1.xpose.msra.mxu0 0.0
  %3090 = vmatprep.subr.mxu0 0.0
  %3091 = vmatpush1.xpose.msra.mxu0 0.0
  %3092 = vmatprep.subr.mxu0 0.0
  %3093 = vmatpush1.xpose.msra.mxu0 0.0
  %3094 = vmatprep.subr.mxu0 0.0
  %3095 = vmatpush1.xpose.msra.mxu0 0.0
  %3096 = vmatprep.subr.mxu0 0.0
  %3097 = vmatpush1.xpose.msra.mxu0 0.0
  %3098 = vmatprep.subr.mxu0 0.0
  %3099 = vmatpush1.xpose.msra.mxu0 0.0
  %3100 = vmatprep.subr.mxu0 0.0
  %3101 = vmatpush1.xpose.msra.mxu0 0.0
  %3102 = vmatprep.subr.mxu0 0.0
  %3103 = vmatpush1.xpose.msra.mxu0 0.0
  %3104 = vmatprep.subr.mxu0 0.0
  %3105 = vmatpush1.xpose.msra.mxu0 0.0
  %3106 = vmatprep.subr.mxu0 0.0
  %3107 = vmatpush1.xpose.msra.mxu0 0.0
  %3108 = vmatprep.subr.mxu0 0.0
  %3109 = vmatpush1.xpose.msra.mxu0 0.0
  %3110 = vmatprep.mubr.f32.mxu0 0.0
  %3111 = vmatmul.mubr.f32.gmra.mrb[0].mxu0 %v3044
  %v3112 = vpop.f32.mrb[0].mxu0
  %v3113 = vadd.f32 %v1726, %v3112
  %v3114 = vpop.f32.mrb[0].mxu0
  %3115 = vdwg.mxu0
  %v3116 = vsel %vm2028, %v2894, -inf
  %3117 = vmax.xlane.f32.xlu0 %v3116
  %v3118 = vpop.xlane.xlu0 %3117
  %v3119 = vsel %vm2028, %v2967, -inf
  %3120 = vmax.xlane.f32.xlu0 %v3119
  %v3121 = vpop.xlane.xlu0 %3120
  %v3122 = vsel %vm2028, %v3040, -inf
  %3123 = vmax.xlane.f32.xlu0 %v3122
  %v3124 = vpop.xlane.xlu0 %3123
  %v3125 = vsel %vm2028, %v3113, -inf
  %3126 = vmax.xlane.f32.xlu0 %v3125
  %v3127 = vpop.xlane.xlu0 %3126
  %v3128 = vsub.f32 %v2894, %v3118
  %v3129 = vsub.f32 %v2967, %v3121
  %v3130 = vsub.f32 %v3040, %v3124
  %v3131 = vsub.f32 %v3113, %v3127
  %v3132 = vmul.f32 %v3128, 1.442695
  %v3133 = vpow.pop %v3132
  %v3134 = vmul.f32 %v3129, 1.442695
  %v3135 = vpow.pop %v3134
  %v3136 = vmul.f32 %v3130, 1.442695
  %v3137 = vpow.pop %v3136
  %v3138 = vmul.f32 %v3131, 1.442695
  %v3139 = vpow.pop %v3138
  %v3140 = vsel %vm2028, %v3133, 0.0
  %3141 = vadd.xlane.f32.xlu0 %v3140
  %v3142 = vpop.xlane.xlu0 %3141
  %v3143 = vsel %vm2028, %v3135, 0.0
  %3144 = vadd.xlane.f32.xlu0 %v3143
  %v3145 = vpop.xlane.xlu0 %3144
  %v3146 = vsel %vm2028, %v3137, 0.0
  %3147 = vadd.xlane.f32.xlu0 %v3146
  %v3148 = vpop.xlane.xlu0 %3147
  %v3149 = vsel %vm2028, %v3139, 0.0
  %3150 = vadd.xlane.f32.xlu0 %v3149
  %v3151 = vpop.xlane.xlu0 %3150
  %v3152 = vrcp.pop %v3142
  %v3153 = vrcp.pop %v3145
  %v3154 = vrcp.pop %v3148
  %v3155 = vrcp.pop %v3151
  %v3156 = vmul.f32 %v3133, %v3152
  %v3157 = vmul.f32 %v3135, %v3153
  %v3158 = vmul.f32 %v3137, %v3154
  %v3159 = vmul.f32 %v3139, %v3155
  %3160 = vrot.lane.b32.xlu0 %v1539, 104
  %v3161 = vpop.permute.xlu0 %3160
  %3162 = vrot.lane.b32.xlu0 %v1544, 104
  %v3163 = vpop.permute.xlu0 %3162
  %3164 = vrot.lane.b32.xlu0 %v1549, 104
  %v3165 = vpop.permute.xlu0 %3164
  %v3169 = vsel %vm628, %v3156, 0
  %v3171 = vsel %vm779, %v3165, 0
  %3173 = vmatprep.subr.mxu0 0.0
  %3174 = vmatpush1.msra.mxu0 %v3161
  %3175 = vmatprep.subr.mxu0 0.0
  %3176 = vmatpush1.msra.mxu0 %v3163
  %3177 = vmatprep.subr.mxu0 0.0
  %3178 = vmatpush1.msra.mxu0 %v3171
  %3179 = vmatprep.subr.mxu0 0.0
  %3180 = vmatpush1.msra.mxu0 0.0
  %3181 = vmatprep.subr.mxu0 0.0
  %3182 = vmatpush1.msra.mxu0 0.0
  %3183 = vmatprep.subr.mxu0 0.0
  %3184 = vmatpush1.msra.mxu0 0.0
  %3185 = vmatprep.subr.mxu0 0.0
  %3186 = vmatpush1.msra.mxu0 0.0
  %3187 = vmatprep.subr.mxu0 0.0
  %3188 = vmatpush1.msra.mxu0 0.0
  %3189 = vmatprep.subr.mxu0 0.0
  %3190 = vmatpush1.msra.mxu0 0.0
  %3191 = vmatprep.subr.mxu0 0.0
  %3192 = vmatpush1.msra.mxu0 0.0
  %3193 = vmatprep.subr.mxu0 0.0
  %3194 = vmatpush1.msra.mxu0 0.0
  %3195 = vmatprep.subr.mxu0 0.0
  %3196 = vmatpush1.msra.mxu0 0.0
  %3197 = vmatprep.subr.mxu0 0.0
  %3198 = vmatpush1.msra.mxu0 0.0
  %3199 = vmatprep.subr.mxu0 0.0
  %3200 = vmatpush1.msra.mxu0 0.0
  %3201 = vmatprep.subr.mxu0 0.0
  %3202 = vmatpush1.msra.mxu0 0.0
  %3203 = vmatprep.subr.mxu0 0.0
  %3204 = vmatpush1.msra.mxu0 0.0
  %3205 = vmatprep.subr.mxu0 0.0
  %3206 = vmatpush1.msra.mxu0 0.0
  %3207 = vmatprep.subr.mxu0 0.0
  %3208 = vmatpush1.msra.mxu0 0.0
  %3209 = vmatprep.subr.mxu0 0.0
  %3210 = vmatpush1.msra.mxu0 0.0
  %3211 = vmatprep.subr.mxu0 0.0
  %3212 = vmatpush1.msra.mxu0 0.0
  %3213 = vmatprep.subr.mxu0 0.0
  %3214 = vmatpush1.msra.mxu0 0.0
  %3215 = vmatprep.subr.mxu0 0.0
  %3216 = vmatpush1.msra.mxu0 0.0
  %3217 = vmatprep.subr.mxu0 0.0
  %3218 = vmatpush1.msra.mxu0 0.0
  %3219 = vmatprep.subr.mxu0 0.0
  %3220 = vmatpush1.msra.mxu0 0.0
  %3221 = vmatprep.subr.mxu0 0.0
  %3222 = vmatpush1.msra.mxu0 0.0
  %3223 = vmatprep.subr.mxu0 0.0
  %3224 = vmatpush1.msra.mxu0 0.0
  %3225 = vmatprep.subr.mxu0 0.0
  %3226 = vmatpush1.msra.mxu0 0.0
  %3227 = vmatprep.subr.mxu0 0.0
  %3228 = vmatpush1.msra.mxu0 0.0
  %3229 = vmatprep.subr.mxu0 0.0
  %3230 = vmatpush1.msra.mxu0 0.0
  %3231 = vmatprep.subr.mxu0 0.0
  %3232 = vmatpush1.msra.mxu0 0.0
  %3233 = vmatprep.subr.mxu0 0.0
  %3234 = vmatpush1.msra.mxu0 0.0
  %3235 = vmatprep.subr.mxu0 0.0
  %3236 = vmatpush1.msra.mxu0 0.0
  %3237 = vmatprep.mubr.f32.mxu0 0.0
  %3238 = vmatmul.mubr.f32.gmra.mrb[0].mxu0 %v3169
  %v3239 = vpop.f32.mrb[0].mxu0
  %v3240 = vadd.f32 0.0, %v3239
  %v3241 = vpop.f32.mrb[0].mxu0
  %3242 = vdwg.mxu0
  %v3244 = vsel %vm628, %v3157, 0
  %3246 = vmatprep.subr.mxu0 0.0
  %3247 = vmatpush1.msra.mxu0 %v3161
  %3248 = vmatprep.subr.mxu0 0.0
  %3249 = vmatpush1.msra.mxu0 %v3163
  %3250 = vmatprep.subr.mxu0 0.0
  %3251 = vmatpush1.msra.mxu0 %v3171
  %3252 = vmatprep.subr.mxu0 0.0
  %3253 = vmatpush1.msra.mxu0 0.0
  %3254 = vmatprep.subr.mxu0 0.0
  %3255 = vmatpush1.msra.mxu0 0.0
  %3256 = vmatprep.subr.mxu0 0.0
  %3257 = vmatpush1.msra.mxu0 0.0
  %3258 = vmatprep.subr.mxu0 0.0
  %3259 = vmatpush1.msra.mxu0 0.0
  %3260 = vmatprep.subr.mxu0 0.0
  %3261 = vmatpush1.msra.mxu0 0.0
  %3262 = vmatprep.subr.mxu0 0.0
  %3263 = vmatpush1.msra.mxu0 0.0
  %3264 = vmatprep.subr.mxu0 0.0
  %3265 = vmatpush1.msra.mxu0 0.0
  %3266 = vmatprep.subr.mxu0 0.0
  %3267 = vmatpush1.msra.mxu0 0.0
  %3268 = vmatprep.subr.mxu0 0.0
  %3269 = vmatpush1.msra.mxu0 0.0
  %3270 = vmatprep.subr.mxu0 0.0
  %3271 = vmatpush1.msra.mxu0 0.0
  %3272 = vmatprep.subr.mxu0 0.0
  %3273 = vmatpush1.msra.mxu0 0.0
  %3274 = vmatprep.subr.mxu0 0.0
  %3275 = vmatpush1.msra.mxu0 0.0
  %3276 = vmatprep.subr.mxu0 0.0
  %3277 = vmatpush1.msra.mxu0 0.0
  %3278 = vmatprep.subr.mxu0 0.0
  %3279 = vmatpush1.msra.mxu0 0.0
  %3280 = vmatprep.subr.mxu0 0.0
  %3281 = vmatpush1.msra.mxu0 0.0
  %3282 = vmatprep.subr.mxu0 0.0
  %3283 = vmatpush1.msra.mxu0 0.0
  %3284 = vmatprep.subr.mxu0 0.0
  %3285 = vmatpush1.msra.mxu0 0.0
  %3286 = vmatprep.subr.mxu0 0.0
  %3287 = vmatpush1.msra.mxu0 0.0
  %3288 = vmatprep.subr.mxu0 0.0
  %3289 = vmatpush1.msra.mxu0 0.0
  %3290 = vmatprep.subr.mxu0 0.0
  %3291 = vmatpush1.msra.mxu0 0.0
  %3292 = vmatprep.subr.mxu0 0.0
  %3293 = vmatpush1.msra.mxu0 0.0
  %3294 = vmatprep.subr.mxu0 0.0
  %3295 = vmatpush1.msra.mxu0 0.0
  %3296 = vmatprep.subr.mxu0 0.0
  %3297 = vmatpush1.msra.mxu0 0.0
  %3298 = vmatprep.subr.mxu0 0.0
  %3299 = vmatpush1.msra.mxu0 0.0
  %3300 = vmatprep.subr.mxu0 0.0
  %3301 = vmatpush1.msra.mxu0 0.0
  %3302 = vmatprep.subr.mxu0 0.0
  %3303 = vmatpush1.msra.mxu0 0.0
  %3304 = vmatprep.subr.mxu0 0.0
  %3305 = vmatpush1.msra.mxu0 0.0
  %3306 = vmatprep.subr.mxu0 0.0
  %3307 = vmatpush1.msra.mxu0 0.0
  %3308 = vmatprep.subr.mxu0 0.0
  %3309 = vmatpush1.msra.mxu0 0.0
  %3310 = vmatprep.mubr.f32.mxu0 0.0
  %3311 = vmatmul.mubr.f32.gmra.mrb[0].mxu0 %v3244
  %v3312 = vpop.f32.mrb[0].mxu0
  %v3313 = vadd.f32 0.0, %v3312
  %v3314 = vpop.f32.mrb[0].mxu0
  %3315 = vdwg.mxu0
  %v3317 = vsel %vm628, %v3158, 0
  %3319 = vmatprep.subr.mxu0 0.0
  %3320 = vmatpush1.msra.mxu0 %v3161
  %3321 = vmatprep.subr.mxu0 0.0
  %3322 = vmatpush1.msra.mxu0 %v3163
  %3323 = vmatprep.subr.mxu0 0.0
  %3324 = vmatpush1.msra.mxu0 %v3171
  %3325 = vmatprep.subr.mxu0 0.0
  %3326 = vmatpush1.msra.mxu0 0.0
  %3327 = vmatprep.subr.mxu0 0.0
  %3328 = vmatpush1.msra.mxu0 0.0
  %3329 = vmatprep.subr.mxu0 0.0
  %3330 = vmatpush1.msra.mxu0 0.0
  %3331 = vmatprep.subr.mxu0 0.0
  %3332 = vmatpush1.msra.mxu0 0.0
  %3333 = vmatprep.subr.mxu0 0.0
  %3334 = vmatpush1.msra.mxu0 0.0
  %3335 = vmatprep.subr.mxu0 0.0
  %3336 = vmatpush1.msra.mxu0 0.0
  %3337 = vmatprep.subr.mxu0 0.0
  %3338 = vmatpush1.msra.mxu0 0.0
  %3339 = vmatprep.subr.mxu0 0.0
  %3340 = vmatpush1.msra.mxu0 0.0
  %3341 = vmatprep.subr.mxu0 0.0
  %3342 = vmatpush1.msra.mxu0 0.0
  %3343 = vmatprep.subr.mxu0 0.0
  %3344 = vmatpush1.msra.mxu0 0.0
  %3345 = vmatprep.subr.mxu0 0.0
  %3346 = vmatpush1.msra.mxu0 0.0
  %3347 = vmatprep.subr.mxu0 0.0
  %3348 = vmatpush1.msra.mxu0 0.0
  %3349 = vmatprep.subr.mxu0 0.0
  %3350 = vmatpush1.msra.mxu0 0.0
  %3351 = vmatprep.subr.mxu0 0.0
  %3352 = vmatpush1.msra.mxu0 0.0
  %3353 = vmatprep.subr.mxu0 0.0
  %3354 = vmatpush1.msra.mxu0 0.0
  %3355 = vmatprep.subr.mxu0 0.0
  %3356 = vmatpush1.msra.mxu0 0.0
  %3357 = vmatprep.subr.mxu0 0.0
  %3358 = vmatpush1.msra.mxu0 0.0
  %3359 = vmatprep.subr.mxu0 0.0
  %3360 = vmatpush1.msra.mxu0 0.0
  %3361 = vmatprep.subr.mxu0 0.0
  %3362 = vmatpush1.msra.mxu0 0.0
  %3363 = vmatprep.subr.mxu0 0.0
  %3364 = vmatpush1.msra.mxu0 0.0
  %3365 = vmatprep.subr.mxu0 0.0
  %3366 = vmatpush1.msra.mxu0 0.0
  %3367 = vmatprep.subr.mxu0 0.0
  %3368 = vmatpush1.msra.mxu0 0.0
  %3369 = vmatprep.subr.mxu0 0.0
  %3370 = vmatpush1.msra.mxu0 0.0
  %3371 = vmatprep.subr.mxu0 0.0
  %3372 = vmatpush1.msra.mxu0 0.0
  %3373 = vmatprep.subr.mxu0 0.0
  %3374 = vmatpush1.msra.mxu0 0.0
  %3375 = vmatprep.subr.mxu0 0.0
  %3376 = vmatpush1.msra.mxu0 0.0
  %3377 = vmatprep.subr.mxu0 0.0
  %3378 = vmatpush1.msra.mxu0 0.0
  %3379 = vmatprep.subr.mxu0 0.0
  %3380 = vmatpush1.msra.mxu0 0.0
  %3381 = vmatprep.subr.mxu0 0.0
  %3382 = vmatpush1.msra.mxu0 0.0
  %3383 = vmatprep.mubr.f32.mxu0 0.0
  %3384 = vmatmul.mubr.f32.gmra.mrb[0].mxu0 %v3317
  %v3385 = vpop.f32.mrb[0].mxu0
  %v3386 = vadd.f32 0.0, %v3385
  %v3387 = vpop.f32.mrb[0].mxu0
  %3388 = vdwg.mxu0
  %v3390 = vsel %vm628, %v3159, 0
  %3392 = vmatprep.subr.mxu0 0.0
  %3393 = vmatpush1.msra.mxu0 %v3161
  %3394 = vmatprep.subr.mxu0 0.0
  %3395 = vmatpush1.msra.mxu0 %v3163
  %3396 = vmatprep.subr.mxu0 0.0
  %3397 = vmatpush1.msra.mxu0 %v3171
  %3398 = vmatprep.subr.mxu0 0.0
  %3399 = vmatpush1.msra.mxu0 0.0
  %3400 = vmatprep.subr.mxu0 0.0
  %3401 = vmatpush1.msra.mxu0 0.0
  %3402 = vmatprep.subr.mxu0 0.0
  %3403 = vmatpush1.msra.mxu0 0.0
  %3404 = vmatprep.subr.mxu0 0.0
  %3405 = vmatpush1.msra.mxu0 0.0
  %3406 = vmatprep.subr.mxu0 0.0
  %3407 = vmatpush1.msra.mxu0 0.0
  %3408 = vmatprep.subr.mxu0 0.0
  %3409 = vmatpush1.msra.mxu0 0.0
  %3410 = vmatprep.subr.mxu0 0.0
  %3411 = vmatpush1.msra.mxu0 0.0
  %3412 = vmatprep.subr.mxu0 0.0
  %3413 = vmatpush1.msra.mxu0 0.0
  %3414 = vmatprep.subr.mxu0 0.0
  %3415 = vmatpush1.msra.mxu0 0.0
  %3416 = vmatprep.subr.mxu0 0.0
  %3417 = vmatpush1.msra.mxu0 0.0
  %3418 = vmatprep.subr.mxu0 0.0
  %3419 = vmatpush1.msra.mxu0 0.0
  %3420 = vmatprep.subr.mxu0 0.0
  %3421 = vmatpush1.msra.mxu0 0.0
  %3422 = vmatprep.subr.mxu0 0.0
  %3423 = vmatpush1.msra.mxu0 0.0
  %3424 = vmatprep.subr.mxu0 0.0
  %3425 = vmatpush1.msra.mxu0 0.0
  %3426 = vmatprep.subr.mxu0 0.0
  %3427 = vmatpush1.msra.mxu0 0.0
  %3428 = vmatprep.subr.mxu0 0.0
  %3429 = vmatpush1.msra.mxu0 0.0
  %3430 = vmatprep.subr.mxu0 0.0
  %3431 = vmatpush1.msra.mxu0 0.0
  %3432 = vmatprep.subr.mxu0 0.0
  %3433 = vmatpush1.msra.mxu0 0.0
  %3434 = vmatprep.subr.mxu0 0.0
  %3435 = vmatpush1.msra.mxu0 0.0
  %3436 = vmatprep.subr.mxu0 0.0
  %3437 = vmatpush1.msra.mxu0 0.0
  %3438 = vmatprep.subr.mxu0 0.0
  %3439 = vmatpush1.msra.mxu0 0.0
  %3440 = vmatprep.subr.mxu0 0.0
  %3441 = vmatpush1.msra.mxu0 0.0
  %3442 = vmatprep.subr.mxu0 0.0
  %3443 = vmatpush1.msra.mxu0 0.0
  %3444 = vmatprep.subr.mxu0 0.0
  %3445 = vmatpush1.msra.mxu0 0.0
  %3446 = vmatprep.subr.mxu0 0.0
  %3447 = vmatpush1.msra.mxu0 0.0
  %3448 = vmatprep.subr.mxu0 0.0
  %3449 = vmatpush1.msra.mxu0 0.0
  %3450 = vmatprep.subr.mxu0 0.0
  %3451 = vmatpush1.msra.mxu0 0.0
  %3452 = vmatprep.subr.mxu0 0.0
  %3453 = vmatpush1.msra.mxu0 0.0
  %3454 = vmatprep.subr.mxu0 0.0
  %3455 = vmatpush1.msra.mxu0 0.0
  %3456 = vmatprep.mubr.f32.mxu0 0.0
  %3457 = vmatmul.mubr.f32.gmra.mrb[0].mxu0 %v3390
  %v3458 = vpop.f32.mrb[0].mxu0
  %v3459 = vadd.f32 0.0, %v3458
  %v3460 = vpop.f32.mrb[0].mxu0
  %3461 = vdwg.mxu0
  %v3462 = vmul.f32 %v3240, %v92
  %v3463 = vmul.f32 %v3313, %v97
  %v3464 = vadd.f32 %v3462, %v3463
  %v3465 = vmul.f32 %v3386, %v102
  %v3466 = vadd.f32 %v3464, %v3465
  %v3467 = vmul.f32 %v3459, %v107
  %v3468 = vadd.f32 %v3466, %v3467
  %s3469 = scalar_lea.vmem %s19, 8
  %v3470 = vld [vmem:[%s3469] sm:$0xff]
  %v3472 = vsel %vm125, %v3468, 0
  %3474 = vmatprep.subr.mxu0 0.0
  %3475 = vmatpush1.msra.mxu0 %v3470
  %3476 = vmatprep.subr.mxu0 0.0
  %3477 = vmatpush1.msra.mxu0 0.0
  %3478 = vmatprep.subr.mxu0 0.0
  %3479 = vmatpush1.msra.mxu0 0.0
  %3480 = vmatprep.subr.mxu0 0.0
  %3481 = vmatpush1.msra.mxu0 0.0
  %3482 = vmatprep.subr.mxu0 0.0
  %3483 = vmatpush1.msra.mxu0 0.0
  %3484 = vmatprep.subr.mxu0 0.0
  %3485 = vmatpush1.msra.mxu0 0.0
  %3486 = vmatprep.subr.mxu0 0.0
  %3487 = vmatpush1.msra.mxu0 0.0
  %3488 = vmatprep.subr.mxu0 0.0
  %3489 = vmatpush1.msra.mxu0 0.0
  %3490 = vmatprep.subr.mxu0 0.0
  %3491 = vmatpush1.msra.mxu0 0.0
  %3492 = vmatprep.subr.mxu0 0.0
  %3493 = vmatpush1.msra.mxu0 0.0
  %3494 = vmatprep.subr.mxu0 0.0
  %3495 = vmatpush1.msra.mxu0 0.0
  %3496 = vmatprep.subr.mxu0 0.0
  %3497 = vmatpush1.msra.mxu0 0.0
  %3498 = vmatprep.subr.mxu0 0.0
  %3499 = vmatpush1.msra.mxu0 0.0
  %3500 = vmatprep.subr.mxu0 0.0
  %3501 = vmatpush1.msra.mxu0 0.0
  %3502 = vmatprep.subr.mxu0 0.0
  %3503 = vmatpush1.msra.mxu0 0.0
  %3504 = vmatprep.subr.mxu0 0.0
  %3505 = vmatpush1.msra.mxu0 0.0
  %3506 = vmatprep.subr.mxu0 0.0
  %3507 = vmatpush1.msra.mxu0 0.0
  %3508 = vmatprep.subr.mxu0 0.0
  %3509 = vmatpush1.msra.mxu0 0.0
  %3510 = vmatprep.subr.mxu0 0.0
  %3511 = vmatpush1.msra.mxu0 0.0
  %3512 = vmatprep.subr.mxu0 0.0
  %3513 = vmatpush1.msra.mxu0 0.0
  %3514 = vmatprep.subr.mxu0 0.0
  %3515 = vmatpush1.msra.mxu0 0.0
  %3516 = vmatprep.subr.mxu0 0.0
  %3517 = vmatpush1.msra.mxu0 0.0
  %3518 = vmatprep.subr.mxu0 0.0
  %3519 = vmatpush1.msra.mxu0 0.0
  %3520 = vmatprep.subr.mxu0 0.0
  %3521 = vmatpush1.msra.mxu0 0.0
  %3522 = vmatprep.subr.mxu0 0.0
  %3523 = vmatpush1.msra.mxu0 0.0
  %3524 = vmatprep.subr.mxu0 0.0
  %3525 = vmatpush1.msra.mxu0 0.0
  %3526 = vmatprep.subr.mxu0 0.0
  %3527 = vmatpush1.msra.mxu0 0.0
  %3528 = vmatprep.subr.mxu0 0.0
  %3529 = vmatpush1.msra.mxu0 0.0
  %3530 = vmatprep.subr.mxu0 0.0
  %3531 = vmatpush1.msra.mxu0 0.0
  %3532 = vmatprep.subr.mxu0 0.0
  %3533 = vmatpush1.msra.mxu0 0.0
  %3534 = vmatprep.subr.mxu0 0.0
  %3535 = vmatpush1.msra.mxu0 0.0
  %3536 = vmatprep.subr.mxu0 0.0
  %3537 = vmatpush1.msra.mxu0 0.0
  %3538 = vmatprep.mubr.f32.mxu0 0.0
  %3539 = vmatmul.mubr.f32.gmra.mrb[0].mxu0 %v3472
  %v3540 = vpop.f32.mrb[0].mxu0
  %v3541 = vadd.f32 0.0, %v3540
  %v3542 = vpop.f32.mrb[0].mxu0
  %3543 = vdwg.mxu0
  %v3544 = vadd.f32 %v2723, %v3541
  %s3545 = scalar_lea.vmem %s20, 1
  %v3546 = vld [vmem:[%s3545] sm:$0x1]
  %v3548 = vlaneseq
  %v3549 = vshrl.u32 %v3548, 7
  %v3550 = vsub.s32 0, %v3549
  %v3551 = vrot.slane %v3546, %v3550
  %v3553 = vadd.f32 %v3544, %v3551
  %s3554 = scalar_lea.vmem %s21, 8
  %v3555 = vld [vmem:[%s3554] sm:$0xff]
  %s3556 = scalar_lea.vmem %s22, 1
  %v3557 = vld [vmem:[%s3556] sm:$0x1]
  %v3559 = vlaneseq
  %v3560 = vshrl.u32 %v3559, 7
  %v3561 = vsub.s32 0, %v3560
  %v3562 = vrot.slane %v3557, %v3561
  %v3565 = vsel %vm125, %v3553, 0
  %3567 = vmatprep.subr.mxu0 0.0
  %3568 = vmatpush1.msra.mxu0 %v3555
  %3569 = vmatprep.subr.mxu0 0.0
  %3570 = vmatpush1.msra.mxu0 0.0
  %3571 = vmatprep.subr.mxu0 0.0
  %3572 = vmatpush1.msra.mxu0 0.0
  %3573 = vmatprep.subr.mxu0 0.0
  %3574 = vmatpush1.msra.mxu0 0.0
  %3575 = vmatprep.subr.mxu0 0.0
  %3576 = vmatpush1.msra.mxu0 0.0
  %3577 = vmatprep.subr.mxu0 0.0
  %3578 = vmatpush1.msra.mxu0 0.0
  %3579 = vmatprep.subr.mxu0 0.0
  %3580 = vmatpush1.msra.mxu0 0.0
  %3581 = vmatprep.subr.mxu0 0.0
  %3582 = vmatpush1.msra.mxu0 0.0
  %3583 = vmatprep.subr.mxu0 0.0
  %3584 = vmatpush1.msra.mxu0 0.0
  %3585 = vmatprep.subr.mxu0 0.0
  %3586 = vmatpush1.msra.mxu0 0.0
  %3587 = vmatprep.subr.mxu0 0.0
  %3588 = vmatpush1.msra.mxu0 0.0
  %3589 = vmatprep.subr.mxu0 0.0
  %3590 = vmatpush1.msra.mxu0 0.0
  %3591 = vmatprep.subr.mxu0 0.0
  %3592 = vmatpush1.msra.mxu0 0.0
  %3593 = vmatprep.subr.mxu0 0.0
  %3594 = vmatpush1.msra.mxu0 0.0
  %3595 = vmatprep.subr.mxu0 0.0
  %3596 = vmatpush1.msra.mxu0 0.0
  %3597 = vmatprep.subr.mxu0 0.0
  %3598 = vmatpush1.msra.mxu0 0.0
  %3599 = vmatprep.subr.mxu0 0.0
  %3600 = vmatpush1.msra.mxu0 0.0
  %3601 = vmatprep.subr.mxu0 0.0
  %3602 = vmatpush1.msra.mxu0 0.0
  %3603 = vmatprep.subr.mxu0 0.0
  %3604 = vmatpush1.msra.mxu0 0.0
  %3605 = vmatprep.subr.mxu0 0.0
  %3606 = vmatpush1.msra.mxu0 0.0
  %3607 = vmatprep.subr.mxu0 0.0
  %3608 = vmatpush1.msra.mxu0 0.0
  %3609 = vmatprep.subr.mxu0 0.0
  %3610 = vmatpush1.msra.mxu0 0.0
  %3611 = vmatprep.subr.mxu0 0.0
  %3612 = vmatpush1.msra.mxu0 0.0
  %3613 = vmatprep.subr.mxu0 0.0
  %3614 = vmatpush1.msra.mxu0 0.0
  %3615 = vmatprep.subr.mxu0 0.0
  %3616 = vmatpush1.msra.mxu0 0.0
  %3617 = vmatprep.subr.mxu0 0.0
  %3618 = vmatpush1.msra.mxu0 0.0
  %3619 = vmatprep.subr.mxu0 0.0
  %3620 = vmatpush1.msra.mxu0 0.0
  %3621 = vmatprep.subr.mxu0 0.0
  %3622 = vmatpush1.msra.mxu0 0.0
  %3623 = vmatprep.subr.mxu0 0.0
  %3624 = vmatpush1.msra.mxu0 0.0
  %3625 = vmatprep.subr.mxu0 0.0
  %3626 = vmatpush1.msra.mxu0 0.0
  %3627 = vmatprep.subr.mxu0 0.0
  %3628 = vmatpush1.msra.mxu0 0.0
  %3629 = vmatprep.subr.mxu0 0.0
  %3630 = vmatpush1.msra.mxu0 0.0
  %3631 = vmatprep.mubr.f32.mxu0 0.0
  %3632 = vmatmul.mubr.f32.gmra.mrb[0].mxu0 %v3565
  %v3633 = vpop.f32.mrb[0].mxu0
  %v3634 = vadd.f32 %v3562, %v3633
  %v3635 = vpop.f32.mrb[0].mxu0
  %3636 = vdwg.mxu0
  %s3637 = scalar_lea.vmem %s23, 16
  %v3638 = vld [vmem:[%s3637] sm:$0xff]
  %v3639 = vld [vmem:[%s3637 + $0x8] sm:$0xff]
  %v3641 = vsel %vm1352, %v3634, 0
  %3643 = vmatprep.subr.mxu0 0.0
  %3644 = vmatpush1.msra.mxu0 %v3638
  %3645 = vmatprep.subr.mxu0 0.0
  %3646 = vmatpush1.msra.mxu0 %v3639
  %3647 = vmatprep.subr.mxu0 0.0
  %3648 = vmatpush1.msra.mxu0 0.0
  %3649 = vmatprep.subr.mxu0 0.0
  %3650 = vmatpush1.msra.mxu0 0.0
  %3651 = vmatprep.subr.mxu0 0.0
  %3652 = vmatpush1.msra.mxu0 0.0
  %3653 = vmatprep.subr.mxu0 0.0
  %3654 = vmatpush1.msra.mxu0 0.0
  %3655 = vmatprep.subr.mxu0 0.0
  %3656 = vmatpush1.msra.mxu0 0.0
  %3657 = vmatprep.subr.mxu0 0.0
  %3658 = vmatpush1.msra.mxu0 0.0
  %3659 = vmatprep.subr.mxu0 0.0
  %3660 = vmatpush1.msra.mxu0 0.0
  %3661 = vmatprep.subr.mxu0 0.0
  %3662 = vmatpush1.msra.mxu0 0.0
  %3663 = vmatprep.subr.mxu0 0.0
  %3664 = vmatpush1.msra.mxu0 0.0
  %3665 = vmatprep.subr.mxu0 0.0
  %3666 = vmatpush1.msra.mxu0 0.0
  %3667 = vmatprep.subr.mxu0 0.0
  %3668 = vmatpush1.msra.mxu0 0.0
  %3669 = vmatprep.subr.mxu0 0.0
  %3670 = vmatpush1.msra.mxu0 0.0
  %3671 = vmatprep.subr.mxu0 0.0
  %3672 = vmatpush1.msra.mxu0 0.0
  %3673 = vmatprep.subr.mxu0 0.0
  %3674 = vmatpush1.msra.mxu0 0.0
  %3675 = vmatprep.subr.mxu0 0.0
  %3676 = vmatpush1.msra.mxu0 0.0
  %3677 = vmatprep.subr.mxu0 0.0
  %3678 = vmatpush1.msra.mxu0 0.0
  %3679 = vmatprep.subr.mxu0 0.0
  %3680 = vmatpush1.msra.mxu0 0.0
  %3681 = vmatprep.subr.mxu0 0.0
  %3682 = vmatpush1.msra.mxu0 0.0
  %3683 = vmatprep.subr.mxu0 0.0
  %3684 = vmatpush1.msra.mxu0 0.0
  %3685 = vmatprep.subr.mxu0 0.0
  %3686 = vmatpush1.msra.mxu0 0.0
  %3687 = vmatprep.subr.mxu0 0.0
  %3688 = vmatpush1.msra.mxu0 0.0
  %3689 = vmatprep.subr.mxu0 0.0
  %3690 = vmatpush1.msra.mxu0 0.0
  %3691 = vmatprep.subr.mxu0 0.0
  %3692 = vmatpush1.msra.mxu0 0.0
  %3693 = vmatprep.subr.mxu0 0.0
  %3694 = vmatpush1.msra.mxu0 0.0
  %3695 = vmatprep.subr.mxu0 0.0
  %3696 = vmatpush1.msra.mxu0 0.0
  %3697 = vmatprep.subr.mxu0 0.0
  %3698 = vmatpush1.msra.mxu0 0.0
  %3699 = vmatprep.subr.mxu0 0.0
  %3700 = vmatpush1.msra.mxu0 0.0
  %3701 = vmatprep.subr.mxu0 0.0
  %3702 = vmatpush1.msra.mxu0 0.0
  %3703 = vmatprep.subr.mxu0 0.0
  %3704 = vmatpush1.msra.mxu0 0.0
  %3705 = vmatprep.subr.mxu0 0.0
  %3706 = vmatpush1.msra.mxu0 0.0
  %3707 = vmatprep.mubr.f32.mxu0 0.0
  %3708 = vmatmul.mubr.f32.gmra.mrb[0].mxu0 %v3641
  %v3709 = vpop.f32.mrb[0].mxu0
  %v3710 = vadd.f32 0.0, %v3709
  %v3711 = vpop.f32.mrb[0].mxu0
  %3712 = vdwg.mxu0
  %v3713 = vadd.f32 %v3553, %v3710
  %s3714 = scalar_lea.vmem %s24, 1
  %v3715 = vld [vmem:[%s3714] sm:$0x1]
  %v3717 = vlaneseq
  %v3718 = vshrl.u32 %v3717, 7
  %v3719 = vsub.s32 0, %v3718
  %v3720 = vrot.slane %v3715, %v3719
  %v3722 = vadd.f32 %v3713, %v3720
  %v3723 = vld [vmem:[%s25] sm:$0xff]
  %v3724 = vld [vmem:[%s26] sm:$0x1]
  %v3726 = vlaneseq
  %v3727 = vshrl.u32 %v3726, 7
  %v3728 = vsub.s32 0, %v3727
  %v3729 = vrot.slane %v3724, %v3728
  %v3732 = vsel %vm125, %v3722, 0
  %3734 = vmatprep.subr.mxu0 0.0
  %3735 = vmatpush1.msra.mxu0 %v3723
  %3736 = vmatprep.subr.mxu0 0.0
  %3737 = vmatpush1.msra.mxu0 0.0
  %3738 = vmatprep.subr.mxu0 0.0
  %3739 = vmatpush1.msra.mxu0 0.0
  %3740 = vmatprep.subr.mxu0 0.0
  %3741 = vmatpush1.msra.mxu0 0.0
  %3742 = vmatprep.subr.mxu0 0.0
  %3743 = vmatpush1.msra.mxu0 0.0
  %3744 = vmatprep.subr.mxu0 0.0
  %3745 = vmatpush1.msra.mxu0 0.0
  %3746 = vmatprep.subr.mxu0 0.0
  %3747 = vmatpush1.msra.mxu0 0.0
  %3748 = vmatprep.subr.mxu0 0.0
  %3749 = vmatpush1.msra.mxu0 0.0
  %3750 = vmatprep.subr.mxu0 0.0
  %3751 = vmatpush1.msra.mxu0 0.0
  %3752 = vmatprep.subr.mxu0 0.0
  %3753 = vmatpush1.msra.mxu0 0.0
  %3754 = vmatprep.subr.mxu0 0.0
  %3755 = vmatpush1.msra.mxu0 0.0
  %3756 = vmatprep.subr.mxu0 0.0
  %3757 = vmatpush1.msra.mxu0 0.0
  %3758 = vmatprep.subr.mxu0 0.0
  %3759 = vmatpush1.msra.mxu0 0.0
  %3760 = vmatprep.subr.mxu0 0.0
  %3761 = vmatpush1.msra.mxu0 0.0
  %3762 = vmatprep.subr.mxu0 0.0
  %3763 = vmatpush1.msra.mxu0 0.0
  %3764 = vmatprep.subr.mxu0 0.0
  %3765 = vmatpush1.msra.mxu0 0.0
  %3766 = vmatprep.subr.mxu0 0.0
  %3767 = vmatpush1.msra.mxu0 0.0
  %3768 = vmatprep.subr.mxu0 0.0
  %3769 = vmatpush1.msra.mxu0 0.0
  %3770 = vmatprep.subr.mxu0 0.0
  %3771 = vmatpush1.msra.mxu0 0.0
  %3772 = vmatprep.subr.mxu0 0.0
  %3773 = vmatpush1.msra.mxu0 0.0
  %3774 = vmatprep.subr.mxu0 0.0
  %3775 = vmatpush1.msra.mxu0 0.0
  %3776 = vmatprep.subr.mxu0 0.0
  %3777 = vmatpush1.msra.mxu0 0.0
  %3778 = vmatprep.subr.mxu0 0.0
  %3779 = vmatpush1.msra.mxu0 0.0
  %3780 = vmatprep.subr.mxu0 0.0
  %3781 = vmatpush1.msra.mxu0 0.0
  %3782 = vmatprep.subr.mxu0 0.0
  %3783 = vmatpush1.msra.mxu0 0.0
  %3784 = vmatprep.subr.mxu0 0.0
  %3785 = vmatpush1.msra.mxu0 0.0
  %3786 = vmatprep.subr.mxu0 0.0
  %3787 = vmatpush1.msra.mxu0 0.0
  %3788 = vmatprep.subr.mxu0 0.0
  %3789 = vmatpush1.msra.mxu0 0.0
  %3790 = vmatprep.subr.mxu0 0.0
  %3791 = vmatpush1.msra.mxu0 0.0
  %3792 = vmatprep.subr.mxu0 0.0
  %3793 = vmatpush1.msra.mxu0 0.0
  %3794 = vmatprep.subr.mxu0 0.0
  %3795 = vmatpush1.msra.mxu0 0.0
  %3796 = vmatprep.subr.mxu0 0.0
  %3797 = vmatpush1.msra.mxu0 0.0
  %3798 = vmatprep.mubr.f32.mxu0 0.0
  %3799 = vmatmul.mubr.f32.gmra.mrb[0].mxu0 %v3732
  %v3800 = vpop.f32.mrb[0].mxu0
  %v3801 = vadd.f32 %v3729, %v3800
  %v3802 = vpop.f32.mrb[0].mxu0
  %3803 = vdwg.mxu0
  %v3804 = vsub.f32 0.0, %v3801
  %v3805 = vmul.f32 %v3804, 1.442695
  %v3806 = vpow.pop %v3805
  %v3807 = vadd.f32 %v3806, 1.0
  %v3808 = vrcp.pop %v3807
  %v3809 = vmul.f32 1.0, %v3808
  %s3810 = scalar_lea.vmem %s27, 2
  %3811 = vst.msk [vmem:[%s3810] sm:$0x3] %vm2717, %v3809
  // Predicated region
  $region110: #{tranad_self_conditioning_forward.1} parent=0 // pred_check
    _
  $region111: #{tranad_self_conditioning_forward.1} parent=0 // pred_check_branch
    %3813 = sbr.rel (0) target = $region113
  $region112: #{tranad_self_conditioning_forward.1} parent=0 // pred_region
    _
  $region113: #{tranad_self_conditioning_forward.1} parent=0 // pred_fallthru
    _
  // Predicated region
  $region114: #{tranad_self_conditioning_forward.1} parent=0 // pred_check
    _
  $region115: #{tranad_self_conditioning_forward.1} parent=0 // pred_check_branch
    %3815 = sbr.rel (0) target = $region117
  $region116: #{tranad_self_conditioning_forward.1} parent=0 // pred_region
    _
  $region117: #{tranad_self_conditioning_forward.1} parent=0 // pred_fallthru
    _

</llo_original>
